<compile_context>
chip_gen: v5e
topology: v5e:2x2
jax: 0.10.0
libtpu: 0.0.40
codegen_flags: <defaults>
</compile_context>

<pallas_src>
import functools

import jax
import jax.numpy as jnp
from jax.experimental import pallas as pl
from jax.experimental.pallas import tpu as pltpu


# ---------------------------------------------------------------------------
# Kernel 1: embedding gather + context mean (runs once, tiny).
# ---------------------------------------------------------------------------
def embed_mean_kernel(ctx_ref, emb_hbm, mean_ref, gather_sc, sem):
    B, C = ctx_ref.shape

    # Gather the B*C referenced table rows from HBM (table never enters VMEM
    # wholesale).  Row (b, c) is written to destination index c*B + b so each
    # context position c owns a contiguous (B, E) slab that is an aligned
    # (8, 128) tile (B == 8): the mean then reduces to C cheap VPU adds with
    # no sublane shuffles.  All copies are one row each and share one DMA
    # semaphore.  Out-of-range context indices are caught by DMA bounds checks.
    # TODO(synk): for large B*C, replace this static unroll with a
    # lax.fori_loop + small double-buffered gather to bound outstanding DMAs.
    copies = []
    for c in range(C):
        for b in range(B):
            cp = pltpu.make_async_copy(
                emb_hbm.at[pl.ds(ctx_ref[b, c], 1), :],   # one (1, E) table row
                gather_sc.at[pl.ds(c * B + b, 1), :],
                sem,
            )
            cp.start()
            copies.append(cp)
    for cp in copies:
        cp.wait()

    acc = gather_sc[pl.ds(0, B), :].astype(jnp.float32)
    for c in range(1, C):
        acc = acc + gather_sc[pl.ds(c * B, B), :].astype(jnp.float32)
    # Store once in the weight dtype (bf16) so the linear kernel never has to
    # re-cast the mean on every vocab tile.
    mean_ref[...] = (acc * jnp.float32(1.0 / C)).astype(mean_ref.dtype)


# ---------------------------------------------------------------------------
# Kernel 2: tiled linear layer over the vocab axis (pure weight stream).
# ---------------------------------------------------------------------------
def linear_kernel(mean_ref, wt_ref, b_ref, out_ref):
    # logits tile (B, TV) = mean (B, E) @ W_t tile (E, TV) + bias tile,
    # accumulated in f32 on the MXU; output stays lane-dense.
    out_ref[...] = (
        jnp.dot(mean_ref[...], wt_ref[...], preferred_element_type=jnp.float32)
        + b_ref[...]
    ).astype(out_ref.dtype)


@functools.partial(jax.jit, static_argnames=("tv",))
def cbow_forward(context, emb_table, weight_t, bias, *, tv=8192):
    """CBOW forward.

    context:   (B, C) integer indices.
    emb_table: (V, E) embedding table (stays in HBM; only B*C rows gathered).
    weight_t:  (E, V) linear weight, pre-transposed ONCE at parameter-init time
               from PyTorch's native (V, E) layout (bf16 recommended).
    bias:      (V,) linear bias.
    """
    B, C = context.shape
    V, E = emb_table.shape
    assert weight_t.shape == (E, V)
    tv = min(tv, V)
    assert V % tv == 0 and tv % 128 == 0 and E % 128 == 0

    context = context.astype(jnp.int32)
    bias2 = bias.reshape(1, V).astype(jnp.float32)

    # --- Pass 1: (B, E) context mean. ---------------------------------------
    mean = pl.pallas_call(
        embed_mean_kernel,
        out_shape=jax.ShapeDtypeStruct((B, E), weight_t.dtype),
        grid_spec=pltpu.PrefetchScalarGridSpec(
            num_scalar_prefetch=1,                       # context -> SMEM
            grid=(1,),
            in_specs=[pl.BlockSpec(memory_space=pl.ANY)],  # table stays in HBM
            out_specs=pl.BlockSpec((B, E), lambda i, ctx: (0, 0)),
            scratch_shapes=[
                pltpu.VMEM((B * C, E), emb_table.dtype),   # gathered rows
                pltpu.SemaphoreType.DMA(()),               # one shared DMA sem
            ],
        ),
    )(context, emb_table)

    # --- Pass 2: logits = mean @ W_t + b, tiled over the vocab axis. --------
    # With the mean precomputed the vocab axis is embarrassingly parallel, so
    # it is marked "parallel" (shards across TensorCores on v7x megacore).
    # VMEM / step: 2*(E*tv*2B weight) + 2*(B*tv*4B out) + eps; at tv=8192,
    # E=128 this is ~4.5 MiB — well under the scoped VMEM default on all gens.
    return pl.pallas_call(
        linear_kernel,
        out_shape=jax.ShapeDtypeStruct((B, V), jnp.float32),
        grid_spec=pltpu.PrefetchScalarGridSpec(
            num_scalar_prefetch=0,
            grid=(V // tv,),
            in_specs=[
                pl.BlockSpec((B, E), lambda j: (0, 0)),    # mean (resident)
                pl.BlockSpec((E, tv), lambda j: (0, j)),   # weight tile
                pl.BlockSpec((1, tv), lambda j: (0, j)),   # bias tile
            ],
            out_specs=pl.BlockSpec((B, tv), lambda j: (0, j)),
        ),
        compiler_params=pltpu.CompilerParams(
            dimension_semantics=("parallel",),
        ),
    )(mean, weight_t, bias2)


if __name__ == "__main__":
    # Small, TPU-friendly demo sizes (V, E multiples of 128).  V=16384 with
    # tv=8192 gives 2 vocab tiles of 2 MiB bf16 weight each (review-sized).
    B, C = 8, 4            # batch, context-window size
    V, E = 16384, 128      # vocab_size, embedding_size
    TV = 8192

    key = jax.random.PRNGKey(0)
    k_ctx, k_emb, k_w, k_b = jax.random.split(key, 4)

    context = jax.random.randint(k_ctx, (B, C), 0, V, dtype=jnp.int32)
    emb_table = jax.random.normal(k_emb, (V, E), dtype=jnp.float32)
    # nn.Linear(E, V): weight (V, E), bias (V,), uniform(-1/sqrt(E), 1/sqrt(E)).
    # Weight stored in bf16 (MXU-native, halves dominant HBM bytes) and
    # pre-transposed ONCE here at parameter-init time, not per forward call.
    bound = 1.0 / (E ** 0.5)
    weight = jax.random.uniform(k_w, (V, E), jnp.float32, -bound, bound).astype(
        jnp.bfloat16)
    weight_t = jnp.asarray(weight.T)                      # (E, V), one-time
    bias = jax.random.uniform(k_b, (V,), jnp.float32, -bound, bound)

    logits = jax.block_until_ready(
        cbow_forward(context, emb_table, weight_t, bias, tv=TV))

    # Pure-JAX reference with matched precision (bf16-rounded mean / bf16
    # weight, f32 accumulation) of the PyTorch forward.
    mean_ref = jnp.take(emb_table, context, axis=0).mean(axis=1)
    ref = (mean_ref.astype(jnp.bfloat16).astype(jnp.float32)
           @ weight.astype(jnp.float32).T) + bias

    assert logits.shape == (B, V)
    assert jnp.allclose(logits, ref, atol=1e-2, rtol=1e-2), "mismatch vs reference"

    print("KERNEL_OK")
</pallas_src>

<mosaic_0001>
module attributes {stable_mosaic.version = 11 : i64} {
  func.func @linear_kernel(%arg0: i32, %arg1: memref<8x128xbf16, #tpu.memory_space<vmem>>, %arg2: memref<128x8192xbf16, #tpu.memory_space<vmem>>, %arg3: memref<1x8192xf32, #tpu.memory_space<vmem>>, %arg4: memref<8x8192xf32, #tpu.memory_space<vmem>>) attributes {dimension_semantics = [#tpu.dimension_semantics<parallel>], iteration_bounds = array<i64: 2>, scalar_prefetch = 0 : i64, scratch_operands = 0 : i64, tpu.core_type = #tpu.core_type<tc>, window_params = [{pipeline_mode = #tpu.pipeline_mode<synchronous>, transform_indices = @transform_0, window_bounds = array<i64: 8, 128>}, {transform_indices = @transform_1, window_bounds = array<i64: 128, 8192>}, {transform_indices = @transform_2, window_bounds = array<i64: 1, 8192>}, {transform_indices = @transform_3, window_bounds = array<i64: 8, 8192>}]} {
    %c0 = arith.constant 0 : index
    %c0_0 = arith.constant 0 : index
    %0 = vector.load %arg1[%c0, %c0_0] : memref<8x128xbf16, #tpu.memory_space<vmem>>, vector<8x128xbf16>
    %c0_1 = arith.constant 0 : index
    %c0_2 = arith.constant 0 : index
    %1 = vector.load %arg2[%c0_1, %c0_2] : memref<128x8192xbf16, #tpu.memory_space<vmem>>, vector<128x8192xbf16>
    %cst = arith.constant dense<0.000000e+00> : vector<8x8192xf32>
    %2 = tpu.matmul %0, %1, %cst {dimension_numbers = #tpu.dot_dimension_numbers<[1], [0], [0], [1], [0, 0, 1, 1], [], []>} : vector<8x128xbf16>, vector<128x8192xbf16>, vector<8x8192xf32> -> vector<8x8192xf32>
    %c0_3 = arith.constant 0 : index
    %c0_4 = arith.constant 0 : index
    %3 = vector.load %arg3[%c0_3, %c0_4] : memref<1x8192xf32, #tpu.memory_space<vmem>>, vector<1x8192xf32>
    %4 = vector.broadcast %3 : vector<1x8192xf32> to vector<8x8192xf32>
    %5 = arith.addf %2, %4 : vector<8x8192xf32>
    %c0_5 = arith.constant 0 : index
    %c0_6 = arith.constant 0 : index
    %6 = vector.load %arg4[%c0_5, %c0_6] : memref<8x8192xf32, #tpu.memory_space<vmem>>, vector<8x8192xf32>
    tpu.vector_store %arg4[%c0_5, %c0_6], %5 {strides = array<i32>} : memref<8x8192xf32, #tpu.memory_space<vmem>>, vector<8x8192xf32>,
    return
  }
  func.func @transform_0(%arg0: i32) -> (i32, i32) {
    %c0_i32 = arith.constant 0 : i32
    %c0_i32_0 = arith.constant 0 : i32
    %c0_i32_1 = arith.constant 0 : i32
    return %c0_i32, %c0_i32_0 : i32, i32
  }
  func.func @transform_1(%arg0: i32) -> (i32, i32) {
    %c0_i32 = arith.constant 0 : i32
    %c0_i32_0 = arith.constant 0 : i32
    return %c0_i32, %arg0 : i32, i32
  }
  func.func @transform_2(%arg0: i32) -> (i32, i32) {
    %c0_i32 = arith.constant 0 : i32
    %c0_i32_0 = arith.constant 0 : i32
    return %c0_i32, %arg0 : i32, i32
  }
  func.func @transform_3(%arg0: i32) -> (i32, i32) {
    %c0_i32 = arith.constant 0 : i32
    %c0_i32_0 = arith.constant 0 : i32
    return %c0_i32, %arg0 : i32, i32
  }
}

module attributes {stable_mosaic.version = 11 : i64} {
  func.func @embed_mean_kernel(%arg0: i32, %arg1: memref<8x4xi32, #tpu.memory_space<smem>>, %arg2: memref<16384x128xf32, #tpu.memory_space<any>>, %arg3: memref<8x128xbf16, #tpu.memory_space<vmem>>, %arg4: memref<32x128xf32, #tpu.memory_space<vmem>>, %arg5: memref<!tpu.dma_semaphore, #tpu.memory_space<semaphore_mem>>) attributes {dimension_semantics = [#tpu.dimension_semantics<arbitrary>], iteration_bounds = array<i64: 1>, scalar_prefetch = 1 : i64, scratch_operands = 2 : i64, tpu.core_type = #tpu.core_type<tc>, window_params = [{}, {pipeline_mode = #tpu.pipeline_mode<synchronous>, transform_indices = @transform_1, window_bounds = array<i64: 8, 128>}]} {
    %c0 = arith.constant 0 : index
    %c0_0 = arith.constant 0 : index
    %0 = memref.load %arg1[%c0, %c0_0] : memref<8x4xi32, #tpu.memory_space<smem>>
    %c0_i32 = arith.constant 0 : i32
    %1 = tpu.memref_slice %arg2[%0, %c0_i32] : memref<16384x128xf32, #tpu.memory_space<any>> -> memref<1x128xf32, #tpu.memory_space<any>>
    %c0_i32_1 = arith.constant 0 : i32
    %c0_i32_2 = arith.constant 0 : i32
    %2 = tpu.memref_slice %arg4[%c0_i32_1, %c0_i32_2] : memref<32x128xf32, #tpu.memory_space<vmem>> -> memref<1x128xf32, #tpu.memory_space<vmem>>
    tpu.enqueue_dma source(%1 : memref<1x128xf32, #tpu.memory_space<any>>) target(%2 : memref<1x128xf32, #tpu.memory_space<vmem>>) target_semaphore(%arg5 : memref<!tpu.dma_semaphore, #tpu.memory_space<semaphore_mem>>)
    %c1 = arith.constant 1 : index
    %c0_3 = arith.constant 0 : index
    %3 = memref.load %arg1[%c1, %c0_3] : memref<8x4xi32, #tpu.memory_space<smem>>
    %c0_i32_4 = arith.constant 0 : i32
    %4 = tpu.memref_slice %arg2[%3, %c0_i32_4] : memref<16384x128xf32, #tpu.memory_space<any>> -> memref<1x128xf32, #tpu.memory_space<any>>
    %c1_i32 = arith.constant 1 : i32
    %c0_i32_5 = arith.constant 0 : i32
    %5 = tpu.memref_slice %arg4[%c1_i32, %c0_i32_5] : memref<32x128xf32, #tpu.memory_space<vmem>> -> memref<1x128xf32, #tpu.memory_space<vmem>>
    tpu.enqueue_dma source(%4 : memref<1x128xf32, #tpu.memory_space<any>>) target(%5 : memref<1x128xf32, #tpu.memory_space<vmem>>) target_semaphore(%arg5 : memref<!tpu.dma_semaphore, #tpu.memory_space<semaphore_mem>>)
    %c2 = arith.constant 2 : index
    %c0_6 = arith.constant 0 : index
    %6 = memref.load %arg1[%c2, %c0_6] : memref<8x4xi32, #tpu.memory_space<smem>>
    %c0_i32_7 = arith.constant 0 : i32
    %7 = tpu.memref_slice %arg2[%6, %c0_i32_7] : memref<16384x128xf32, #tpu.memory_space<any>> -> memref<1x128xf32, #tpu.memory_space<any>>
    %c2_i32 = arith.constant 2 : i32
    %c0_i32_8 = arith.constant 0 : i32
    %8 = tpu.memref_slice %arg4[%c2_i32, %c0_i32_8] : memref<32x128xf32, #tpu.memory_space<vmem>> -> memref<1x128xf32, #tpu.memory_space<vmem>>
    tpu.enqueue_dma source(%7 : memref<1x128xf32, #tpu.memory_space<any>>) target(%8 : memref<1x128xf32, #tpu.memory_space<vmem>>) target_semaphore(%arg5 : memref<!tpu.dma_semaphore, #tpu.memory_space<semaphore_mem>>)
    %c3 = arith.constant 3 : index
    %c0_9 = arith.constant 0 : index
    %9 = memref.load %arg1[%c3, %c0_9] : memref<8x4xi32, #tpu.memory_space<smem>>
    %c0_i32_10 = arith.constant 0 : i32
    %10 = tpu.memref_slice %arg2[%9, %c0_i32_10] : memref<16384x128xf32, #tpu.memory_space<any>> -> memref<1x128xf32, #tpu.memory_space<any>>
    %c3_i32 = arith.constant 3 : i32
    %c0_i32_11 = arith.constant 0 : i32
    %11 = tpu.memref_slice %arg4[%c3_i32, %c0_i32_11] : memref<32x128xf32, #tpu.memory_space<vmem>> -> memref<1x128xf32, #tpu.memory_space<vmem>>
    tpu.enqueue_dma source(%10 : memref<1x128xf32, #tpu.memory_space<any>>) target(%11 : memref<1x128xf32, #tpu.memory_space<vmem>>) target_semaphore(%arg5 : memref<!tpu.dma_semaphore, #tpu.memory_space<semaphore_mem>>)
    %c4 = arith.constant 4 : index
    %c0_12 = arith.constant 0 : index
    %12 = memref.load %arg1[%c4, %c0_12] : memref<8x4xi32, #tpu.memory_space<smem>>
    %c0_i32_13 = arith.constant 0 : i32
    %13 = tpu.memref_slice %arg2[%12, %c0_i32_13] : memref<16384x128xf32, #tpu.memory_space<any>> -> memref<1x128xf32, #tpu.memory_space<any>>
    %c4_i32 = arith.constant 4 : i32
    %c0_i32_14 = arith.constant 0 : i32
    %14 = tpu.memref_slice %arg4[%c4_i32, %c0_i32_14] : memref<32x128xf32, #tpu.memory_space<vmem>> -> memref<1x128xf32, #tpu.memory_space<vmem>>
    tpu.enqueue_dma source(%13 : memref<1x128xf32, #tpu.memory_space<any>>) target(%14 : memref<1x128xf32, #tpu.memory_space<vmem>>) target_semaphore(%arg5 : memref<!tpu.dma_semaphore, #tpu.memory_space<semaphore_mem>>)
    %c5 = arith.constant 5 : index
    %c0_15 = arith.constant 0 : index
    %15 = memref.load %arg1[%c5, %c0_15] : memref<8x4xi32, #tpu.memory_space<smem>>
    %c0_i32_16 = arith.constant 0 : i32
    %16 = tpu.memref_slice %arg2[%15, %c0_i32_16] : memref<16384x128xf32, #tpu.memory_space<any>> -> memref<1x128xf32, #tpu.memory_space<any>>
    %c5_i32 = arith.constant 5 : i32
    %c0_i32_17 = arith.constant 0 : i32
    %17 = tpu.memref_slice %arg4[%c5_i32, %c0_i32_17] : memref<32x128xf32, #tpu.memory_space<vmem>> -> memref<1x128xf32, #tpu.memory_space<vmem>>
    tpu.enqueue_dma source(%16 : memref<1x128xf32, #tpu.memory_space<any>>) target(%17 : memref<1x128xf32, #tpu.memory_space<vmem>>) target_semaphore(%arg5 : memref<!tpu.dma_semaphore, #tpu.memory_space<semaphore_mem>>)
    %c6 = arith.constant 6 : index
    %c0_18 = arith.constant 0 : index
    %18 = memref.load %arg1[%c6, %c0_18] : memref<8x4xi32, #tpu.memory_space<smem>>
    %c0_i32_19 = arith.constant 0 : i32
    %19 = tpu.memref_slice %arg2[%18, %c0_i32_19] : memref<16384x128xf32, #tpu.memory_space<any>> -> memref<1x128xf32, #tpu.memory_space<any>>
    %c6_i32 = arith.constant 6 : i32
    %c0_i32_20 = arith.constant 0 : i32
    %20 = tpu.memref_slice %arg4[%c6_i32, %c0_i32_20] : memref<32x128xf32, #tpu.memory_space<vmem>> -> memref<1x128xf32, #tpu.memory_space<vmem>>
    tpu.enqueue_dma source(%19 : memref<1x128xf32, #tpu.memory_space<any>>) target(%20 : memref<1x128xf32, #tpu.memory_space<vmem>>) target_semaphore(%arg5 : memref<!tpu.dma_semaphore, #tpu.memory_space<semaphore_mem>>)
    %c7 = arith.constant 7 : index
    %c0_21 = arith.constant 0 : index
    %21 = memref.load %arg1[%c7, %c0_21] : memref<8x4xi32, #tpu.memory_space<smem>>
    %c0_i32_22 = arith.constant 0 : i32
    %22 = tpu.memref_slice %arg2[%21, %c0_i32_22] : memref<16384x128xf32, #tpu.memory_space<any>> -> memref<1x128xf32, #tpu.memory_space<any>>
    %c7_i32 = arith.constant 7 : i32
    %c0_i32_23 = arith.constant 0 : i32
    %23 = tpu.memref_slice %arg4[%c7_i32, %c0_i32_23] : memref<32x128xf32, #tpu.memory_space<vmem>> -> memref<1x128xf32, #tpu.memory_space<vmem>>
    tpu.enqueue_dma source(%22 : memref<1x128xf32, #tpu.memory_space<any>>) target(%23 : memref<1x128xf32, #tpu.memory_space<vmem>>) target_semaphore(%arg5 : memref<!tpu.dma_semaphore, #tpu.memory_space<semaphore_mem>>)
    %c0_24 = arith.constant 0 : index
    %c1_25 = arith.constant 1 : index
    %24 = memref.load %arg1[%c0_24, %c1_25] : memref<8x4xi32, #tpu.memory_space<smem>>
    %c0_i32_26 = arith.constant 0 : i32
    %25 = tpu.memref_slice %arg2[%24, %c0_i32_26] : memref<16384x128xf32, #tpu.memory_space<any>> -> memref<1x128xf32, #tpu.memory_space<any>>
    %c8_i32 = arith.constant 8 : i32
    %c0_i32_27 = arith.constant 0 : i32
    %26 = tpu.memref_slice %arg4[%c8_i32, %c0_i32_27] : memref<32x128xf32, #tpu.memory_space<vmem>> -> memref<1x128xf32, #tpu.memory_space<vmem>>
    tpu.enqueue_dma source(%25 : memref<1x128xf32, #tpu.memory_space<any>>) target(%26 : memref<1x128xf32, #tpu.memory_space<vmem>>) target_semaphore(%arg5 : memref<!tpu.dma_semaphore, #tpu.memory_space<semaphore_mem>>)
    %c1_28 = arith.constant 1 : index
    %c1_29 = arith.constant 1 : index
    %27 = memref.load %arg1[%c1_28, %c1_29] : memref<8x4xi32, #tpu.memory_space<smem>>
    %c0_i32_30 = arith.constant 0 : i32
    %28 = tpu.memref_slice %arg2[%27, %c0_i32_30] : memref<16384x128xf32, #tpu.memory_space<any>> -> memref<1x128xf32, #tpu.memory_space<any>>
    %c9_i32 = arith.constant 9 : i32
    %c0_i32_31 = arith.constant 0 : i32
    %29 = tpu.memref_slice %arg4[%c9_i32, %c0_i32_31] : memref<32x128xf32, #tpu.memory_space<vmem>> -> memref<1x128xf32, #tpu.memory_space<vmem>>
    tpu.enqueue_dma source(%28 : memref<1x128xf32, #tpu.memory_space<any>>) target(%29 : memref<1x128xf32, #tpu.memory_space<vmem>>) target_semaphore(%arg5 : memref<!tpu.dma_semaphore, #tpu.memory_space<semaphore_mem>>)
    %c2_32 = arith.constant 2 : index
    %c1_33 = arith.constant 1 : index
    %30 = memref.load %arg1[%c2_32, %c1_33] : memref<8x4xi32, #tpu.memory_space<smem>>
    %c0_i32_34 = arith.constant 0 : i32
    %31 = tpu.memref_slice %arg2[%30, %c0_i32_34] : memref<16384x128xf32, #tpu.memory_space<any>> -> memref<1x128xf32, #tpu.memory_space<any>>
    %c10_i32 = arith.constant 10 : i32
    %c0_i32_35 = arith.constant 0 : i32
    %32 = tpu.memref_slice %arg4[%c10_i32, %c0_i32_35] : memref<32x128xf32, #tpu.memory_space<vmem>> -> memref<1x128xf32, #tpu.memory_space<vmem>>
    tpu.enqueue_dma source(%31 : memref<1x128xf32, #tpu.memory_space<any>>) target(%32 : memref<1x128xf32, #tpu.memory_space<vmem>>) target_semaphore(%arg5 : memref<!tpu.dma_semaphore, #tpu.memory_space<semaphore_mem>>)
    %c3_36 = arith.constant 3 : index
    %c1_37 = arith.constant 1 : index
    %33 = memref.load %arg1[%c3_36, %c1_37] : memref<8x4xi32, #tpu.memory_space<smem>>
    %c0_i32_38 = arith.constant 0 : i32
    %34 = tpu.memref_slice %arg2[%33, %c0_i32_38] : memref<16384x128xf32, #tpu.memory_space<any>> -> memref<1x128xf32, #tpu.memory_space<any>>
    %c11_i32 = arith.constant 11 : i32
    %c0_i32_39 = arith.constant 0 : i32
    %35 = tpu.memref_slice %arg4[%c11_i32, %c0_i32_39] : memref<32x128xf32, #tpu.memory_space<vmem>> -> memref<1x128xf32, #tpu.memory_space<vmem>>
    tpu.enqueue_dma source(%34 : memref<1x128xf32, #tpu.memory_space<any>>) target(%35 : memref<1x128xf32, #tpu.memory_space<vmem>>) target_semaphore(%arg5 : memref<!tpu.dma_semaphore, #tpu.memory_space<semaphore_mem>>)
    %c4_40 = arith.constant 4 : index
    %c1_41 = arith.constant 1 : index
    %36 = memref.load %arg1[%c4_40, %c1_41] : memref<8x4xi32, #tpu.memory_space<smem>>
    %c0_i32_42 = arith.constant 0 : i32
    %37 = tpu.memref_slice %arg2[%36, %c0_i32_42] : memref<16384x128xf32, #tpu.memory_space<any>> -> memref<1x128xf32, #tpu.memory_space<any>>
    %c12_i32 = arith.constant 12 : i32
    %c0_i32_43 = arith.constant 0 : i32
    %38 = tpu.memref_slice %arg4[%c12_i32, %c0_i32_43] : memref<32x128xf32, #tpu.memory_space<vmem>> -> memref<1x128xf32, #tpu.memory_space<vmem>>
    tpu.enqueue_dma source(%37 : memref<1x128xf32, #tpu.memory_space<any>>) target(%38 : memref<1x128xf32, #tpu.memory_space<vmem>>) target_semaphore(%arg5 : memref<!tpu.dma_semaphore, #tpu.memory_space<semaphore_mem>>)
    %c5_44 = arith.constant 5 : index
    %c1_45 = arith.constant 1 : index
    %39 = memref.load %arg1[%c5_44, %c1_45] : memref<8x4xi32, #tpu.memory_space<smem>>
    %c0_i32_46 = arith.constant 0 : i32
    %40 = tpu.memref_slice %arg2[%39, %c0_i32_46] : memref<16384x128xf32, #tpu.memory_space<any>> -> memref<1x128xf32, #tpu.memory_space<any>>
    %c13_i32 = arith.constant 13 : i32
    %c0_i32_47 = arith.constant 0 : i32
    %41 = tpu.memref_slice %arg4[%c13_i32, %c0_i32_47] : memref<32x128xf32, #tpu.memory_space<vmem>> -> memref<1x128xf32, #tpu.memory_space<vmem>>
    tpu.enqueue_dma source(%40 : memref<1x128xf32, #tpu.memory_space<any>>) target(%41 : memref<1x128xf32, #tpu.memory_space<vmem>>) target_semaphore(%arg5 : memref<!tpu.dma_semaphore, #tpu.memory_space<semaphore_mem>>)
    %c6_48 = arith.constant 6 : index
    %c1_49 = arith.constant 1 : index
    %42 = memref.load %arg1[%c6_48, %c1_49] : memref<8x4xi32, #tpu.memory_space<smem>>
    %c0_i32_50 = arith.constant 0 : i32
    %43 = tpu.memref_slice %arg2[%42, %c0_i32_50] : memref<16384x128xf32, #tpu.memory_space<any>> -> memref<1x128xf32, #tpu.memory_space<any>>
    %c14_i32 = arith.constant 14 : i32
    %c0_i32_51 = arith.constant 0 : i32
    %44 = tpu.memref_slice %arg4[%c14_i32, %c0_i32_51] : memref<32x128xf32, #tpu.memory_space<vmem>> -> memref<1x128xf32, #tpu.memory_space<vmem>>
    tpu.enqueue_dma source(%43 : memref<1x128xf32, #tpu.memory_space<any>>) target(%44 : memref<1x128xf32, #tpu.memory_space<vmem>>) target_semaphore(%arg5 : memref<!tpu.dma_semaphore, #tpu.memory_space<semaphore_mem>>)
    %c7_52 = arith.constant 7 : index
    %c1_53 = arith.constant 1 : index
    %45 = memref.load %arg1[%c7_52, %c1_53] : memref<8x4xi32, #tpu.memory_space<smem>>
    %c0_i32_54 = arith.constant 0 : i32
    %46 = tpu.memref_slice %arg2[%45, %c0_i32_54] : memref<16384x128xf32, #tpu.memory_space<any>> -> memref<1x128xf32, #tpu.memory_space<any>>
    %c15_i32 = arith.constant 15 : i32
    %c0_i32_55 = arith.constant 0 : i32
    %47 = tpu.memref_slice %arg4[%c15_i32, %c0_i32_55] : memref<32x128xf32, #tpu.memory_space<vmem>> -> memref<1x128xf32, #tpu.memory_space<vmem>>
    tpu.enqueue_dma source(%46 : memref<1x128xf32, #tpu.memory_space<any>>) target(%47 : memref<1x128xf32, #tpu.memory_space<vmem>>) target_semaphore(%arg5 : memref<!tpu.dma_semaphore, #tpu.memory_space<semaphore_mem>>)
    %c0_56 = arith.constant 0 : index
    %c2_57 = arith.constant 2 : index
    %48 = memref.load %arg1[%c0_56, %c2_57] : memref<8x4xi32, #tpu.memory_space<smem>>
    %c0_i32_58 = arith.constant 0 : i32
    %49 = tpu.memref_slice %arg2[%48, %c0_i32_58] : memref<16384x128xf32, #tpu.memory_space<any>> -> memref<1x128xf32, #tpu.memory_space<any>>
    %c16_i32 = arith.constant 16 : i32
    %c0_i32_59 = arith.constant 0 : i32
    %50 = tpu.memref_slice %arg4[%c16_i32, %c0_i32_59] : memref<32x128xf32, #tpu.memory_space<vmem>> -> memref<1x128xf32, #tpu.memory_space<vmem>>
    tpu.enqueue_dma source(%49 : memref<1x128xf32, #tpu.memory_space<any>>) target(%50 : memref<1x128xf32, #tpu.memory_space<vmem>>) target_semaphore(%arg5 : memref<!tpu.dma_semaphore, #tpu.memory_space<semaphore_mem>>)
    %c1_60 = arith.constant 1 : index
    %c2_61 = arith.constant 2 : index
    %51 = memref.load %arg1[%c1_60, %c2_61] : memref<8x4xi32, #tpu.memory_space<smem>>
    %c0_i32_62 = arith.constant 0 : i32
    %52 = tpu.memref_slice %arg2[%51, %c0_i32_62] : memref<16384x128xf32, #tpu.memory_space<any>> -> memref<1x128xf32, #tpu.memory_space<any>>
    %c17_i32 = arith.constant 17 : i32
    %c0_i32_63 = arith.constant 0 : i32
    %53 = tpu.memref_slice %arg4[%c17_i32, %c0_i32_63] : memref<32x128xf32, #tpu.memory_space<vmem>> -> memref<1x128xf32, #tpu.memory_space<vmem>>
    tpu.enqueue_dma source(%52 : memref<1x128xf32, #tpu.memory_space<any>>) target(%53 : memref<1x128xf32, #tpu.memory_space<vmem>>) target_semaphore(%arg5 : memref<!tpu.dma_semaphore, #tpu.memory_space<semaphore_mem>>)
    %c2_64 = arith.constant 2 : index
    %c2_65 = arith.constant 2 : index
    %54 = memref.load %arg1[%c2_64, %c2_65] : memref<8x4xi32, #tpu.memory_space<smem>>
    %c0_i32_66 = arith.constant 0 : i32
    %55 = tpu.memref_slice %arg2[%54, %c0_i32_66] : memref<16384x128xf32, #tpu.memory_space<any>> -> memref<1x128xf32, #tpu.memory_space<any>>
    %c18_i32 = arith.constant 18 : i32
    %c0_i32_67 = arith.constant 0 : i32
    %56 = tpu.memref_slice %arg4[%c18_i32, %c0_i32_67] : memref<32x128xf32, #tpu.memory_space<vmem>> -> memref<1x128xf32, #tpu.memory_space<vmem>>
    tpu.enqueue_dma source(%55 : memref<1x128xf32, #tpu.memory_space<any>>) target(%56 : memref<1x128xf32, #tpu.memory_space<vmem>>) target_semaphore(%arg5 : memref<!tpu.dma_semaphore, #tpu.memory_space<semaphore_mem>>)
    %c3_68 = arith.constant 3 : index
    %c2_69 = arith.constant 2 : index
    %57 = memref.load %arg1[%c3_68, %c2_69] : memref<8x4xi32, #tpu.memory_space<smem>>
    %c0_i32_70 = arith.constant 0 : i32
    %58 = tpu.memref_slice %arg2[%57, %c0_i32_70] : memref<16384x128xf32, #tpu.memory_space<any>> -> memref<1x128xf32, #tpu.memory_space<any>>
    %c19_i32 = arith.constant 19 : i32
    %c0_i32_71 = arith.constant 0 : i32
    %59 = tpu.memref_slice %arg4[%c19_i32, %c0_i32_71] : memref<32x128xf32, #tpu.memory_space<vmem>> -> memref<1x128xf32, #tpu.memory_space<vmem>>
    tpu.enqueue_dma source(%58 : memref<1x128xf32, #tpu.memory_space<any>>) target(%59 : memref<1x128xf32, #tpu.memory_space<vmem>>) target_semaphore(%arg5 : memref<!tpu.dma_semaphore, #tpu.memory_space<semaphore_mem>>)
    %c4_72 = arith.constant 4 : index
    %c2_73 = arith.constant 2 : index
    %60 = memref.load %arg1[%c4_72, %c2_73] : memref<8x4xi32, #tpu.memory_space<smem>>
    %c0_i32_74 = arith.constant 0 : i32
    %61 = tpu.memref_slice %arg2[%60, %c0_i32_74] : memref<16384x128xf32, #tpu.memory_space<any>> -> memref<1x128xf32, #tpu.memory_space<any>>
    %c20_i32 = arith.constant 20 : i32
    %c0_i32_75 = arith.constant 0 : i32
    %62 = tpu.memref_slice %arg4[%c20_i32, %c0_i32_75] : memref<32x128xf32, #tpu.memory_space<vmem>> -> memref<1x128xf32, #tpu.memory_space<vmem>>
    tpu.enqueue_dma source(%61 : memref<1x128xf32, #tpu.memory_space<any>>) target(%62 : memref<1x128xf32, #tpu.memory_space<vmem>>) target_semaphore(%arg5 : memref<!tpu.dma_semaphore, #tpu.memory_space<semaphore_mem>>)
    %c5_76 = arith.constant 5 : index
    %c2_77 = arith.constant 2 : index
    %63 = memref.load %arg1[%c5_76, %c2_77] : memref<8x4xi32, #tpu.memory_space<smem>>
    %c0_i32_78 = arith.constant 0 : i32
    %64 = tpu.memref_slice %arg2[%63, %c0_i32_78] : memref<16384x128xf32, #tpu.memory_space<any>> -> memref<1x128xf32, #tpu.memory_space<any>>
    %c21_i32 = arith.constant 21 : i32
    %c0_i32_79 = arith.constant 0 : i32
    %65 = tpu.memref_slice %arg4[%c21_i32, %c0_i32_79] : memref<32x128xf32, #tpu.memory_space<vmem>> -> memref<1x128xf32, #tpu.memory_space<vmem>>
    tpu.enqueue_dma source(%64 : memref<1x128xf32, #tpu.memory_space<any>>) target(%65 : memref<1x128xf32, #tpu.memory_space<vmem>>) target_semaphore(%arg5 : memref<!tpu.dma_semaphore, #tpu.memory_space<semaphore_mem>>)
    %c6_80 = arith.constant 6 : index
    %c2_81 = arith.constant 2 : index
    %66 = memref.load %arg1[%c6_80, %c2_81] : memref<8x4xi32, #tpu.memory_space<smem>>
    %c0_i32_82 = arith.constant 0 : i32
    %67 = tpu.memref_slice %arg2[%66, %c0_i32_82] : memref<16384x128xf32, #tpu.memory_space<any>> -> memref<1x128xf32, #tpu.memory_space<any>>
    %c22_i32 = arith.constant 22 : i32
    %c0_i32_83 = arith.constant 0 : i32
    %68 = tpu.memref_slice %arg4[%c22_i32, %c0_i32_83] : memref<32x128xf32, #tpu.memory_space<vmem>> -> memref<1x128xf32, #tpu.memory_space<vmem>>
    tpu.enqueue_dma source(%67 : memref<1x128xf32, #tpu.memory_space<any>>) target(%68 : memref<1x128xf32, #tpu.memory_space<vmem>>) target_semaphore(%arg5 : memref<!tpu.dma_semaphore, #tpu.memory_space<semaphore_mem>>)
    %c7_84 = arith.constant 7 : index
    %c2_85 = arith.constant 2 : index
    %69 = memref.load %arg1[%c7_84, %c2_85] : memref<8x4xi32, #tpu.memory_space<smem>>
    %c0_i32_86 = arith.constant 0 : i32
    %70 = tpu.memref_slice %arg2[%69, %c0_i32_86] : memref<16384x128xf32, #tpu.memory_space<any>> -> memref<1x128xf32, #tpu.memory_space<any>>
    %c23_i32 = arith.constant 23 : i32
    %c0_i32_87 = arith.constant 0 : i32
    %71 = tpu.memref_slice %arg4[%c23_i32, %c0_i32_87] : memref<32x128xf32, #tpu.memory_space<vmem>> -> memref<1x128xf32, #tpu.memory_space<vmem>>
    tpu.enqueue_dma source(%70 : memref<1x128xf32, #tpu.memory_space<any>>) target(%71 : memref<1x128xf32, #tpu.memory_space<vmem>>) target_semaphore(%arg5 : memref<!tpu.dma_semaphore, #tpu.memory_space<semaphore_mem>>)
    %c0_88 = arith.constant 0 : index
    %c3_89 = arith.constant 3 : index
    %72 = memref.load %arg1[%c0_88, %c3_89] : memref<8x4xi32, #tpu.memory_space<smem>>
    %c0_i32_90 = arith.constant 0 : i32
    %73 = tpu.memref_slice %arg2[%72, %c0_i32_90] : memref<16384x128xf32, #tpu.memory_space<any>> -> memref<1x128xf32, #tpu.memory_space<any>>
    %c24_i32 = arith.constant 24 : i32
    %c0_i32_91 = arith.constant 0 : i32
    %74 = tpu.memref_slice %arg4[%c24_i32, %c0_i32_91] : memref<32x128xf32, #tpu.memory_space<vmem>> -> memref<1x128xf32, #tpu.memory_space<vmem>>
    tpu.enqueue_dma source(%73 : memref<1x128xf32, #tpu.memory_space<any>>) target(%74 : memref<1x128xf32, #tpu.memory_space<vmem>>) target_semaphore(%arg5 : memref<!tpu.dma_semaphore, #tpu.memory_space<semaphore_mem>>)
    %c1_92 = arith.constant 1 : index
    %c3_93 = arith.constant 3 : index
    %75 = memref.load %arg1[%c1_92, %c3_93] : memref<8x4xi32, #tpu.memory_space<smem>>
    %c0_i32_94 = arith.constant 0 : i32
    %76 = tpu.memref_slice %arg2[%75, %c0_i32_94] : memref<16384x128xf32, #tpu.memory_space<any>> -> memref<1x128xf32, #tpu.memory_space<any>>
    %c25_i32 = arith.constant 25 : i32
    %c0_i32_95 = arith.constant 0 : i32
    %77 = tpu.memref_slice %arg4[%c25_i32, %c0_i32_95] : memref<32x128xf32, #tpu.memory_space<vmem>> -> memref<1x128xf32, #tpu.memory_space<vmem>>
    tpu.enqueue_dma source(%76 : memref<1x128xf32, #tpu.memory_space<any>>) target(%77 : memref<1x128xf32, #tpu.memory_space<vmem>>) target_semaphore(%arg5 : memref<!tpu.dma_semaphore, #tpu.memory_space<semaphore_mem>>)
    %c2_96 = arith.constant 2 : index
    %c3_97 = arith.constant 3 : index
    %78 = memref.load %arg1[%c2_96, %c3_97] : memref<8x4xi32, #tpu.memory_space<smem>>
    %c0_i32_98 = arith.constant 0 : i32
    %79 = tpu.memref_slice %arg2[%78, %c0_i32_98] : memref<16384x128xf32, #tpu.memory_space<any>> -> memref<1x128xf32, #tpu.memory_space<any>>
    %c26_i32 = arith.constant 26 : i32
    %c0_i32_99 = arith.constant 0 : i32
    %80 = tpu.memref_slice %arg4[%c26_i32, %c0_i32_99] : memref<32x128xf32, #tpu.memory_space<vmem>> -> memref<1x128xf32, #tpu.memory_space<vmem>>
    tpu.enqueue_dma source(%79 : memref<1x128xf32, #tpu.memory_space<any>>) target(%80 : memref<1x128xf32, #tpu.memory_space<vmem>>) target_semaphore(%arg5 : memref<!tpu.dma_semaphore, #tpu.memory_space<semaphore_mem>>)
    %c3_100 = arith.constant 3 : index
    %c3_101 = arith.constant 3 : index
    %81 = memref.load %arg1[%c3_100, %c3_101] : memref<8x4xi32, #tpu.memory_space<smem>>
    %c0_i32_102 = arith.constant 0 : i32
    %82 = tpu.memref_slice %arg2[%81, %c0_i32_102] : memref<16384x128xf32, #tpu.memory_space<any>> -> memref<1x128xf32, #tpu.memory_space<any>>
    %c27_i32 = arith.constant 27 : i32
    %c0_i32_103 = arith.constant 0 : i32
    %83 = tpu.memref_slice %arg4[%c27_i32, %c0_i32_103] : memref<32x128xf32, #tpu.memory_space<vmem>> -> memref<1x128xf32, #tpu.memory_space<vmem>>
    tpu.enqueue_dma source(%82 : memref<1x128xf32, #tpu.memory_space<any>>) target(%83 : memref<1x128xf32, #tpu.memory_space<vmem>>) target_semaphore(%arg5 : memref<!tpu.dma_semaphore, #tpu.memory_space<semaphore_mem>>)
    %c4_104 = arith.constant 4 : index
    %c3_105 = arith.constant 3 : index
    %84 = memref.load %arg1[%c4_104, %c3_105] : memref<8x4xi32, #tpu.memory_space<smem>>
    %c0_i32_106 = arith.constant 0 : i32
    %85 = tpu.memref_slice %arg2[%84, %c0_i32_106] : memref<16384x128xf32, #tpu.memory_space<any>> -> memref<1x128xf32, #tpu.memory_space<any>>
    %c28_i32 = arith.constant 28 : i32
    %c0_i32_107 = arith.constant 0 : i32
    %86 = tpu.memref_slice %arg4[%c28_i32, %c0_i32_107] : memref<32x128xf32, #tpu.memory_space<vmem>> -> memref<1x128xf32, #tpu.memory_space<vmem>>
    tpu.enqueue_dma source(%85 : memref<1x128xf32, #tpu.memory_space<any>>) target(%86 : memref<1x128xf32, #tpu.memory_space<vmem>>) target_semaphore(%arg5 : memref<!tpu.dma_semaphore, #tpu.memory_space<semaphore_mem>>)
    %c5_108 = arith.constant 5 : index
    %c3_109 = arith.constant 3 : index
    %87 = memref.load %arg1[%c5_108, %c3_109] : memref<8x4xi32, #tpu.memory_space<smem>>
    %c0_i32_110 = arith.constant 0 : i32
    %88 = tpu.memref_slice %arg2[%87, %c0_i32_110] : memref<16384x128xf32, #tpu.memory_space<any>> -> memref<1x128xf32, #tpu.memory_space<any>>
    %c29_i32 = arith.constant 29 : i32
    %c0_i32_111 = arith.constant 0 : i32
    %89 = tpu.memref_slice %arg4[%c29_i32, %c0_i32_111] : memref<32x128xf32, #tpu.memory_space<vmem>> -> memref<1x128xf32, #tpu.memory_space<vmem>>
    tpu.enqueue_dma source(%88 : memref<1x128xf32, #tpu.memory_space<any>>) target(%89 : memref<1x128xf32, #tpu.memory_space<vmem>>) target_semaphore(%arg5 : memref<!tpu.dma_semaphore, #tpu.memory_space<semaphore_mem>>)
    %c6_112 = arith.constant 6 : index
    %c3_113 = arith.constant 3 : index
    %90 = memref.load %arg1[%c6_112, %c3_113] : memref<8x4xi32, #tpu.memory_space<smem>>
    %c0_i32_114 = arith.constant 0 : i32
    %91 = tpu.memref_slice %arg2[%90, %c0_i32_114] : memref<16384x128xf32, #tpu.memory_space<any>> -> memref<1x128xf32, #tpu.memory_space<any>>
    %c30_i32 = arith.constant 30 : i32
    %c0_i32_115 = arith.constant 0 : i32
    %92 = tpu.memref_slice %arg4[%c30_i32, %c0_i32_115] : memref<32x128xf32, #tpu.memory_space<vmem>> -> memref<1x128xf32, #tpu.memory_space<vmem>>
    tpu.enqueue_dma source(%91 : memref<1x128xf32, #tpu.memory_space<any>>) target(%92 : memref<1x128xf32, #tpu.memory_space<vmem>>) target_semaphore(%arg5 : memref<!tpu.dma_semaphore, #tpu.memory_space<semaphore_mem>>)
    %c7_116 = arith.constant 7 : index
    %c3_117 = arith.constant 3 : index
    %93 = memref.load %arg1[%c7_116, %c3_117] : memref<8x4xi32, #tpu.memory_space<smem>>
    %c0_i32_118 = arith.constant 0 : i32
    %94 = tpu.memref_slice %arg2[%93, %c0_i32_118] : memref<16384x128xf32, #tpu.memory_space<any>> -> memref<1x128xf32, #tpu.memory_space<any>>
    %c31_i32 = arith.constant 31 : i32
    %c0_i32_119 = arith.constant 0 : i32
    %95 = tpu.memref_slice %arg4[%c31_i32, %c0_i32_119] : memref<32x128xf32, #tpu.memory_space<vmem>> -> memref<1x128xf32, #tpu.memory_space<vmem>>
    tpu.enqueue_dma source(%94 : memref<1x128xf32, #tpu.memory_space<any>>) target(%95 : memref<1x128xf32, #tpu.memory_space<vmem>>) target_semaphore(%arg5 : memref<!tpu.dma_semaphore, #tpu.memory_space<semaphore_mem>>)
    %c0_i32_120 = arith.constant 0 : i32
    %96 = tpu.memref_slice %arg2[%0, %c0_i32_120] : memref<16384x128xf32, #tpu.memory_space<any>> -> memref<1x128xf32, #tpu.memory_space<any>>
    %c0_i32_121 = arith.constant 0 : i32
    %c0_i32_122 = arith.constant 0 : i32
    %97 = tpu.memref_slice %arg4[%c0_i32_121, %c0_i32_122] : memref<32x128xf32, #tpu.memory_space<vmem>> -> memref<1x128xf32, #tpu.memory_space<vmem>>
    tpu.wait_dma2 semaphore(%arg5 : memref<!tpu.dma_semaphore, #tpu.memory_space<semaphore_mem>>) src(%96 : memref<1x128xf32, #tpu.memory_space<any>>) dst(%97 : memref<1x128xf32, #tpu.memory_space<vmem>>)
    %c0_i32_123 = arith.constant 0 : i32
    %98 = tpu.memref_slice %arg2[%3, %c0_i32_123] : memref<16384x128xf32, #tpu.memory_space<any>> -> memref<1x128xf32, #tpu.memory_space<any>>
    %c1_i32_124 = arith.constant 1 : i32
    %c0_i32_125 = arith.constant 0 : i32
    %99 = tpu.memref_slice %arg4[%c1_i32_124, %c0_i32_125] : memref<32x128xf32, #tpu.memory_space<vmem>> -> memref<1x128xf32, #tpu.memory_space<vmem>>
    tpu.wait_dma2 semaphore(%arg5 : memref<!tpu.dma_semaphore, #tpu.memory_space<semaphore_mem>>) src(%98 : memref<1x128xf32, #tpu.memory_space<any>>) dst(%99 : memref<1x128xf32, #tpu.memory_space<vmem>>)
    %c0_i32_126 = arith.constant 0 : i32
    %100 = tpu.memref_slice %arg2[%6, %c0_i32_126] : memref<16384x128xf32, #tpu.memory_space<any>> -> memref<1x128xf32, #tpu.memory_space<any>>
    %c2_i32_127 = arith.constant 2 : i32
    %c0_i32_128 = arith.constant 0 : i32
    %101 = tpu.memref_slice %arg4[%c2_i32_127, %c0_i32_128] : memref<32x128xf32, #tpu.memory_space<vmem>> -> memref<1x128xf32, #tpu.memory_space<vmem>>
    tpu.wait_dma2 semaphore(%arg5 : memref<!tpu.dma_semaphore, #tpu.memory_space<semaphore_mem>>) src(%100 : memref<1x128xf32, #tpu.memory_space<any>>) dst(%101 : memref<1x128xf32, #tpu.memory_space<vmem>>)
    %c0_i32_129 = arith.constant 0 : i32
    %102 = tpu.memref_slice %arg2[%9, %c0_i32_129] : memref<16384x128xf32, #tpu.memory_space<any>> -> memref<1x128xf32, #tpu.memory_space<any>>
    %c3_i32_130 = arith.constant 3 : i32
    %c0_i32_131 = arith.constant 0 : i32
    %103 = tpu.memref_slice %arg4[%c3_i32_130, %c0_i32_131] : memref<32x128xf32, #tpu.memory_space<vmem>> -> memref<1x128xf32, #tpu.memory_space<vmem>>
    tpu.wait_dma2 semaphore(%arg5 : memref<!tpu.dma_semaphore, #tpu.memory_space<semaphore_mem>>) src(%102 : memref<1x128xf32, #tpu.memory_space<any>>) dst(%103 : memref<1x128xf32, #tpu.memory_space<vmem>>)
    %c0_i32_132 = arith.constant 0 : i32
    %104 = tpu.memref_slice %arg2[%12, %c0_i32_132] : memref<16384x128xf32, #tpu.memory_space<any>> -> memref<1x128xf32, #tpu.memory_space<any>>
    %c4_i32_133 = arith.constant 4 : i32
    %c0_i32_134 = arith.constant 0 : i32
    %105 = tpu.memref_slice %arg4[%c4_i32_133, %c0_i32_134] : memref<32x128xf32, #tpu.memory_space<vmem>> -> memref<1x128xf32, #tpu.memory_space<vmem>>
    tpu.wait_dma2 semaphore(%arg5 : memref<!tpu.dma_semaphore, #tpu.memory_space<semaphore_mem>>) src(%104 : memref<1x128xf32, #tpu.memory_space<any>>) dst(%105 : memref<1x128xf32, #tpu.memory_space<vmem>>)
    %c0_i32_135 = arith.constant 0 : i32
    %106 = tpu.memref_slice %arg2[%15, %c0_i32_135] : memref<16384x128xf32, #tpu.memory_space<any>> -> memref<1x128xf32, #tpu.memory_space<any>>
    %c5_i32_136 = arith.constant 5 : i32
    %c0_i32_137 = arith.constant 0 : i32
    %107 = tpu.memref_slice %arg4[%c5_i32_136, %c0_i32_137] : memref<32x128xf32, #tpu.memory_space<vmem>> -> memref<1x128xf32, #tpu.memory_space<vmem>>
    tpu.wait_dma2 semaphore(%arg5 : memref<!tpu.dma_semaphore, #tpu.memory_space<semaphore_mem>>) src(%106 : memref<1x128xf32, #tpu.memory_space<any>>) dst(%107 : memref<1x128xf32, #tpu.memory_space<vmem>>)
    %c0_i32_138 = arith.constant 0 : i32
    %108 = tpu.memref_slice %arg2[%18, %c0_i32_138] : memref<16384x128xf32, #tpu.memory_space<any>> -> memref<1x128xf32, #tpu.memory_space<any>>
    %c6_i32_139 = arith.constant 6 : i32
    %c0_i32_140 = arith.constant 0 : i32
    %109 = tpu.memref_slice %arg4[%c6_i32_139, %c0_i32_140] : memref<32x128xf32, #tpu.memory_space<vmem>> -> memref<1x128xf32, #tpu.memory_space<vmem>>
    tpu.wait_dma2 semaphore(%arg5 : memref<!tpu.dma_semaphore, #tpu.memory_space<semaphore_mem>>) src(%108 : memref<1x128xf32, #tpu.memory_space<any>>) dst(%109 : memref<1x128xf32, #tpu.memory_space<vmem>>)
    %c0_i32_141 = arith.constant 0 : i32
    %110 = tpu.memref_slice %arg2[%21, %c0_i32_141] : memref<16384x128xf32, #tpu.memory_space<any>> -> memref<1x128xf32, #tpu.memory_space<any>>
    %c7_i32_142 = arith.constant 7 : i32
    %c0_i32_143 = arith.constant 0 : i32
    %111 = tpu.memref_slice %arg4[%c7_i32_142, %c0_i32_143] : memref<32x128xf32, #tpu.memory_space<vmem>> -> memref<1x128xf32, #tpu.memory_space<vmem>>
    tpu.wait_dma2 semaphore(%arg5 : memref<!tpu.dma_semaphore, #tpu.memory_space<semaphore_mem>>) src(%110 : memref<1x128xf32, #tpu.memory_space<any>>) dst(%111 : memref<1x128xf32, #tpu.memory_space<vmem>>)
    %c0_i32_144 = arith.constant 0 : i32
    %112 = tpu.memref_slice %arg2[%24, %c0_i32_144] : memref<16384x128xf32, #tpu.memory_space<any>> -> memref<1x128xf32, #tpu.memory_space<any>>
    %c8_i32_145 = arith.constant 8 : i32
    %c0_i32_146 = arith.constant 0 : i32
    %113 = tpu.memref_slice %arg4[%c8_i32_145, %c0_i32_146] : memref<32x128xf32, #tpu.memory_space<vmem>> -> memref<1x128xf32, #tpu.memory_space<vmem>>
    tpu.wait_dma2 semaphore(%arg5 : memref<!tpu.dma_semaphore, #tpu.memory_space<semaphore_mem>>) src(%112 : memref<1x128xf32, #tpu.memory_space<any>>) dst(%113 : memref<1x128xf32, #tpu.memory_space<vmem>>)
    %c0_i32_147 = arith.constant 0 : i32
    %114 = tpu.memref_slice %arg2[%27, %c0_i32_147] : memref<16384x128xf32, #tpu.memory_space<any>> -> memref<1x128xf32, #tpu.memory_space<any>>
    %c9_i32_148 = arith.constant 9 : i32
    %c0_i32_149 = arith.constant 0 : i32
    %115 = tpu.memref_slice %arg4[%c9_i32_148, %c0_i32_149] : memref<32x128xf32, #tpu.memory_space<vmem>> -> memref<1x128xf32, #tpu.memory_space<vmem>>
    tpu.wait_dma2 semaphore(%arg5 : memref<!tpu.dma_semaphore, #tpu.memory_space<semaphore_mem>>) src(%114 : memref<1x128xf32, #tpu.memory_space<any>>) dst(%115 : memref<1x128xf32, #tpu.memory_space<vmem>>)
    %c0_i32_150 = arith.constant 0 : i32
    %116 = tpu.memref_slice %arg2[%30, %c0_i32_150] : memref<16384x128xf32, #tpu.memory_space<any>> -> memref<1x128xf32, #tpu.memory_space<any>>
    %c10_i32_151 = arith.constant 10 : i32
    %c0_i32_152 = arith.constant 0 : i32
    %117 = tpu.memref_slice %arg4[%c10_i32_151, %c0_i32_152] : memref<32x128xf32, #tpu.memory_space<vmem>> -> memref<1x128xf32, #tpu.memory_space<vmem>>
    tpu.wait_dma2 semaphore(%arg5 : memref<!tpu.dma_semaphore, #tpu.memory_space<semaphore_mem>>) src(%116 : memref<1x128xf32, #tpu.memory_space<any>>) dst(%117 : memref<1x128xf32, #tpu.memory_space<vmem>>)
    %c0_i32_153 = arith.constant 0 : i32
    %118 = tpu.memref_slice %arg2[%33, %c0_i32_153] : memref<16384x128xf32, #tpu.memory_space<any>> -> memref<1x128xf32, #tpu.memory_space<any>>
    %c11_i32_154 = arith.constant 11 : i32
    %c0_i32_155 = arith.constant 0 : i32
    %119 = tpu.memref_slice %arg4[%c11_i32_154, %c0_i32_155] : memref<32x128xf32, #tpu.memory_space<vmem>> -> memref<1x128xf32, #tpu.memory_space<vmem>>
    tpu.wait_dma2 semaphore(%arg5 : memref<!tpu.dma_semaphore, #tpu.memory_space<semaphore_mem>>) src(%118 : memref<1x128xf32, #tpu.memory_space<any>>) dst(%119 : memref<1x128xf32, #tpu.memory_space<vmem>>)
    %c0_i32_156 = arith.constant 0 : i32
    %120 = tpu.memref_slice %arg2[%36, %c0_i32_156] : memref<16384x128xf32, #tpu.memory_space<any>> -> memref<1x128xf32, #tpu.memory_space<any>>
    %c12_i32_157 = arith.constant 12 : i32
    %c0_i32_158 = arith.constant 0 : i32
    %121 = tpu.memref_slice %arg4[%c12_i32_157, %c0_i32_158] : memref<32x128xf32, #tpu.memory_space<vmem>> -> memref<1x128xf32, #tpu.memory_space<vmem>>
    tpu.wait_dma2 semaphore(%arg5 : memref<!tpu.dma_semaphore, #tpu.memory_space<semaphore_mem>>) src(%120 : memref<1x128xf32, #tpu.memory_space<any>>) dst(%121 : memref<1x128xf32, #tpu.memory_space<vmem>>)
    %c0_i32_159 = arith.constant 0 : i32
    %122 = tpu.memref_slice %arg2[%39, %c0_i32_159] : memref<16384x128xf32, #tpu.memory_space<any>> -> memref<1x128xf32, #tpu.memory_space<any>>
    %c13_i32_160 = arith.constant 13 : i32
    %c0_i32_161 = arith.constant 0 : i32
    %123 = tpu.memref_slice %arg4[%c13_i32_160, %c0_i32_161] : memref<32x128xf32, #tpu.memory_space<vmem>> -> memref<1x128xf32, #tpu.memory_space<vmem>>
    tpu.wait_dma2 semaphore(%arg5 : memref<!tpu.dma_semaphore, #tpu.memory_space<semaphore_mem>>) src(%122 : memref<1x128xf32, #tpu.memory_space<any>>) dst(%123 : memref<1x128xf32, #tpu.memory_space<vmem>>)
    %c0_i32_162 = arith.constant 0 : i32
    %124 = tpu.memref_slice %arg2[%42, %c0_i32_162] : memref<16384x128xf32, #tpu.memory_space<any>> -> memref<1x128xf32, #tpu.memory_space<any>>
    %c14_i32_163 = arith.constant 14 : i32
    %c0_i32_164 = arith.constant 0 : i32
    %125 = tpu.memref_slice %arg4[%c14_i32_163, %c0_i32_164] : memref<32x128xf32, #tpu.memory_space<vmem>> -> memref<1x128xf32, #tpu.memory_space<vmem>>
    tpu.wait_dma2 semaphore(%arg5 : memref<!tpu.dma_semaphore, #tpu.memory_space<semaphore_mem>>) src(%124 : memref<1x128xf32, #tpu.memory_space<any>>) dst(%125 : memref<1x128xf32, #tpu.memory_space<vmem>>)
    %c0_i32_165 = arith.constant 0 : i32
    %126 = tpu.memref_slice %arg2[%45, %c0_i32_165] : memref<16384x128xf32, #tpu.memory_space<any>> -> memref<1x128xf32, #tpu.memory_space<any>>
    %c15_i32_166 = arith.constant 15 : i32
    %c0_i32_167 = arith.constant 0 : i32
    %127 = tpu.memref_slice %arg4[%c15_i32_166, %c0_i32_167] : memref<32x128xf32, #tpu.memory_space<vmem>> -> memref<1x128xf32, #tpu.memory_space<vmem>>
    tpu.wait_dma2 semaphore(%arg5 : memref<!tpu.dma_semaphore, #tpu.memory_space<semaphore_mem>>) src(%126 : memref<1x128xf32, #tpu.memory_space<any>>) dst(%127 : memref<1x128xf32, #tpu.memory_space<vmem>>)
    %c0_i32_168 = arith.constant 0 : i32
    %128 = tpu.memref_slice %arg2[%48, %c0_i32_168] : memref<16384x128xf32, #tpu.memory_space<any>> -> memref<1x128xf32, #tpu.memory_space<any>>
    %c16_i32_169 = arith.constant 16 : i32
    %c0_i32_170 = arith.constant 0 : i32
    %129 = tpu.memref_slice %arg4[%c16_i32_169, %c0_i32_170] : memref<32x128xf32, #tpu.memory_space<vmem>> -> memref<1x128xf32, #tpu.memory_space<vmem>>
    tpu.wait_dma2 semaphore(%arg5 : memref<!tpu.dma_semaphore, #tpu.memory_space<semaphore_mem>>) src(%128 : memref<1x128xf32, #tpu.memory_space<any>>) dst(%129 : memref<1x128xf32, #tpu.memory_space<vmem>>)
    %c0_i32_171 = arith.constant 0 : i32
    %130 = tpu.memref_slice %arg2[%51, %c0_i32_171] : memref<16384x128xf32, #tpu.memory_space<any>> -> memref<1x128xf32, #tpu.memory_space<any>>
    %c17_i32_172 = arith.constant 17 : i32
    %c0_i32_173 = arith.constant 0 : i32
    %131 = tpu.memref_slice %arg4[%c17_i32_172, %c0_i32_173] : memref<32x128xf32, #tpu.memory_space<vmem>> -> memref<1x128xf32, #tpu.memory_space<vmem>>
    tpu.wait_dma2 semaphore(%arg5 : memref<!tpu.dma_semaphore, #tpu.memory_space<semaphore_mem>>) src(%130 : memref<1x128xf32, #tpu.memory_space<any>>) dst(%131 : memref<1x128xf32, #tpu.memory_space<vmem>>)
    %c0_i32_174 = arith.constant 0 : i32
    %132 = tpu.memref_slice %arg2[%54, %c0_i32_174] : memref<16384x128xf32, #tpu.memory_space<any>> -> memref<1x128xf32, #tpu.memory_space<any>>
    %c18_i32_175 = arith.constant 18 : i32
    %c0_i32_176 = arith.constant 0 : i32
    %133 = tpu.memref_slice %arg4[%c18_i32_175, %c0_i32_176] : memref<32x128xf32, #tpu.memory_space<vmem>> -> memref<1x128xf32, #tpu.memory_space<vmem>>
    tpu.wait_dma2 semaphore(%arg5 : memref<!tpu.dma_semaphore, #tpu.memory_space<semaphore_mem>>) src(%132 : memref<1x128xf32, #tpu.memory_space<any>>) dst(%133 : memref<1x128xf32, #tpu.memory_space<vmem>>)
    %c0_i32_177 = arith.constant 0 : i32
    %134 = tpu.memref_slice %arg2[%57, %c0_i32_177] : memref<16384x128xf32, #tpu.memory_space<any>> -> memref<1x128xf32, #tpu.memory_space<any>>
    %c19_i32_178 = arith.constant 19 : i32
    %c0_i32_179 = arith.constant 0 : i32
    %135 = tpu.memref_slice %arg4[%c19_i32_178, %c0_i32_179] : memref<32x128xf32, #tpu.memory_space<vmem>> -> memref<1x128xf32, #tpu.memory_space<vmem>>
    tpu.wait_dma2 semaphore(%arg5 : memref<!tpu.dma_semaphore, #tpu.memory_space<semaphore_mem>>) src(%134 : memref<1x128xf32, #tpu.memory_space<any>>) dst(%135 : memref<1x128xf32, #tpu.memory_space<vmem>>)
    %c0_i32_180 = arith.constant 0 : i32
    %136 = tpu.memref_slice %arg2[%60, %c0_i32_180] : memref<16384x128xf32, #tpu.memory_space<any>> -> memref<1x128xf32, #tpu.memory_space<any>>
    %c20_i32_181 = arith.constant 20 : i32
    %c0_i32_182 = arith.constant 0 : i32
    %137 = tpu.memref_slice %arg4[%c20_i32_181, %c0_i32_182] : memref<32x128xf32, #tpu.memory_space<vmem>> -> memref<1x128xf32, #tpu.memory_space<vmem>>
    tpu.wait_dma2 semaphore(%arg5 : memref<!tpu.dma_semaphore, #tpu.memory_space<semaphore_mem>>) src(%136 : memref<1x128xf32, #tpu.memory_space<any>>) dst(%137 : memref<1x128xf32, #tpu.memory_space<vmem>>)
    %c0_i32_183 = arith.constant 0 : i32
    %138 = tpu.memref_slice %arg2[%63, %c0_i32_183] : memref<16384x128xf32, #tpu.memory_space<any>> -> memref<1x128xf32, #tpu.memory_space<any>>
    %c21_i32_184 = arith.constant 21 : i32
    %c0_i32_185 = arith.constant 0 : i32
    %139 = tpu.memref_slice %arg4[%c21_i32_184, %c0_i32_185] : memref<32x128xf32, #tpu.memory_space<vmem>> -> memref<1x128xf32, #tpu.memory_space<vmem>>
    tpu.wait_dma2 semaphore(%arg5 : memref<!tpu.dma_semaphore, #tpu.memory_space<semaphore_mem>>) src(%138 : memref<1x128xf32, #tpu.memory_space<any>>) dst(%139 : memref<1x128xf32, #tpu.memory_space<vmem>>)
    %c0_i32_186 = arith.constant 0 : i32
    %140 = tpu.memref_slice %arg2[%66, %c0_i32_186] : memref<16384x128xf32, #tpu.memory_space<any>> -> memref<1x128xf32, #tpu.memory_space<any>>
    %c22_i32_187 = arith.constant 22 : i32
    %c0_i32_188 = arith.constant 0 : i32
    %141 = tpu.memref_slice %arg4[%c22_i32_187, %c0_i32_188] : memref<32x128xf32, #tpu.memory_space<vmem>> -> memref<1x128xf32, #tpu.memory_space<vmem>>
    tpu.wait_dma2 semaphore(%arg5 : memref<!tpu.dma_semaphore, #tpu.memory_space<semaphore_mem>>) src(%140 : memref<1x128xf32, #tpu.memory_space<any>>) dst(%141 : memref<1x128xf32, #tpu.memory_space<vmem>>)
    %c0_i32_189 = arith.constant 0 : i32
    %142 = tpu.memref_slice %arg2[%69, %c0_i32_189] : memref<16384x128xf32, #tpu.memory_space<any>> -> memref<1x128xf32, #tpu.memory_space<any>>
    %c23_i32_190 = arith.constant 23 : i32
    %c0_i32_191 = arith.constant 0 : i32
    %143 = tpu.memref_slice %arg4[%c23_i32_190, %c0_i32_191] : memref<32x128xf32, #tpu.memory_space<vmem>> -> memref<1x128xf32, #tpu.memory_space<vmem>>
    tpu.wait_dma2 semaphore(%arg5 : memref<!tpu.dma_semaphore, #tpu.memory_space<semaphore_mem>>) src(%142 : memref<1x128xf32, #tpu.memory_space<any>>) dst(%143 : memref<1x128xf32, #tpu.memory_space<vmem>>)
    %c0_i32_192 = arith.constant 0 : i32
    %144 = tpu.memref_slice %arg2[%72, %c0_i32_192] : memref<16384x128xf32, #tpu.memory_space<any>> -> memref<1x128xf32, #tpu.memory_space<any>>
    %c24_i32_193 = arith.constant 24 : i32
    %c0_i32_194 = arith.constant 0 : i32
    %145 = tpu.memref_slice %arg4[%c24_i32_193, %c0_i32_194] : memref<32x128xf32, #tpu.memory_space<vmem>> -> memref<1x128xf32, #tpu.memory_space<vmem>>
    tpu.wait_dma2 semaphore(%arg5 : memref<!tpu.dma_semaphore, #tpu.memory_space<semaphore_mem>>) src(%144 : memref<1x128xf32, #tpu.memory_space<any>>) dst(%145 : memref<1x128xf32, #tpu.memory_space<vmem>>)
    %c0_i32_195 = arith.constant 0 : i32
    %146 = tpu.memref_slice %arg2[%75, %c0_i32_195] : memref<16384x128xf32, #tpu.memory_space<any>> -> memref<1x128xf32, #tpu.memory_space<any>>
    %c25_i32_196 = arith.constant 25 : i32
    %c0_i32_197 = arith.constant 0 : i32
    %147 = tpu.memref_slice %arg4[%c25_i32_196, %c0_i32_197] : memref<32x128xf32, #tpu.memory_space<vmem>> -> memref<1x128xf32, #tpu.memory_space<vmem>>
    tpu.wait_dma2 semaphore(%arg5 : memref<!tpu.dma_semaphore, #tpu.memory_space<semaphore_mem>>) src(%146 : memref<1x128xf32, #tpu.memory_space<any>>) dst(%147 : memref<1x128xf32, #tpu.memory_space<vmem>>)
    %c0_i32_198 = arith.constant 0 : i32
    %148 = tpu.memref_slice %arg2[%78, %c0_i32_198] : memref<16384x128xf32, #tpu.memory_space<any>> -> memref<1x128xf32, #tpu.memory_space<any>>
    %c26_i32_199 = arith.constant 26 : i32
    %c0_i32_200 = arith.constant 0 : i32
    %149 = tpu.memref_slice %arg4[%c26_i32_199, %c0_i32_200] : memref<32x128xf32, #tpu.memory_space<vmem>> -> memref<1x128xf32, #tpu.memory_space<vmem>>
    tpu.wait_dma2 semaphore(%arg5 : memref<!tpu.dma_semaphore, #tpu.memory_space<semaphore_mem>>) src(%148 : memref<1x128xf32, #tpu.memory_space<any>>) dst(%149 : memref<1x128xf32, #tpu.memory_space<vmem>>)
    %c0_i32_201 = arith.constant 0 : i32
    %150 = tpu.memref_slice %arg2[%81, %c0_i32_201] : memref<16384x128xf32, #tpu.memory_space<any>> -> memref<1x128xf32, #tpu.memory_space<any>>
    %c27_i32_202 = arith.constant 27 : i32
    %c0_i32_203 = arith.constant 0 : i32
    %151 = tpu.memref_slice %arg4[%c27_i32_202, %c0_i32_203] : memref<32x128xf32, #tpu.memory_space<vmem>> -> memref<1x128xf32, #tpu.memory_space<vmem>>
    tpu.wait_dma2 semaphore(%arg5 : memref<!tpu.dma_semaphore, #tpu.memory_space<semaphore_mem>>) src(%150 : memref<1x128xf32, #tpu.memory_space<any>>) dst(%151 : memref<1x128xf32, #tpu.memory_space<vmem>>)
    %c0_i32_204 = arith.constant 0 : i32
    %152 = tpu.memref_slice %arg2[%84, %c0_i32_204] : memref<16384x128xf32, #tpu.memory_space<any>> -> memref<1x128xf32, #tpu.memory_space<any>>
    %c28_i32_205 = arith.constant 28 : i32
    %c0_i32_206 = arith.constant 0 : i32
    %153 = tpu.memref_slice %arg4[%c28_i32_205, %c0_i32_206] : memref<32x128xf32, #tpu.memory_space<vmem>> -> memref<1x128xf32, #tpu.memory_space<vmem>>
    tpu.wait_dma2 semaphore(%arg5 : memref<!tpu.dma_semaphore, #tpu.memory_space<semaphore_mem>>) src(%152 : memref<1x128xf32, #tpu.memory_space<any>>) dst(%153 : memref<1x128xf32, #tpu.memory_space<vmem>>)
    %c0_i32_207 = arith.constant 0 : i32
    %154 = tpu.memref_slice %arg2[%87, %c0_i32_207] : memref<16384x128xf32, #tpu.memory_space<any>> -> memref<1x128xf32, #tpu.memory_space<any>>
    %c29_i32_208 = arith.constant 29 : i32
    %c0_i32_209 = arith.constant 0 : i32
    %155 = tpu.memref_slice %arg4[%c29_i32_208, %c0_i32_209] : memref<32x128xf32, #tpu.memory_space<vmem>> -> memref<1x128xf32, #tpu.memory_space<vmem>>
    tpu.wait_dma2 semaphore(%arg5 : memref<!tpu.dma_semaphore, #tpu.memory_space<semaphore_mem>>) src(%154 : memref<1x128xf32, #tpu.memory_space<any>>) dst(%155 : memref<1x128xf32, #tpu.memory_space<vmem>>)
    %c0_i32_210 = arith.constant 0 : i32
    %156 = tpu.memref_slice %arg2[%90, %c0_i32_210] : memref<16384x128xf32, #tpu.memory_space<any>> -> memref<1x128xf32, #tpu.memory_space<any>>
    %c30_i32_211 = arith.constant 30 : i32
    %c0_i32_212 = arith.constant 0 : i32
    %157 = tpu.memref_slice %arg4[%c30_i32_211, %c0_i32_212] : memref<32x128xf32, #tpu.memory_space<vmem>> -> memref<1x128xf32, #tpu.memory_space<vmem>>
    tpu.wait_dma2 semaphore(%arg5 : memref<!tpu.dma_semaphore, #tpu.memory_space<semaphore_mem>>) src(%156 : memref<1x128xf32, #tpu.memory_space<any>>) dst(%157 : memref<1x128xf32, #tpu.memory_space<vmem>>)
    %c0_i32_213 = arith.constant 0 : i32
    %158 = tpu.memref_slice %arg2[%93, %c0_i32_213] : memref<16384x128xf32, #tpu.memory_space<any>> -> memref<1x128xf32, #tpu.memory_space<any>>
    %c31_i32_214 = arith.constant 31 : i32
    %c0_i32_215 = arith.constant 0 : i32
    %159 = tpu.memref_slice %arg4[%c31_i32_214, %c0_i32_215] : memref<32x128xf32, #tpu.memory_space<vmem>> -> memref<1x128xf32, #tpu.memory_space<vmem>>
    tpu.wait_dma2 semaphore(%arg5 : memref<!tpu.dma_semaphore, #tpu.memory_space<semaphore_mem>>) src(%158 : memref<1x128xf32, #tpu.memory_space<any>>) dst(%159 : memref<1x128xf32, #tpu.memory_space<vmem>>)
    %c0_216 = arith.constant 0 : index
    %c0_217 = arith.constant 0 : index
    %160 = vector.load %arg4[%c0_216, %c0_217] : memref<32x128xf32, #tpu.memory_space<vmem>>, vector<8x128xf32>
    %c8 = arith.constant 8 : index
    %c0_218 = arith.constant 0 : index
    %161 = vector.load %arg4[%c8, %c0_218] : memref<32x128xf32, #tpu.memory_space<vmem>>, vector<8x128xf32>
    %162 = arith.addf %160, %161 : vector<8x128xf32>
    %c16 = arith.constant 16 : index
    %c0_219 = arith.constant 0 : index
    %163 = vector.load %arg4[%c16, %c0_219] : memref<32x128xf32, #tpu.memory_space<vmem>>, vector<8x128xf32>
    %164 = arith.addf %162, %163 : vector<8x128xf32>
    %c24 = arith.constant 24 : index
    %c0_220 = arith.constant 0 : index
    %165 = vector.load %arg4[%c24, %c0_220] : memref<32x128xf32, #tpu.memory_space<vmem>>, vector<8x128xf32>
    %166 = arith.addf %164, %165 : vector<8x128xf32>
    %cst = arith.constant 2.500000e-01 : f32
    %167 = vector.broadcast %cst : f32 to vector<8x128xf32>
    %168 = arith.mulf %166, %167 : vector<8x128xf32>
    %169 = arith.truncf %168 : vector<8x128xf32> to vector<8x128xbf16>
    %c0_221 = arith.constant 0 : index
    %c0_222 = arith.constant 0 : index
    %170 = vector.load %arg3[%c0_221, %c0_222] : memref<8x128xbf16, #tpu.memory_space<vmem>>, vector<8x128xbf16>
    tpu.vector_store %arg3[%c0_221, %c0_222], %169 {strides = array<i32>} : memref<8x128xbf16, #tpu.memory_space<vmem>>, vector<8x128xbf16>,
    return
  }
  func.func @transform_1(%arg0: i32, %arg1: memref<8x4xi32, #tpu.memory_space<smem>>) -> (i32, i32) {
    %c0_i32 = arith.constant 0 : i32
    %c0_i32_0 = arith.constant 0 : i32
    %c0_i32_1 = arith.constant 0 : i32
    return %c0_i32, %c0_i32_0 : i32, i32
  }
}

</mosaic_0001>

<llo_original>
// kernel: cbow_forward.2
$region0: #{cbow_forward.2}
  #allocation0 [shape = 'u32[]', space=smem, size = 0x4, offset = 0x4, fixed_abs, tag = 'smem constant byte address 0x4 - core index']
  #allocation1 [shape = 'u32[72,128]{1,0:T(1,128)}', space=vmem, size = 0x9000, scoped, tag = 'internal scratch']
  #allocation2 [shape = 'f32[32,128]{1,0:T(8,128)}', space=vmem, size = 0x4000, scoped, tag = 'scratch operand']
  #allocation3 [shape = 's32[1]{0}', space=sflag, size = 0x4, scoped, tag = 'scratch operand']
  #allocation4 [shape = 's32[1]{0}', space=sflag, size = 0x4, scoped, tag = 'scoped memory for cbow_forward.2']
  #allocation5 [shape = 'u8[4096]{0}', space=smem, size = 0x1000, scoped, tag = 'prefetched SMEM operand 0']
  #allocation6 [shape = 's32[]', space=sflag, size = 0x4, offset = 0, fixed_abs, tag = 'sflag constant byte address 0x0 - dummy sync flag']
  #allocation7 [shape = 's32[]', space=sflag, size = 0x4, offset = 0, fixed_abs, tag = 'sflag constant byte address 0x0 - dummy sync flag']
  #allocation8 [shape = 'u32[]', space=smem, size = 0x4, offset = 0x44, fixed_abs, tag = 'smem constant byte address 0x44 - assertion arg 0']
  #allocation9 [shape = 'u32[]', space=smem, size = 0x4, offset = 0x48, fixed_abs, tag = 'smem constant byte address 0x48 - assertion arg 1']
  #allocation10 [shape = 's32[]', space=sflag, size = 0x4, offset = 0, fixed_abs, tag = 'sflag constant byte address 0x0 - dummy sync flag']
  #allocation11 [shape = 's32[]', space=sflag, size = 0x4, offset = 0, fixed_abs, tag = 'sflag constant byte address 0x0 - dummy sync flag']
  #allocation12 [shape = 's32[]', space=sflag, size = 0x4, offset = 0, fixed_abs, tag = 'sflag constant byte address 0x0 - dummy sync flag']
  #allocation13 [shape = 's32[]', space=sflag, size = 0x4, offset = 0, fixed_abs, tag = 'sflag constant byte address 0x0 - dummy sync flag']
  #allocation14 [shape = 's32[]', space=sflag, size = 0x4, offset = 0, fixed_abs, tag = 'sflag constant byte address 0x0 - dummy sync flag']
  #allocation15 [shape = 's32[]', space=sflag, size = 0x4, offset = 0, fixed_abs, tag = 'sflag constant byte address 0x0 - dummy sync flag']
  #allocation16 [shape = 's32[]', space=sflag, size = 0x4, offset = 0, fixed_abs, tag = 'sflag constant byte address 0x0 - dummy sync flag']
  #allocation17 [shape = 's32[]', space=sflag, size = 0x4, offset = 0, fixed_abs, tag = 'sflag constant byte address 0x0 - dummy sync flag']
  #allocation18 [shape = 's32[]', space=sflag, size = 0x4, offset = 0, fixed_abs, tag = 'sflag constant byte address 0x0 - dummy sync flag']
  #allocation19 [shape = 's32[]', space=sflag, size = 0x4, offset = 0, fixed_abs, tag = 'sflag constant byte address 0x0 - dummy sync flag']
  #allocation20 [shape = 's32[]', space=sflag, size = 0x4, offset = 0, fixed_abs, tag = 'sflag constant byte address 0x0 - dummy sync flag']
  #allocation21 [shape = 's32[]', space=sflag, size = 0x4, offset = 0, fixed_abs, tag = 'sflag constant byte address 0x0 - dummy sync flag']
  #allocation22 [shape = 's32[]', space=sflag, size = 0x4, offset = 0, fixed_abs, tag = 'sflag constant byte address 0x0 - dummy sync flag']
  #allocation23 [shape = 's32[]', space=sflag, size = 0x4, offset = 0, fixed_abs, tag = 'sflag constant byte address 0x0 - dummy sync flag']
  #allocation24 [shape = 's32[]', space=sflag, size = 0x4, offset = 0, fixed_abs, tag = 'sflag constant byte address 0x0 - dummy sync flag']
  #allocation25 [shape = 's32[]', space=sflag, size = 0x4, offset = 0, fixed_abs, tag = 'sflag constant byte address 0x0 - dummy sync flag']
  #allocation26 [shape = 's32[]', space=sflag, size = 0x4, offset = 0, fixed_abs, tag = 'sflag constant byte address 0x0 - dummy sync flag']
  #allocation27 [shape = 's32[]', space=sflag, size = 0x4, offset = 0, fixed_abs, tag = 'sflag constant byte address 0x0 - dummy sync flag']
  #allocation28 [shape = 's32[]', space=sflag, size = 0x4, offset = 0, fixed_abs, tag = 'sflag constant byte address 0x0 - dummy sync flag']
  #allocation29 [shape = 's32[]', space=sflag, size = 0x4, offset = 0, fixed_abs, tag = 'sflag constant byte address 0x0 - dummy sync flag']
  #allocation30 [shape = 's32[]', space=sflag, size = 0x4, offset = 0, fixed_abs, tag = 'sflag constant byte address 0x0 - dummy sync flag']
  #allocation31 [shape = 's32[]', space=sflag, size = 0x4, offset = 0, fixed_abs, tag = 'sflag constant byte address 0x0 - dummy sync flag']
  #allocation32 [shape = 's32[]', space=sflag, size = 0x4, offset = 0, fixed_abs, tag = 'sflag constant byte address 0x0 - dummy sync flag']
  #allocation33 [shape = 's32[]', space=sflag, size = 0x4, offset = 0, fixed_abs, tag = 'sflag constant byte address 0x0 - dummy sync flag']
  #allocation34 [shape = 's32[]', space=sflag, size = 0x4, offset = 0, fixed_abs, tag = 'sflag constant byte address 0x0 - dummy sync flag']
  #allocation35 [shape = 's32[]', space=sflag, size = 0x4, offset = 0, fixed_abs, tag = 'sflag constant byte address 0x0 - dummy sync flag']
  #allocation36 [shape = 's32[]', space=sflag, size = 0x4, offset = 0, fixed_abs, tag = 'sflag constant byte address 0x0 - dummy sync flag']
  #allocation37 [shape = 's32[]', space=sflag, size = 0x4, offset = 0, fixed_abs, tag = 'sflag constant byte address 0x0 - dummy sync flag']
  #allocation38 [shape = 's32[]', space=sflag, size = 0x4, offset = 0, fixed_abs, tag = 'sflag constant byte address 0x0 - dummy sync flag']
  #allocation39 [shape = 's32[]', space=sflag, size = 0x4, offset = 0, fixed_abs, tag = 'sflag constant byte address 0x0 - dummy sync flag']
  #allocation40 [shape = 's32[]', space=sflag, size = 0x4, offset = 0, fixed_abs, tag = 'sflag constant byte address 0x0 - dummy sync flag']
  #allocation41 [shape = 's32[]', space=sflag, size = 0x4, offset = 0, fixed_abs, tag = 'sflag constant byte address 0x0 - dummy sync flag']
  #allocation42 [shape = 's32[]', space=sflag, size = 0x4, offset = 0, fixed_abs, tag = 'sflag constant byte address 0x0 - dummy sync flag']
  #allocation43 [shape = 's32[]', space=sflag, size = 0x4, offset = 0, fixed_abs, tag = 'sflag constant byte address 0x0 - dummy sync flag']
  #allocation44 [shape = 's32[]', space=sflag, size = 0x4, offset = 0, fixed_abs, tag = 'sflag constant byte address 0x0 - dummy sync flag']
  #allocation45 [shape = 's32[]', space=sflag, size = 0x4, offset = 0, fixed_abs, tag = 'sflag constant byte address 0x0 - dummy sync flag']
  #allocation46 [shape = 's32[]', space=sflag, size = 0x4, offset = 0, fixed_abs, tag = 'sflag constant byte address 0x0 - dummy sync flag']
  #allocation47 [shape = 's32[]', space=sflag, size = 0x4, offset = 0, fixed_abs, tag = 'sflag constant byte address 0x0 - dummy sync flag']
  #allocation48 [shape = 's32[]', space=sflag, size = 0x4, offset = 0, fixed_abs, tag = 'sflag constant byte address 0x0 - dummy sync flag']
  #allocation49 [shape = 's32[]', space=sflag, size = 0x4, offset = 0, fixed_abs, tag = 'sflag constant byte address 0x0 - dummy sync flag']
  #allocation50 [shape = 's32[]', space=sflag, size = 0x4, offset = 0, fixed_abs, tag = 'sflag constant byte address 0x0 - dummy sync flag']
  #allocation51 [shape = 's32[]', space=sflag, size = 0x4, offset = 0, fixed_abs, tag = 'sflag constant byte address 0x0 - dummy sync flag']
  #allocation52 [shape = 's32[]', space=sflag, size = 0x4, offset = 0, fixed_abs, tag = 'sflag constant byte address 0x0 - dummy sync flag']
  #allocation53 [shape = 's32[]', space=sflag, size = 0x4, offset = 0, fixed_abs, tag = 'sflag constant byte address 0x0 - dummy sync flag']
  #allocation54 [shape = 's32[]', space=sflag, size = 0x4, offset = 0, fixed_abs, tag = 'sflag constant byte address 0x0 - dummy sync flag']
  #allocation55 [shape = 's32[]', space=sflag, size = 0x4, offset = 0, fixed_abs, tag = 'sflag constant byte address 0x0 - dummy sync flag']
  #allocation56 [shape = 's32[]', space=sflag, size = 0x4, offset = 0, fixed_abs, tag = 'sflag constant byte address 0x0 - dummy sync flag']
  #allocation57 [shape = 's32[]', space=sflag, size = 0x4, offset = 0, fixed_abs, tag = 'sflag constant byte address 0x0 - dummy sync flag']
  #allocation58 [shape = 's32[]', space=sflag, size = 0x4, offset = 0, fixed_abs, tag = 'sflag constant byte address 0x0 - dummy sync flag']
  #allocation59 [shape = 's32[]', space=sflag, size = 0x4, offset = 0, fixed_abs, tag = 'sflag constant byte address 0x0 - dummy sync flag']
  #allocation60 [shape = 's32[]', space=sflag, size = 0x4, offset = 0, fixed_abs, tag = 'sflag constant byte address 0x0 - dummy sync flag']
  #allocation61 [shape = 's32[]', space=sflag, size = 0x4, offset = 0, fixed_abs, tag = 'sflag constant byte address 0x0 - dummy sync flag']
  #allocation62 [shape = 's32[]', space=sflag, size = 0x4, offset = 0, fixed_abs, tag = 'sflag constant byte address 0x0 - dummy sync flag']
  #allocation63 [shape = 's32[]', space=sflag, size = 0x4, offset = 0, fixed_abs, tag = 'sflag constant byte address 0x0 - dummy sync flag']
  #allocation64 [shape = 's32[]', space=sflag, size = 0x4, offset = 0, fixed_abs, tag = 'sflag constant byte address 0x0 - dummy sync flag']
  #allocation65 [shape = 's32[]', space=sflag, size = 0x4, offset = 0, fixed_abs, tag = 'sflag constant byte address 0x0 - dummy sync flag']
  #allocation66 [shape = 's32[]', space=sflag, size = 0x4, offset = 0, fixed_abs, tag = 'sflag constant byte address 0x0 - dummy sync flag']
  #allocation67 [shape = 's32[]', space=sflag, size = 0x4, offset = 0, fixed_abs, tag = 'sflag constant byte address 0x0 - dummy sync flag']
  #allocation68 [shape = 's32[]', space=sflag, size = 0x4, offset = 0, fixed_abs, tag = 'sflag constant byte address 0x0 - dummy sync flag']
  #allocation69 [shape = 's32[]', space=sflag, size = 0x4, offset = 0, fixed_abs, tag = 'sflag constant byte address 0x0 - dummy sync flag']
  #allocation70 [shape = 's32[]', space=sflag, size = 0x4, offset = 0, fixed_abs, tag = 'sflag constant byte address 0x0 - dummy sync flag']
  #allocation71 [shape = 's32[]', space=sflag, size = 0x4, offset = 0, fixed_abs, tag = 'sflag constant byte address 0x0 - dummy sync flag']
  %s0 = inlined_call_operand.vmem [shape: s32[8,4], index: 0, kind: input, shape index: {}]
  %s1 = inlined_call_operand.hbm [shape: f32[16384,128], index: 1, kind: input, shape index: {}]
  %s2 = inlined_call_operand.vmem [shape: bf16[8,128], index: 2, kind: output, shape index: {}]
  %s3 = sld [smem:[#allocation0]]
  $region138: #{cbow_forward.2} parent=0
    _
  %s5 = ssub.s32 1, %s3
  %s6 = scalar_select 0, %s5, %s3
  %s8 = sshll.u32 %s0, 4
  %s9 = int_to_ptr.vmem [resolvable:$true] %s8
  %11 = dma.vmem_to_smem %s9, 128, [#allocation5], [#allocation4]
  %13 = dma.done [#allocation4], 128
  %14 = sfence
  %s15 = sld [smem:[#allocation5]]
  %s16 = scalar_lea.hbm %s1, %s15
  // Predicated region
  $region2: #{cbow_forward.2} parent=0 // pred_check
    _
  $region3: #{cbow_forward.2} parent=0 // pred_check_branch
    %18 = sbr.rel target = $region5
  $region4: #{cbow_forward.2} parent=0 // pred_region
    %19 = sst [smem:[#allocation8]] [#allocation7]
    %20 = sst [smem:[#allocation9]] [#allocation6]
  $region5: #{cbow_forward.2} parent=0 // pred_fallthru
    _
  %22 = shalt.err (0)
  %s24 = sshll.u32 %s16, 4
  %s25 = int_to_ptr.hbm [resolvable:$true] %s24
  %s26 = sshll.u32 [#allocation2], 4
  %s27 = int_to_ptr.vmem [resolvable:$true] %s26
  %29 = dma.hbm_to_vmem [thread:$0]  %s25, 16, %s27, [#allocation3]
  %s30 = sld [smem:[#allocation5 + $0x80]]
  %s31 = scalar_lea.hbm %s1, %s30
  %s32 = scalar_lea.vmem [#allocation2], 1
  // Predicated region
  $region6: #{cbow_forward.2} parent=0 // pred_check
    _
  $region7: #{cbow_forward.2} parent=0 // pred_check_branch
    %34 = sbr.rel target = $region9
  $region8: #{cbow_forward.2} parent=0 // pred_region
    %35 = sst [smem:[#allocation8]] [#allocation11]
    %36 = sst [smem:[#allocation9]] [#allocation10]
  $region9: #{cbow_forward.2} parent=0 // pred_fallthru
    _
  %38 = shalt.err (0)
  %s40 = sshll.u32 %s31, 4
  %s41 = int_to_ptr.hbm [resolvable:$true] %s40
  %s42 = sshll.u32 %s32, 4
  %s43 = int_to_ptr.vmem [resolvable:$true] %s42
  %45 = dma.hbm_to_vmem [thread:$0]  %s41, 16, %s43, [#allocation3]
  %s46 = sld [smem:[#allocation5 + $0x100]]
  %s47 = scalar_lea.hbm %s1, %s46
  %s48 = scalar_lea.vmem [#allocation2], 2
  // Predicated region
  $region10: #{cbow_forward.2} parent=0 // pred_check
    _
  $region11: #{cbow_forward.2} parent=0 // pred_check_branch
    %50 = sbr.rel target = $region13
  $region12: #{cbow_forward.2} parent=0 // pred_region
    %51 = sst [smem:[#allocation8]] [#allocation13]
    %52 = sst [smem:[#allocation9]] [#allocation12]
  $region13: #{cbow_forward.2} parent=0 // pred_fallthru
    _
  %54 = shalt.err (0)
  %s56 = sshll.u32 %s47, 4
  %s57 = int_to_ptr.hbm [resolvable:$true] %s56
  %s58 = sshll.u32 %s48, 4
  %s59 = int_to_ptr.vmem [resolvable:$true] %s58
  %61 = dma.hbm_to_vmem [thread:$0]  %s57, 16, %s59, [#allocation3]
  %s62 = sld [smem:[#allocation5 + $0x180]]
  %s63 = scalar_lea.hbm %s1, %s62
  %s64 = scalar_lea.vmem [#allocation2], 3
  // Predicated region
  $region14: #{cbow_forward.2} parent=0 // pred_check
    _
  $region15: #{cbow_forward.2} parent=0 // pred_check_branch
    %66 = sbr.rel target = $region17
  $region16: #{cbow_forward.2} parent=0 // pred_region
    %67 = sst [smem:[#allocation8]] [#allocation15]
    %68 = sst [smem:[#allocation9]] [#allocation14]
  $region17: #{cbow_forward.2} parent=0 // pred_fallthru
    _
  %70 = shalt.err (0)
  %s72 = sshll.u32 %s63, 4
  %s73 = int_to_ptr.hbm [resolvable:$true] %s72
  %s74 = sshll.u32 %s64, 4
  %s75 = int_to_ptr.vmem [resolvable:$true] %s74
  %77 = dma.hbm_to_vmem [thread:$0]  %s73, 16, %s75, [#allocation3]
  %s78 = sld [smem:[#allocation5 + $0x200]]
  %s79 = scalar_lea.hbm %s1, %s78
  %s80 = scalar_lea.vmem [#allocation2], 4
  // Predicated region
  $region18: #{cbow_forward.2} parent=0 // pred_check
    _
  $region19: #{cbow_forward.2} parent=0 // pred_check_branch
    %82 = sbr.rel target = $region21
  $region20: #{cbow_forward.2} parent=0 // pred_region
    %83 = sst [smem:[#allocation8]] [#allocation17]
    %84 = sst [smem:[#allocation9]] [#allocation16]
  $region21: #{cbow_forward.2} parent=0 // pred_fallthru
    _
  %86 = shalt.err (0)
  %s88 = sshll.u32 %s79, 4
  %s89 = int_to_ptr.hbm [resolvable:$true] %s88
  %s90 = sshll.u32 %s80, 4
  %s91 = int_to_ptr.vmem [resolvable:$true] %s90
  %93 = dma.hbm_to_vmem [thread:$0]  %s89, 16, %s91, [#allocation3]
  %s94 = sld [smem:[#allocation5 + $0x280]]
  %s95 = scalar_lea.hbm %s1, %s94
  %s96 = scalar_lea.vmem [#allocation2], 5
  // Predicated region
  $region22: #{cbow_forward.2} parent=0 // pred_check
    _
  $region23: #{cbow_forward.2} parent=0 // pred_check_branch
    %98 = sbr.rel target = $region25
  $region24: #{cbow_forward.2} parent=0 // pred_region
    %99 = sst [smem:[#allocation8]] [#allocation19]
    %100 = sst [smem:[#allocation9]] [#allocation18]
  $region25: #{cbow_forward.2} parent=0 // pred_fallthru
    _
  %102 = shalt.err (0)
  %s104 = sshll.u32 %s95, 4
  %s105 = int_to_ptr.hbm [resolvable:$true] %s104
  %s106 = sshll.u32 %s96, 4
  %s107 = int_to_ptr.vmem [resolvable:$true] %s106
  %109 = dma.hbm_to_vmem [thread:$0]  %s105, 16, %s107, [#allocation3]
  %s110 = sld [smem:[#allocation5 + $0x300]]
  %s111 = scalar_lea.hbm %s1, %s110
  %s112 = scalar_lea.vmem [#allocation2], 6
  // Predicated region
  $region26: #{cbow_forward.2} parent=0 // pred_check
    _
  $region27: #{cbow_forward.2} parent=0 // pred_check_branch
    %114 = sbr.rel target = $region29
  $region28: #{cbow_forward.2} parent=0 // pred_region
    %115 = sst [smem:[#allocation8]] [#allocation21]
    %116 = sst [smem:[#allocation9]] [#allocation20]
  $region29: #{cbow_forward.2} parent=0 // pred_fallthru
    _
  %118 = shalt.err (0)
  %s120 = sshll.u32 %s111, 4
  %s121 = int_to_ptr.hbm [resolvable:$true] %s120
  %s122 = sshll.u32 %s112, 4
  %s123 = int_to_ptr.vmem [resolvable:$true] %s122
  %125 = dma.hbm_to_vmem [thread:$0]  %s121, 16, %s123, [#allocation3]
  %s126 = sld [smem:[#allocation5 + $0x380]]
  %s127 = scalar_lea.hbm %s1, %s126
  %s128 = scalar_lea.vmem [#allocation2], 7
  // Predicated region
  $region30: #{cbow_forward.2} parent=0 // pred_check
    _
  $region31: #{cbow_forward.2} parent=0 // pred_check_branch
    %130 = sbr.rel target = $region33
  $region32: #{cbow_forward.2} parent=0 // pred_region
    %131 = sst [smem:[#allocation8]] [#allocation23]
    %132 = sst [smem:[#allocation9]] [#allocation22]
  $region33: #{cbow_forward.2} parent=0 // pred_fallthru
    _
  %134 = shalt.err (0)
  %s136 = sshll.u32 %s127, 4
  %s137 = int_to_ptr.hbm [resolvable:$true] %s136
  %s138 = sshll.u32 %s128, 4
  %s139 = int_to_ptr.vmem [resolvable:$true] %s138
  %141 = dma.hbm_to_vmem [thread:$0]  %s137, 16, %s139, [#allocation3]
  %s142 = sld [smem:[#allocation5 + $0x1]]
  %s143 = scalar_lea.hbm %s1, %s142
  %s144 = scalar_lea.vmem [#allocation2], 8
  // Predicated region
  $region34: #{cbow_forward.2} parent=0 // pred_check
    _
  $region35: #{cbow_forward.2} parent=0 // pred_check_branch
    %146 = sbr.rel target = $region37
  $region36: #{cbow_forward.2} parent=0 // pred_region
    %147 = sst [smem:[#allocation8]] [#allocation25]
    %148 = sst [smem:[#allocation9]] [#allocation24]
  $region37: #{cbow_forward.2} parent=0 // pred_fallthru
    _
  %150 = shalt.err (0)
  %s152 = sshll.u32 %s143, 4
  %s153 = int_to_ptr.hbm [resolvable:$true] %s152
  %s154 = sshll.u32 %s144, 4
  %s155 = int_to_ptr.vmem [resolvable:$true] %s154
  %157 = dma.hbm_to_vmem [thread:$0]  %s153, 16, %s155, [#allocation3]
  %s158 = sld [smem:[#allocation5 + $0x81]]
  %s159 = scalar_lea.hbm %s1, %s158
  %s160 = scalar_lea.vmem [#allocation2], 9
  // Predicated region
  $region38: #{cbow_forward.2} parent=0 // pred_check
    _
  $region39: #{cbow_forward.2} parent=0 // pred_check_branch
    %162 = sbr.rel target = $region41
  $region40: #{cbow_forward.2} parent=0 // pred_region
    %163 = sst [smem:[#allocation8]] [#allocation27]
    %164 = sst [smem:[#allocation9]] [#allocation26]
  $region41: #{cbow_forward.2} parent=0 // pred_fallthru
    _
  %166 = shalt.err (0)
  %s168 = sshll.u32 %s159, 4
  %s169 = int_to_ptr.hbm [resolvable:$true] %s168
  %s170 = sshll.u32 %s160, 4
  %s171 = int_to_ptr.vmem [resolvable:$true] %s170
  %173 = dma.hbm_to_vmem [thread:$0]  %s169, 16, %s171, [#allocation3]
  %s174 = sld [smem:[#allocation5 + $0x101]]
  %s175 = scalar_lea.hbm %s1, %s174
  %s176 = scalar_lea.vmem [#allocation2], 10
  // Predicated region
  $region42: #{cbow_forward.2} parent=0 // pred_check
    _
  $region43: #{cbow_forward.2} parent=0 // pred_check_branch
    %178 = sbr.rel target = $region45
  $region44: #{cbow_forward.2} parent=0 // pred_region
    %179 = sst [smem:[#allocation8]] [#allocation29]
    %180 = sst [smem:[#allocation9]] [#allocation28]
  $region45: #{cbow_forward.2} parent=0 // pred_fallthru
    _
  %182 = shalt.err (0)
  %s184 = sshll.u32 %s175, 4
  %s185 = int_to_ptr.hbm [resolvable:$true] %s184
  %s186 = sshll.u32 %s176, 4
  %s187 = int_to_ptr.vmem [resolvable:$true] %s186
  %189 = dma.hbm_to_vmem [thread:$0]  %s185, 16, %s187, [#allocation3]
  %s190 = sld [smem:[#allocation5 + $0x181]]
  %s191 = scalar_lea.hbm %s1, %s190
  %s192 = scalar_lea.vmem [#allocation2], 11
  // Predicated region
  $region46: #{cbow_forward.2} parent=0 // pred_check
    _
  $region47: #{cbow_forward.2} parent=0 // pred_check_branch
    %194 = sbr.rel target = $region49
  $region48: #{cbow_forward.2} parent=0 // pred_region
    %195 = sst [smem:[#allocation8]] [#allocation31]
    %196 = sst [smem:[#allocation9]] [#allocation30]
  $region49: #{cbow_forward.2} parent=0 // pred_fallthru
    _
  %198 = shalt.err (0)
  %s200 = sshll.u32 %s191, 4
  %s201 = int_to_ptr.hbm [resolvable:$true] %s200
  %s202 = sshll.u32 %s192, 4
  %s203 = int_to_ptr.vmem [resolvable:$true] %s202
  %205 = dma.hbm_to_vmem [thread:$0]  %s201, 16, %s203, [#allocation3]
  %s206 = sld [smem:[#allocation5 + $0x201]]
  %s207 = scalar_lea.hbm %s1, %s206
  %s208 = scalar_lea.vmem [#allocation2], 12
  // Predicated region
  $region50: #{cbow_forward.2} parent=0 // pred_check
    _
  $region51: #{cbow_forward.2} parent=0 // pred_check_branch
    %210 = sbr.rel target = $region53
  $region52: #{cbow_forward.2} parent=0 // pred_region
    %211 = sst [smem:[#allocation8]] [#allocation33]
    %212 = sst [smem:[#allocation9]] [#allocation32]
  $region53: #{cbow_forward.2} parent=0 // pred_fallthru
    _
  %214 = shalt.err (0)
  %s216 = sshll.u32 %s207, 4
  %s217 = int_to_ptr.hbm [resolvable:$true] %s216
  %s218 = sshll.u32 %s208, 4
  %s219 = int_to_ptr.vmem [resolvable:$true] %s218
  %221 = dma.hbm_to_vmem [thread:$0]  %s217, 16, %s219, [#allocation3]
  %s222 = sld [smem:[#allocation5 + $0x281]]
  %s223 = scalar_lea.hbm %s1, %s222
  %s224 = scalar_lea.vmem [#allocation2], 13
  // Predicated region
  $region54: #{cbow_forward.2} parent=0 // pred_check
    _
  $region55: #{cbow_forward.2} parent=0 // pred_check_branch
    %226 = sbr.rel target = $region57
  $region56: #{cbow_forward.2} parent=0 // pred_region
    %227 = sst [smem:[#allocation8]] [#allocation35]
    %228 = sst [smem:[#allocation9]] [#allocation34]
  $region57: #{cbow_forward.2} parent=0 // pred_fallthru
    _
  %230 = shalt.err (0)
  %s232 = sshll.u32 %s223, 4
  %s233 = int_to_ptr.hbm [resolvable:$true] %s232
  %s234 = sshll.u32 %s224, 4
  %s235 = int_to_ptr.vmem [resolvable:$true] %s234
  %237 = dma.hbm_to_vmem [thread:$0]  %s233, 16, %s235, [#allocation3]
  %s238 = sld [smem:[#allocation5 + $0x301]]
  %s239 = scalar_lea.hbm %s1, %s238
  %s240 = scalar_lea.vmem [#allocation2], 14
  // Predicated region
  $region58: #{cbow_forward.2} parent=0 // pred_check
    _
  $region59: #{cbow_forward.2} parent=0 // pred_check_branch
    %242 = sbr.rel target = $region61
  $region60: #{cbow_forward.2} parent=0 // pred_region
    %243 = sst [smem:[#allocation8]] [#allocation37]
    %244 = sst [smem:[#allocation9]] [#allocation36]
  $region61: #{cbow_forward.2} parent=0 // pred_fallthru
    _
  %246 = shalt.err (0)
  %s248 = sshll.u32 %s239, 4
  %s249 = int_to_ptr.hbm [resolvable:$true] %s248
  %s250 = sshll.u32 %s240, 4
  %s251 = int_to_ptr.vmem [resolvable:$true] %s250
  %253 = dma.hbm_to_vmem [thread:$0]  %s249, 16, %s251, [#allocation3]
  %s254 = sld [smem:[#allocation5 + $0x381]]
  %s255 = scalar_lea.hbm %s1, %s254
  %s256 = scalar_lea.vmem [#allocation2], 15
  // Predicated region
  $region62: #{cbow_forward.2} parent=0 // pred_check
    _
  $region63: #{cbow_forward.2} parent=0 // pred_check_branch
    %258 = sbr.rel target = $region65
  $region64: #{cbow_forward.2} parent=0 // pred_region
    %259 = sst [smem:[#allocation8]] [#allocation39]
    %260 = sst [smem:[#allocation9]] [#allocation38]
  $region65: #{cbow_forward.2} parent=0 // pred_fallthru
    _
  %262 = shalt.err (0)
  %s264 = sshll.u32 %s255, 4
  %s265 = int_to_ptr.hbm [resolvable:$true] %s264
  %s266 = sshll.u32 %s256, 4
  %s267 = int_to_ptr.vmem [resolvable:$true] %s266
  %269 = dma.hbm_to_vmem [thread:$0]  %s265, 16, %s267, [#allocation3]
  %s270 = sld [smem:[#allocation5 + $0x2]]
  %s271 = scalar_lea.hbm %s1, %s270
  %s272 = scalar_lea.vmem [#allocation2], 16
  // Predicated region
  $region66: #{cbow_forward.2} parent=0 // pred_check
    _
  $region67: #{cbow_forward.2} parent=0 // pred_check_branch
    %274 = sbr.rel target = $region69
  $region68: #{cbow_forward.2} parent=0 // pred_region
    %275 = sst [smem:[#allocation8]] [#allocation41]
    %276 = sst [smem:[#allocation9]] [#allocation40]
  $region69: #{cbow_forward.2} parent=0 // pred_fallthru
    _
  %278 = shalt.err (0)
  %s280 = sshll.u32 %s271, 4
  %s281 = int_to_ptr.hbm [resolvable:$true] %s280
  %s282 = sshll.u32 %s272, 4
  %s283 = int_to_ptr.vmem [resolvable:$true] %s282
  %285 = dma.hbm_to_vmem [thread:$0]  %s281, 16, %s283, [#allocation3]
  %s286 = sld [smem:[#allocation5 + $0x82]]
  %s287 = scalar_lea.hbm %s1, %s286
  %s288 = scalar_lea.vmem [#allocation2], 17
  // Predicated region
  $region70: #{cbow_forward.2} parent=0 // pred_check
    _
  $region71: #{cbow_forward.2} parent=0 // pred_check_branch
    %290 = sbr.rel target = $region73
  $region72: #{cbow_forward.2} parent=0 // pred_region
    %291 = sst [smem:[#allocation8]] [#allocation43]
    %292 = sst [smem:[#allocation9]] [#allocation42]
  $region73: #{cbow_forward.2} parent=0 // pred_fallthru
    _
  %294 = shalt.err (0)
  %s296 = sshll.u32 %s287, 4
  %s297 = int_to_ptr.hbm [resolvable:$true] %s296
  %s298 = sshll.u32 %s288, 4
  %s299 = int_to_ptr.vmem [resolvable:$true] %s298
  %301 = dma.hbm_to_vmem [thread:$0]  %s297, 16, %s299, [#allocation3]
  %s302 = sld [smem:[#allocation5 + $0x102]]
  %s303 = scalar_lea.hbm %s1, %s302
  %s304 = scalar_lea.vmem [#allocation2], 18
  // Predicated region
  $region74: #{cbow_forward.2} parent=0 // pred_check
    _
  $region75: #{cbow_forward.2} parent=0 // pred_check_branch
    %306 = sbr.rel target = $region77
  $region76: #{cbow_forward.2} parent=0 // pred_region
    %307 = sst [smem:[#allocation8]] [#allocation45]
    %308 = sst [smem:[#allocation9]] [#allocation44]
  $region77: #{cbow_forward.2} parent=0 // pred_fallthru
    _
  %310 = shalt.err (0)
  %s312 = sshll.u32 %s303, 4
  %s313 = int_to_ptr.hbm [resolvable:$true] %s312
  %s314 = sshll.u32 %s304, 4
  %s315 = int_to_ptr.vmem [resolvable:$true] %s314
  %317 = dma.hbm_to_vmem [thread:$0]  %s313, 16, %s315, [#allocation3]
  %s318 = sld [smem:[#allocation5 + $0x182]]
  %s319 = scalar_lea.hbm %s1, %s318
  %s320 = scalar_lea.vmem [#allocation2], 19
  // Predicated region
  $region78: #{cbow_forward.2} parent=0 // pred_check
    _
  $region79: #{cbow_forward.2} parent=0 // pred_check_branch
    %322 = sbr.rel target = $region81
  $region80: #{cbow_forward.2} parent=0 // pred_region
    %323 = sst [smem:[#allocation8]] [#allocation47]
    %324 = sst [smem:[#allocation9]] [#allocation46]
  $region81: #{cbow_forward.2} parent=0 // pred_fallthru
    _
  %326 = shalt.err (0)
  %s328 = sshll.u32 %s319, 4
  %s329 = int_to_ptr.hbm [resolvable:$true] %s328
  %s330 = sshll.u32 %s320, 4
  %s331 = int_to_ptr.vmem [resolvable:$true] %s330
  %333 = dma.hbm_to_vmem [thread:$0]  %s329, 16, %s331, [#allocation3]
  %s334 = sld [smem:[#allocation5 + $0x202]]
  %s335 = scalar_lea.hbm %s1, %s334
  %s336 = scalar_lea.vmem [#allocation2], 20
  // Predicated region
  $region82: #{cbow_forward.2} parent=0 // pred_check
    _
  $region83: #{cbow_forward.2} parent=0 // pred_check_branch
    %338 = sbr.rel target = $region85
  $region84: #{cbow_forward.2} parent=0 // pred_region
    %339 = sst [smem:[#allocation8]] [#allocation49]
    %340 = sst [smem:[#allocation9]] [#allocation48]
  $region85: #{cbow_forward.2} parent=0 // pred_fallthru
    _
  %342 = shalt.err (0)
  %s344 = sshll.u32 %s335, 4
  %s345 = int_to_ptr.hbm [resolvable:$true] %s344
  %s346 = sshll.u32 %s336, 4
  %s347 = int_to_ptr.vmem [resolvable:$true] %s346
  %349 = dma.hbm_to_vmem [thread:$0]  %s345, 16, %s347, [#allocation3]
  %s350 = sld [smem:[#allocation5 + $0x282]]
  %s351 = scalar_lea.hbm %s1, %s350
  %s352 = scalar_lea.vmem [#allocation2], 21
  // Predicated region
  $region86: #{cbow_forward.2} parent=0 // pred_check
    _
  $region87: #{cbow_forward.2} parent=0 // pred_check_branch
    %354 = sbr.rel target = $region89
  $region88: #{cbow_forward.2} parent=0 // pred_region
    %355 = sst [smem:[#allocation8]] [#allocation51]
    %356 = sst [smem:[#allocation9]] [#allocation50]
  $region89: #{cbow_forward.2} parent=0 // pred_fallthru
    _
  %358 = shalt.err (0)
  %s360 = sshll.u32 %s351, 4
  %s361 = int_to_ptr.hbm [resolvable:$true] %s360
  %s362 = sshll.u32 %s352, 4
  %s363 = int_to_ptr.vmem [resolvable:$true] %s362
  %365 = dma.hbm_to_vmem [thread:$0]  %s361, 16, %s363, [#allocation3]
  %s366 = sld [smem:[#allocation5 + $0x302]]
  %s367 = scalar_lea.hbm %s1, %s366
  %s368 = scalar_lea.vmem [#allocation2], 22
  // Predicated region
  $region90: #{cbow_forward.2} parent=0 // pred_check
    _
  $region91: #{cbow_forward.2} parent=0 // pred_check_branch
    %370 = sbr.rel target = $region93
  $region92: #{cbow_forward.2} parent=0 // pred_region
    %371 = sst [smem:[#allocation8]] [#allocation53]
    %372 = sst [smem:[#allocation9]] [#allocation52]
  $region93: #{cbow_forward.2} parent=0 // pred_fallthru
    _
  %374 = shalt.err (0)
  %s376 = sshll.u32 %s367, 4
  %s377 = int_to_ptr.hbm [resolvable:$true] %s376
  %s378 = sshll.u32 %s368, 4
  %s379 = int_to_ptr.vmem [resolvable:$true] %s378
  %381 = dma.hbm_to_vmem [thread:$0]  %s377, 16, %s379, [#allocation3]
  %s382 = sld [smem:[#allocation5 + $0x382]]
  %s383 = scalar_lea.hbm %s1, %s382
  %s384 = scalar_lea.vmem [#allocation2], 23
  // Predicated region
  $region94: #{cbow_forward.2} parent=0 // pred_check
    _
  $region95: #{cbow_forward.2} parent=0 // pred_check_branch
    %386 = sbr.rel target = $region97
  $region96: #{cbow_forward.2} parent=0 // pred_region
    %387 = sst [smem:[#allocation8]] [#allocation55]
    %388 = sst [smem:[#allocation9]] [#allocation54]
  $region97: #{cbow_forward.2} parent=0 // pred_fallthru
    _
  %390 = shalt.err (0)
  %s392 = sshll.u32 %s383, 4
  %s393 = int_to_ptr.hbm [resolvable:$true] %s392
  %s394 = sshll.u32 %s384, 4
  %s395 = int_to_ptr.vmem [resolvable:$true] %s394
  %397 = dma.hbm_to_vmem [thread:$0]  %s393, 16, %s395, [#allocation3]
  %s398 = sld [smem:[#allocation5 + $0x3]]
  %s399 = scalar_lea.hbm %s1, %s398
  %s400 = scalar_lea.vmem [#allocation2], 24
  // Predicated region
  $region98: #{cbow_forward.2} parent=0 // pred_check
    _
  $region99: #{cbow_forward.2} parent=0 // pred_check_branch
    %402 = sbr.rel target = $region101
  $region100: #{cbow_forward.2} parent=0 // pred_region
    %403 = sst [smem:[#allocation8]] [#allocation57]
    %404 = sst [smem:[#allocation9]] [#allocation56]
  $region101: #{cbow_forward.2} parent=0 // pred_fallthru
    _
  %406 = shalt.err (0)
  %s408 = sshll.u32 %s399, 4
  %s409 = int_to_ptr.hbm [resolvable:$true] %s408
  %s410 = sshll.u32 %s400, 4
  %s411 = int_to_ptr.vmem [resolvable:$true] %s410
  %413 = dma.hbm_to_vmem [thread:$0]  %s409, 16, %s411, [#allocation3]
  %s414 = sld [smem:[#allocation5 + $0x83]]
  %s415 = scalar_lea.hbm %s1, %s414
  %s416 = scalar_lea.vmem [#allocation2], 25
  // Predicated region
  $region102: #{cbow_forward.2} parent=0 // pred_check
    _
  $region103: #{cbow_forward.2} parent=0 // pred_check_branch
    %418 = sbr.rel target = $region105
  $region104: #{cbow_forward.2} parent=0 // pred_region
    %419 = sst [smem:[#allocation8]] [#allocation59]
    %420 = sst [smem:[#allocation9]] [#allocation58]
  $region105: #{cbow_forward.2} parent=0 // pred_fallthru
    _
  %422 = shalt.err (0)
  %s424 = sshll.u32 %s415, 4
  %s425 = int_to_ptr.hbm [resolvable:$true] %s424
  %s426 = sshll.u32 %s416, 4
  %s427 = int_to_ptr.vmem [resolvable:$true] %s426
  %429 = dma.hbm_to_vmem [thread:$0]  %s425, 16, %s427, [#allocation3]
  %s430 = sld [smem:[#allocation5 + $0x103]]
  %s431 = scalar_lea.hbm %s1, %s430
  %s432 = scalar_lea.vmem [#allocation2], 26
  // Predicated region
  $region106: #{cbow_forward.2} parent=0 // pred_check
    _
  $region107: #{cbow_forward.2} parent=0 // pred_check_branch
    %434 = sbr.rel target = $region109
  $region108: #{cbow_forward.2} parent=0 // pred_region
    %435 = sst [smem:[#allocation8]] [#allocation61]
    %436 = sst [smem:[#allocation9]] [#allocation60]
  $region109: #{cbow_forward.2} parent=0 // pred_fallthru
    _
  %438 = shalt.err (0)
  %s440 = sshll.u32 %s431, 4
  %s441 = int_to_ptr.hbm [resolvable:$true] %s440
  %s442 = sshll.u32 %s432, 4
  %s443 = int_to_ptr.vmem [resolvable:$true] %s442
  %445 = dma.hbm_to_vmem [thread:$0]  %s441, 16, %s443, [#allocation3]
  %s446 = sld [smem:[#allocation5 + $0x183]]
  %s447 = scalar_lea.hbm %s1, %s446
  %s448 = scalar_lea.vmem [#allocation2], 27
  // Predicated region
  $region110: #{cbow_forward.2} parent=0 // pred_check
    _
  $region111: #{cbow_forward.2} parent=0 // pred_check_branch
    %450 = sbr.rel target = $region113
  $region112: #{cbow_forward.2} parent=0 // pred_region
    %451 = sst [smem:[#allocation8]] [#allocation63]
    %452 = sst [smem:[#allocation9]] [#allocation62]
  $region113: #{cbow_forward.2} parent=0 // pred_fallthru
    _
  %454 = shalt.err (0)
  %s456 = sshll.u32 %s447, 4
  %s457 = int_to_ptr.hbm [resolvable:$true] %s456
  %s458 = sshll.u32 %s448, 4
  %s459 = int_to_ptr.vmem [resolvable:$true] %s458
  %461 = dma.hbm_to_vmem [thread:$0]  %s457, 16, %s459, [#allocation3]
  %s462 = sld [smem:[#allocation5 + $0x203]]
  %s463 = scalar_lea.hbm %s1, %s462
  %s464 = scalar_lea.vmem [#allocation2], 28
  // Predicated region
  $region114: #{cbow_forward.2} parent=0 // pred_check
    _
  $region115: #{cbow_forward.2} parent=0 // pred_check_branch
    %466 = sbr.rel target = $region117
  $region116: #{cbow_forward.2} parent=0 // pred_region
    %467 = sst [smem:[#allocation8]] [#allocation65]
    %468 = sst [smem:[#allocation9]] [#allocation64]
  $region117: #{cbow_forward.2} parent=0 // pred_fallthru
    _
  %470 = shalt.err (0)
  %s472 = sshll.u32 %s463, 4
  %s473 = int_to_ptr.hbm [resolvable:$true] %s472
  %s474 = sshll.u32 %s464, 4
  %s475 = int_to_ptr.vmem [resolvable:$true] %s474
  %477 = dma.hbm_to_vmem [thread:$0]  %s473, 16, %s475, [#allocation3]
  %s478 = sld [smem:[#allocation5 + $0x283]]
  %s479 = scalar_lea.hbm %s1, %s478
  %s480 = scalar_lea.vmem [#allocation2], 29
  // Predicated region
  $region118: #{cbow_forward.2} parent=0 // pred_check
    _
  $region119: #{cbow_forward.2} parent=0 // pred_check_branch
    %482 = sbr.rel target = $region121
  $region120: #{cbow_forward.2} parent=0 // pred_region
    %483 = sst [smem:[#allocation8]] [#allocation67]
    %484 = sst [smem:[#allocation9]] [#allocation66]
  $region121: #{cbow_forward.2} parent=0 // pred_fallthru
    _
  %486 = shalt.err (0)
  %s488 = sshll.u32 %s479, 4
  %s489 = int_to_ptr.hbm [resolvable:$true] %s488
  %s490 = sshll.u32 %s480, 4
  %s491 = int_to_ptr.vmem [resolvable:$true] %s490
  %493 = dma.hbm_to_vmem [thread:$0]  %s489, 16, %s491, [#allocation3]
  %s494 = sld [smem:[#allocation5 + $0x303]]
  %s495 = scalar_lea.hbm %s1, %s494
  %s496 = scalar_lea.vmem [#allocation2], 30
  // Predicated region
  $region122: #{cbow_forward.2} parent=0 // pred_check
    _
  $region123: #{cbow_forward.2} parent=0 // pred_check_branch
    %498 = sbr.rel target = $region125
  $region124: #{cbow_forward.2} parent=0 // pred_region
    %499 = sst [smem:[#allocation8]] [#allocation69]
    %500 = sst [smem:[#allocation9]] [#allocation68]
  $region125: #{cbow_forward.2} parent=0 // pred_fallthru
    _
  %502 = shalt.err (0)
  %s504 = sshll.u32 %s495, 4
  %s505 = int_to_ptr.hbm [resolvable:$true] %s504
  %s506 = sshll.u32 %s496, 4
  %s507 = int_to_ptr.vmem [resolvable:$true] %s506
  %509 = dma.hbm_to_vmem [thread:$0]  %s505, 16, %s507, [#allocation3]
  %s510 = sld [smem:[#allocation5 + $0x383]]
  %s511 = scalar_lea.hbm %s1, %s510
  %s512 = scalar_lea.vmem [#allocation2], 31
  // Predicated region
  $region126: #{cbow_forward.2} parent=0 // pred_check
    _
  $region127: #{cbow_forward.2} parent=0 // pred_check_branch
    %514 = sbr.rel target = $region129
  $region128: #{cbow_forward.2} parent=0 // pred_region
    %515 = sst [smem:[#allocation8]] [#allocation71]
    %516 = sst [smem:[#allocation9]] [#allocation70]
  $region129: #{cbow_forward.2} parent=0 // pred_fallthru
    _
  %518 = shalt.err (0)
  %s520 = sshll.u32 %s511, 4
  %s521 = int_to_ptr.hbm [resolvable:$true] %s520
  %s522 = sshll.u32 %s512, 4
  %s523 = int_to_ptr.vmem [resolvable:$true] %s522
  %525 = dma.hbm_to_vmem [thread:$0]  %s521, 16, %s523, [#allocation3]
  %s526 = smul.u32 1, 1
  %s527 = sshll.u32 %s526, 4
  %528 = dma.done [#allocation3], %s527
  %s529 = sshll.u32 %s526, 4
  %530 = dma.done [#allocation3], %s529
  %s531 = sshll.u32 %s526, 4
  %532 = dma.done [#allocation3], %s531
  %s533 = sshll.u32 %s526, 4
  %534 = dma.done [#allocation3], %s533
  %s535 = sshll.u32 %s526, 4
  %536 = dma.done [#allocation3], %s535
  %s537 = sshll.u32 %s526, 4
  %538 = dma.done [#allocation3], %s537
  %s539 = sshll.u32 %s526, 4
  %540 = dma.done [#allocation3], %s539
  %s541 = sshll.u32 %s526, 4
  %542 = dma.done [#allocation3], %s541
  %s543 = sshll.u32 %s526, 4
  %544 = dma.done [#allocation3], %s543
  %s545 = sshll.u32 %s526, 4
  %546 = dma.done [#allocation3], %s545
  %s547 = sshll.u32 %s526, 4
  %548 = dma.done [#allocation3], %s547
  %s549 = sshll.u32 %s526, 4
  %550 = dma.done [#allocation3], %s549
  %s551 = sshll.u32 %s526, 4
  %552 = dma.done [#allocation3], %s551
  %s553 = sshll.u32 %s526, 4
  %554 = dma.done [#allocation3], %s553
  %s555 = sshll.u32 %s526, 4
  %556 = dma.done [#allocation3], %s555
  %s557 = sshll.u32 %s526, 4
  %558 = dma.done [#allocation3], %s557
  %s559 = sshll.u32 %s526, 4
  %560 = dma.done [#allocation3], %s559
  %s561 = sshll.u32 %s526, 4
  %562 = dma.done [#allocation3], %s561
  %s563 = sshll.u32 %s526, 4
  %564 = dma.done [#allocation3], %s563
  %s565 = sshll.u32 %s526, 4
  %566 = dma.done [#allocation3], %s565
  %s567 = sshll.u32 %s526, 4
  %568 = dma.done [#allocation3], %s567
  %s569 = sshll.u32 %s526, 4
  %570 = dma.done [#allocation3], %s569
  %s571 = sshll.u32 %s526, 4
  %572 = dma.done [#allocation3], %s571
  %s573 = sshll.u32 %s526, 4
  %574 = dma.done [#allocation3], %s573
  %s575 = sshll.u32 %s526, 4
  %576 = dma.done [#allocation3], %s575
  %s577 = sshll.u32 %s526, 4
  %578 = dma.done [#allocation3], %s577
  %s579 = sshll.u32 %s526, 4
  %580 = dma.done [#allocation3], %s579
  %s581 = sshll.u32 %s526, 4
  %582 = dma.done [#allocation3], %s581
  %s583 = sshll.u32 %s526, 4
  %584 = dma.done [#allocation3], %s583
  %s585 = sshll.u32 %s526, 4
  %586 = dma.done [#allocation3], %s585
  %s587 = sshll.u32 %s526, 4
  %588 = dma.done [#allocation3], %s587
  %s589 = sshll.u32 %s526, 4
  %590 = dma.done [#allocation3], %s589
  %v591 = vld [vmem:[#allocation2] sm:$0xff]
  %v592 = vld [vmem:[#allocation2 + $0x8] sm:$0xff]
  %v593 = vadd.f32 %v591, %v592
  %v594 = vld [vmem:[#allocation2 + $0x10] sm:$0xff]
  %v595 = vadd.f32 %v593, %v594
  %v596 = vld [vmem:[#allocation2 + $0x18] sm:$0xff]
  %v597 = vadd.f32 %v595, %v596
  %v598 = vmul.f32 %v597, 0.25
  %v599 = vpack.c.bf16 %v598, %v598
  %600 = vst [vmem:[%s2] sm:$0xf] %v599
  // Predicated region
  $region130: #{cbow_forward.2} parent=0 // pred_check
    _
  $region131: #{cbow_forward.2} parent=0 // pred_check_branch
    %602 = sbr.rel (0) target = $region133
  $region132: #{cbow_forward.2} parent=0 // pred_region
    _
  $region133: #{cbow_forward.2} parent=0 // pred_fallthru
    _
  // Predicated region
  $region134: #{cbow_forward.2} parent=0 // pred_check
    _
  $region135: #{cbow_forward.2} parent=0 // pred_check_branch
    %604 = sbr.rel (0) target = $region137
  $region136: #{cbow_forward.2} parent=0 // pred_region
    _
  $region137: #{cbow_forward.2} parent=0 // pred_fallthru
    _
  %605 = vsyncmov [#allocation3]
  %s606 = vpop.sfrf %605
  %p607 = scmp.eq.s32.totalorder %s606, 0
  %p608 = pneg %p607
  %610 = shalt.err (%p608)

// kernel: cbow_forward.3
$region0: #{cbow_forward.3}
  #allocation0 [shape = 'u32[]', space=smem, size = 0x4, offset = 0x4, fixed_abs, tag = 'smem constant byte address 0x4 - core index']
  #allocation1 [shape = 'u32[72,128]{1,0:T(1,128)}', space=vmem, size = 0x9000, scoped, tag = 'internal scratch']
  %s0 = inlined_call_operand.vmem [shape: bf16[8,128], index: 0, kind: input, shape index: {}]
  %s1 = inlined_call_operand.hbm [shape: bf16[128,16384], index: 1, kind: input, shape index: {}]
  %s2 = inlined_call_operand.hbm [shape: f32[1,16384], index: 2, kind: input, shape index: {}]
  %s3 = inlined_call_operand.hbm [shape: f32[8,16384], index: 3, kind: output, shape index: {}]
  %s4 = sld [smem:[#allocation0]]
  $region53: #{cbow_forward.3} parent=0
    _
  %s6 = ssub.s32 1, %s4
  %s7 = scalar_select 0, %s6, %s4
  $region1: #{cbow_forward.3} parent=0
    #allocation2 [shape = 'u8[4194304]{0}', space=vmem, size = 0x400000, scoped, tag = 'input window, operand 1']
    #allocation3 [shape = 's32[2]{0}', space=sflag, size = 0x8, scoped, tag = 'scoped memory for cbow_forward.3']
    #allocation4 [shape = 's32[2]{0}', space=sflag, size = 0x8, scoped, tag = 'scoped memory for cbow_forward.3']
    #allocation5 [shape = 'u8[65536]{0}', space=vmem, size = 0x10000, scoped, tag = 'input window, operand 2']
    #allocation6 [shape = 's32[2]{0}', space=sflag, size = 0x8, scoped, tag = 'scoped memory for cbow_forward.3']
    #allocation7 [shape = 'u8[524288]{0}', space=vmem, size = 0x80000, scoped, tag = 'output window, operand 0']
    %8 = vsyncpa [#allocation3], 0
    %s9 = scalar_lea.sflag [#allocation3], 1
    %10 = vsyncpa %s9, 0
    %11 = vsyncpa [#allocation6], 0
    %s12 = scalar_lea.sflag [#allocation6], 1
    %13 = vsyncpa %s12, 0
    %14 = vsyncpa [#allocation4], 0
    %s15 = scalar_lea.sflag [#allocation4], 1
    %16 = vsyncpa %s15, 0
    loop: start=0, step=1, limit=4
    $region2: #{cbow_forward.3} parent=1 // loop_pre_header
      _
    $region3: #{cbow_forward.3} parent=1 // loop_header
      %s18 = sphi 0, %s22
      %p19 = scmp.ge.s32.totalorder %s18, 4
      %s26 = sphi 0, %s26
      %s28 = sphi 0, %s26
      %s29 = sphi 0, %s28
      %s43 = sphi 0, %s29
      %s49 = sphi 0, %s51
      %s52 = sphi 0, %s49
      %s53 = sphi 0, %s52
      %s69 = sphi 0, %s53
      %s75 = sphi 0, %s77
      %s78 = sphi 0, %s75
      %s79 = sphi 0, %s78
      %s95 = sphi 0, %s79
      %s101 = sphi 0, %s103
      %s104 = sphi 0, %s101
      %s105 = sphi 0, %s104
      %s121 = sphi 0, %s105
    $region4: #{cbow_forward.3} parent=1 // loop_header_branch
      %21 = sbr.rel (%p19) target = $region8
    $region5: #{cbow_forward.3} parent=1 // loop_body
      %s23 = ssub.s32 %s18, 1
      %s24 = ssub.s32 %s18, 2
      %s25 = sadd.s32 %s18, 1
      %s27 = sadd.s32 %s26, 1
      %p30 = scmp.eq.s32.totalorder %s18, 1
      %p31 = scmp.ne.s32.totalorder %s26, %s28
      %p32 = scmp.eq.s32.totalorder %s18, 0
      %p33 = por %p31, %p32
      %p34 = scmp.ne.s32.totalorder %s26, %s28
      %p35 = scmp.eq.s32.totalorder %s23, 1
      %p36 = por %p34, %p35
      %p37 = scmp.ne.s32.totalorder %s28, %s29
      %p38 = scmp.eq.s32.totalorder %s23, 0
      %p39 = por %p37, %p38
      %p40 = scmp.ne.s32.totalorder %s28, %s29
      %p41 = scmp.eq.s32.totalorder %s24, 1
      %p42 = por %p40, %p41
      %p44 = scmp.ne.s32.totalorder %s29, %s43
      %p45 = scmp.eq.s32.totalorder %s24, 0
      %p46 = por %p44, %p45
      %s47 = ssub.s32 %s18, %s25
      %p48 = scmp.eq.s32.totalorder %s47, 0
      %s50 = sadd.s32 %s49, 1
      %s51 = scalar_select %p48, %s49, %s50
      %p54 = pneg %p48
      %p55 = scmp.eq.s32.totalorder %s18, 1
      %p56 = por %p54, %p55
      %p57 = scmp.ne.s32.totalorder %s49, %s52
      %p58 = scmp.eq.s32.totalorder %s18, 0
      %p59 = por %p57, %p58
      %p60 = scmp.ne.s32.totalorder %s49, %s52
      %p61 = scmp.eq.s32.totalorder %s23, 1
      %p62 = por %p60, %p61
      %p63 = scmp.ne.s32.totalorder %s52, %s53
      %p64 = scmp.eq.s32.totalorder %s23, 0
      %p65 = por %p63, %p64
      %p66 = scmp.ne.s32.totalorder %s52, %s53
      %p67 = scmp.eq.s32.totalorder %s24, 1
      %p68 = por %p66, %p67
      %p70 = scmp.ne.s32.totalorder %s53, %s69
      %p71 = scmp.eq.s32.totalorder %s24, 0
      %p72 = por %p70, %p71
      %s73 = ssub.s32 %s18, %s25
      %p74 = scmp.eq.s32.totalorder %s73, 0
      %s76 = sadd.s32 %s75, 1
      %s77 = scalar_select %p74, %s75, %s76
      %p80 = pneg %p74
      %p81 = scmp.eq.s32.totalorder %s18, 1
      %p82 = por %p80, %p81
      %p83 = scmp.ne.s32.totalorder %s75, %s78
      %p84 = scmp.eq.s32.totalorder %s18, 0
      %p85 = por %p83, %p84
      %p86 = scmp.ne.s32.totalorder %s75, %s78
      %p87 = scmp.eq.s32.totalorder %s23, 1
      %p88 = por %p86, %p87
      %p89 = scmp.ne.s32.totalorder %s78, %s79
      %p90 = scmp.eq.s32.totalorder %s23, 0
      %p91 = por %p89, %p90
      %p92 = scmp.ne.s32.totalorder %s78, %s79
      %p93 = scmp.eq.s32.totalorder %s24, 1
      %p94 = por %p92, %p93
      %p96 = scmp.ne.s32.totalorder %s79, %s95
      %p97 = scmp.eq.s32.totalorder %s24, 0
      %p98 = por %p96, %p97
      %s99 = ssub.s32 %s18, %s25
      %p100 = scmp.eq.s32.totalorder %s99, 0
      %s102 = sadd.s32 %s101, 1
      %s103 = scalar_select %p100, %s101, %s102
      %p106 = pneg %p100
      %p107 = scmp.eq.s32.totalorder %s18, 1
      %p108 = por %p106, %p107
      %p109 = scmp.ne.s32.totalorder %s101, %s104
      %p110 = scmp.eq.s32.totalorder %s18, 0
      %p111 = por %p109, %p110
      %p112 = scmp.ne.s32.totalorder %s101, %s104
      %p113 = scmp.eq.s32.totalorder %s23, 1
      %p114 = por %p112, %p113
      %p115 = scmp.ne.s32.totalorder %s104, %s105
      %p116 = scmp.eq.s32.totalorder %s23, 0
      %p117 = por %p115, %p116
      %p118 = scmp.ne.s32.totalorder %s104, %s105
      %p119 = scmp.eq.s32.totalorder %s24, 1
      %p120 = por %p118, %p119
      %p122 = scmp.ne.s32.totalorder %s105, %s121
      %p123 = scmp.eq.s32.totalorder %s24, 0
      %p124 = por %p122, %p123
      %p125 = scmp.le.s32.totalorder 1, %s18
      %p126 = scmp.lt.s32.totalorder %s18, 3
      %p127 = pnand %p125, %p126
      %p128 = pneg %p127
      // Predicated region
      $region9: #{cbow_forward.3} parent=5 // pred_check
        _
      $region10: #{cbow_forward.3} parent=5 // pred_check_branch
        %130 = sbr.rel (%p127) target = $region12
      $region11: #{cbow_forward.3} parent=5 // pred_region
        %s131 = ssub.s32 %s18, 1
        // Predicated region
        $region13: #{cbow_forward.3} parent=11 // pred_check
          %p132 = pneg %p39
        $region14: #{cbow_forward.3} parent=11 // pred_check_branch
          %134 = sbr.rel (%p132) target = $region16
        $region15: #{cbow_forward.3} parent=11 // pred_region
          _
        $region16: #{cbow_forward.3} parent=11 // pred_fallthru
          _
      $region12: #{cbow_forward.3} parent=5 // pred_fallthru
        _
      %p135 = scmp.lt.s32.totalorder %s18, 2
      // Predicated region
      $region17: #{cbow_forward.3} parent=5 // pred_check
        %p136 = pneg %p135
      $region18: #{cbow_forward.3} parent=5 // pred_check_branch
        %138 = sbr.rel (%p136) target = $region20
      $region19: #{cbow_forward.3} parent=5 // pred_region
        // Predicated region
        $region21: #{cbow_forward.3} parent=19 // pred_check
          %p139 = pneg %p59
        $region22: #{cbow_forward.3} parent=19 // pred_check_branch
          %141 = sbr.rel (%p139) target = $region24
        $region23: #{cbow_forward.3} parent=19 // pred_region
          %s142 = sand.u32 %s49, 1
          %s143 = scalar_lea.sflag [#allocation3], %s142
          %s144 = sand.u32 %s49, 1
          %s145 = smul.addr %s144, 4096
          %s146 = scalar_lea.vmem [#allocation2], %s145
          %s147 = smul.u32 64, %s18
          %149 = vsyncadd %s143, 0
          %s150 = smul.addr %s147, 4
          %s151 = scalar_lea.hbm %s1, %s150
          %s152 = sshll.u32 %s151, 4
          %s153 = int_to_ptr.hbm [resolvable:$true] %s152
          %s154 = sshll.u32 %s146, 4
          %s155 = int_to_ptr.vmem [resolvable:$true] %s154
          %160 = dma.hbm_to_vmem [thread:$0]  %s153, 65536, %s155, %s143, 8192, 4096, 256
        $region24: #{cbow_forward.3} parent=19 // pred_fallthru
          _
        // Predicated region
        $region25: #{cbow_forward.3} parent=19 // pred_check
          %p161 = pneg %p85
        $region26: #{cbow_forward.3} parent=19 // pred_check_branch
          %163 = sbr.rel (%p161) target = $region28
        $region27: #{cbow_forward.3} parent=19 // pred_region
          %s164 = sand.u32 %s75, 1
          %s165 = scalar_lea.sflag [#allocation6], %s164
          %s166 = sand.u32 %s75, 1
          %s167 = smul.addr %s166, 64
          %s168 = scalar_lea.vmem [#allocation5], %s167
          %s169 = smul.u32 64, %s18
          %171 = vsyncadd %s165, 0
          %s172 = scalar_lea.hbm %s2, %s169
          %s174 = sshll.u32 %s172, 4
          %s175 = int_to_ptr.hbm [resolvable:$true] %s174
          %s176 = sshll.u32 %s168, 4
          %s177 = int_to_ptr.vmem [resolvable:$true] %s176
          %179 = dma.hbm_to_vmem [thread:$0]  %s175, 1024, %s177, %s165
        $region28: #{cbow_forward.3} parent=19 // pred_fallthru
          _
      $region20: #{cbow_forward.3} parent=5 // pred_fallthru
        _
      %p180 = scmp.le.s32.totalorder 1, %s18
      %p181 = scmp.lt.s32.totalorder %s18, 3
      %p182 = pnand %p180, %p181
      %p183 = pneg %p182
      // Predicated region
      $region29: #{cbow_forward.3} parent=5 // pred_check
        _
      $region30: #{cbow_forward.3} parent=5 // pred_check_branch
        %185 = sbr.rel (%p182) target = $region32
      $region31: #{cbow_forward.3} parent=5 // pred_region
        %s186 = ssub.s32 %s18, 1
        %s187 = sand.u32 %s52, 1
        %s188 = scalar_lea.sflag [#allocation3], %s187
        %s189 = sand.u32 %s52, 1
        %s190 = smul.addr %s189, 4096
        %s191 = scalar_lea.vmem [#allocation2], %s190
        // Predicated region
        $region33: #{cbow_forward.3} parent=31 // pred_check
          %p192 = pneg %p65
        $region34: #{cbow_forward.3} parent=31 // pred_check_branch
          %194 = sbr.rel (%p192) target = $region36
        $region35: #{cbow_forward.3} parent=31 // pred_region
          %196 = dma.done %s188, 65536
        $region36: #{cbow_forward.3} parent=31 // pred_fallthru
          _
        %s197 = sand.u32 %s78, 1
        %s198 = scalar_lea.sflag [#allocation6], %s197
        %s199 = sand.u32 %s78, 1
        %s200 = smul.addr %s199, 64
        %s201 = scalar_lea.vmem [#allocation5], %s200
        // Predicated region
        $region37: #{cbow_forward.3} parent=31 // pred_check
          %p202 = pneg %p91
        $region38: #{cbow_forward.3} parent=31 // pred_check_branch
          %204 = sbr.rel (%p202) target = $region40
        $region39: #{cbow_forward.3} parent=31 // pred_region
          %206 = dma.done %s198, 1024
        $region40: #{cbow_forward.3} parent=31 // pred_fallthru
          _
        %p207 = pneg %p39
        %p208 = pneg %p36
        %s209 = sand.u32 %s52, 1
        %s210 = scalar_lea.sflag [#allocation3], %s209
        %s211 = sand.u32 %s52, 1
        %s212 = smul.addr %s211, 4096
        %s213 = scalar_lea.vmem [#allocation2], %s212
        %p214 = pneg %p65
        %p215 = pneg %p62
        %s216 = sand.u32 %s78, 1
        %s217 = scalar_lea.sflag [#allocation6], %s216
        %s218 = sand.u32 %s78, 1
        %s219 = smul.addr %s218, 64
        %s220 = scalar_lea.vmem [#allocation5], %s219
        %p221 = pneg %p91
        %p222 = pneg %p88
        %p223 = pneg %p117
        %p224 = pneg %p114
        %s225 = sand.u32 %s104, 1
        %s226 = scalar_lea.sflag [#allocation4], %s225
        %s227 = sand.u32 %s104, 1
        %s228 = smul.addr %s227, 512
        %s229 = scalar_lea.vmem [#allocation7], %s228
        %s230 = smul.u32 64, %s23
        %s231 = smul.u32 64, %s23
        %s232 = smul.u32 64, %s23
        %v233 = vld [vmem:[%s0] sm:$0xf]
        %v234 = vld [vmem:[%s191] sm:$0xff]
        %v235 = vld [vmem:[%s191 + $0x8] sm:$0xff]
        %v236 = vld [vmem:[%s191 + $0x10] sm:$0xff]
        %v237 = vld [vmem:[%s191 + $0x18] sm:$0xff]
        %v238 = vld [vmem:[%s191 + $0x20] sm:$0xff]
        %v239 = vld [vmem:[%s191 + $0x28] sm:$0xff]
        %v240 = vld [vmem:[%s191 + $0x30] sm:$0xff]
        %v241 = vld [vmem:[%s191 + $0x38] sm:$0xff]
        %v242 = vld [vmem:[%s191 + $0x40] sm:$0xff]
        %v243 = vld [vmem:[%s191 + $0x48] sm:$0xff]
        %v244 = vld [vmem:[%s191 + $0x50] sm:$0xff]
        %v245 = vld [vmem:[%s191 + $0x58] sm:$0xff]
        %v246 = vld [vmem:[%s191 + $0x60] sm:$0xff]
        %v247 = vld [vmem:[%s191 + $0x68] sm:$0xff]
        %v248 = vld [vmem:[%s191 + $0x70] sm:$0xff]
        %v249 = vld [vmem:[%s191 + $0x78] sm:$0xff]
        %v250 = vld [vmem:[%s191 + $0x80] sm:$0xff]
        %v251 = vld [vmem:[%s191 + $0x88] sm:$0xff]
        %v252 = vld [vmem:[%s191 + $0x90] sm:$0xff]
        %v253 = vld [vmem:[%s191 + $0x98] sm:$0xff]
        %v254 = vld [vmem:[%s191 + $0xa0] sm:$0xff]
        %v255 = vld [vmem:[%s191 + $0xa8] sm:$0xff]
        %v256 = vld [vmem:[%s191 + $0xb0] sm:$0xff]
        %v257 = vld [vmem:[%s191 + $0xb8] sm:$0xff]
        %v258 = vld [vmem:[%s191 + $0xc0] sm:$0xff]
        %v259 = vld [vmem:[%s191 + $0xc8] sm:$0xff]
        %v260 = vld [vmem:[%s191 + $0xd0] sm:$0xff]
        %v261 = vld [vmem:[%s191 + $0xd8] sm:$0xff]
        %v262 = vld [vmem:[%s191 + $0xe0] sm:$0xff]
        %v263 = vld [vmem:[%s191 + $0xe8] sm:$0xff]
        %v264 = vld [vmem:[%s191 + $0xf0] sm:$0xff]
        %v265 = vld [vmem:[%s191 + $0xf8] sm:$0xff]
        %v266 = vld [vmem:[%s191 + $0x100] sm:$0xff]
        %v267 = vld [vmem:[%s191 + $0x108] sm:$0xff]
        %v268 = vld [vmem:[%s191 + $0x110] sm:$0xff]
        %v269 = vld [vmem:[%s191 + $0x118] sm:$0xff]
        %v270 = vld [vmem:[%s191 + $0x120] sm:$0xff]
        %v271 = vld [vmem:[%s191 + $0x128] sm:$0xff]
        %v272 = vld [vmem:[%s191 + $0x130] sm:$0xff]
        %v273 = vld [vmem:[%s191 + $0x138] sm:$0xff]
        %v274 = vld [vmem:[%s191 + $0x140] sm:$0xff]
        %v275 = vld [vmem:[%s191 + $0x148] sm:$0xff]
        %v276 = vld [vmem:[%s191 + $0x150] sm:$0xff]
        %v277 = vld [vmem:[%s191 + $0x158] sm:$0xff]
        %v278 = vld [vmem:[%s191 + $0x160] sm:$0xff]
        %v279 = vld [vmem:[%s191 + $0x168] sm:$0xff]
        %v280 = vld [vmem:[%s191 + $0x170] sm:$0xff]
        %v281 = vld [vmem:[%s191 + $0x178] sm:$0xff]
        %v282 = vld [vmem:[%s191 + $0x180] sm:$0xff]
        %v283 = vld [vmem:[%s191 + $0x188] sm:$0xff]
        %v284 = vld [vmem:[%s191 + $0x190] sm:$0xff]
        %v285 = vld [vmem:[%s191 + $0x198] sm:$0xff]
        %v286 = vld [vmem:[%s191 + $0x1a0] sm:$0xff]
        %v287 = vld [vmem:[%s191 + $0x1a8] sm:$0xff]
        %v288 = vld [vmem:[%s191 + $0x1b0] sm:$0xff]
        %v289 = vld [vmem:[%s191 + $0x1b8] sm:$0xff]
        %v290 = vld [vmem:[%s191 + $0x1c0] sm:$0xff]
        %v291 = vld [vmem:[%s191 + $0x1c8] sm:$0xff]
        %v292 = vld [vmem:[%s191 + $0x1d0] sm:$0xff]
        %v293 = vld [vmem:[%s191 + $0x1d8] sm:$0xff]
        %v294 = vld [vmem:[%s191 + $0x1e0] sm:$0xff]
        %v295 = vld [vmem:[%s191 + $0x1e8] sm:$0xff]
        %v296 = vld [vmem:[%s191 + $0x1f0] sm:$0xff]
        %v297 = vld [vmem:[%s191 + $0x1f8] sm:$0xff]
        %v298 = vld [vmem:[%s191 + $0x200] sm:$0xff]
        %v299 = vld [vmem:[%s191 + $0x208] sm:$0xff]
        %v300 = vld [vmem:[%s191 + $0x210] sm:$0xff]
        %v301 = vld [vmem:[%s191 + $0x218] sm:$0xff]
        %v302 = vld [vmem:[%s191 + $0x220] sm:$0xff]
        %v303 = vld [vmem:[%s191 + $0x228] sm:$0xff]
        %v304 = vld [vmem:[%s191 + $0x230] sm:$0xff]
        %v305 = vld [vmem:[%s191 + $0x238] sm:$0xff]
        %v306 = vld [vmem:[%s191 + $0x240] sm:$0xff]
        %v307 = vld [vmem:[%s191 + $0x248] sm:$0xff]
        %v308 = vld [vmem:[%s191 + $0x250] sm:$0xff]
        %v309 = vld [vmem:[%s191 + $0x258] sm:$0xff]
        %v310 = vld [vmem:[%s191 + $0x260] sm:$0xff]
        %v311 = vld [vmem:[%s191 + $0x268] sm:$0xff]
        %v312 = vld [vmem:[%s191 + $0x270] sm:$0xff]
        %v313 = vld [vmem:[%s191 + $0x278] sm:$0xff]
        %v314 = vld [vmem:[%s191 + $0x280] sm:$0xff]
        %v315 = vld [vmem:[%s191 + $0x288] sm:$0xff]
        %v316 = vld [vmem:[%s191 + $0x290] sm:$0xff]
        %v317 = vld [vmem:[%s191 + $0x298] sm:$0xff]
        %v318 = vld [vmem:[%s191 + $0x2a0] sm:$0xff]
        %v319 = vld [vmem:[%s191 + $0x2a8] sm:$0xff]
        %v320 = vld [vmem:[%s191 + $0x2b0] sm:$0xff]
        %v321 = vld [vmem:[%s191 + $0x2b8] sm:$0xff]
        %v322 = vld [vmem:[%s191 + $0x2c0] sm:$0xff]
        %v323 = vld [vmem:[%s191 + $0x2c8] sm:$0xff]
        %v324 = vld [vmem:[%s191 + $0x2d0] sm:$0xff]
        %v325 = vld [vmem:[%s191 + $0x2d8] sm:$0xff]
        %v326 = vld [vmem:[%s191 + $0x2e0] sm:$0xff]
        %v327 = vld [vmem:[%s191 + $0x2e8] sm:$0xff]
        %v328 = vld [vmem:[%s191 + $0x2f0] sm:$0xff]
        %v329 = vld [vmem:[%s191 + $0x2f8] sm:$0xff]
        %v330 = vld [vmem:[%s191 + $0x300] sm:$0xff]
        %v331 = vld [vmem:[%s191 + $0x308] sm:$0xff]
        %v332 = vld [vmem:[%s191 + $0x310] sm:$0xff]
        %v333 = vld [vmem:[%s191 + $0x318] sm:$0xff]
        %v334 = vld [vmem:[%s191 + $0x320] sm:$0xff]
        %v335 = vld [vmem:[%s191 + $0x328] sm:$0xff]
        %v336 = vld [vmem:[%s191 + $0x330] sm:$0xff]
        %v337 = vld [vmem:[%s191 + $0x338] sm:$0xff]
        %v338 = vld [vmem:[%s191 + $0x340] sm:$0xff]
        %v339 = vld [vmem:[%s191 + $0x348] sm:$0xff]
        %v340 = vld [vmem:[%s191 + $0x350] sm:$0xff]
        %v341 = vld [vmem:[%s191 + $0x358] sm:$0xff]
        %v342 = vld [vmem:[%s191 + $0x360] sm:$0xff]
        %v343 = vld [vmem:[%s191 + $0x368] sm:$0xff]
        %v344 = vld [vmem:[%s191 + $0x370] sm:$0xff]
        %v345 = vld [vmem:[%s191 + $0x378] sm:$0xff]
        %v346 = vld [vmem:[%s191 + $0x380] sm:$0xff]
        %v347 = vld [vmem:[%s191 + $0x388] sm:$0xff]
        %v348 = vld [vmem:[%s191 + $0x390] sm:$0xff]
        %v349 = vld [vmem:[%s191 + $0x398] sm:$0xff]
        %v350 = vld [vmem:[%s191 + $0x3a0] sm:$0xff]
        %v351 = vld [vmem:[%s191 + $0x3a8] sm:$0xff]
        %v352 = vld [vmem:[%s191 + $0x3b0] sm:$0xff]
        %v353 = vld [vmem:[%s191 + $0x3b8] sm:$0xff]
        %v354 = vld [vmem:[%s191 + $0x3c0] sm:$0xff]
        %v355 = vld [vmem:[%s191 + $0x3c8] sm:$0xff]
        %v356 = vld [vmem:[%s191 + $0x3d0] sm:$0xff]
        %v357 = vld [vmem:[%s191 + $0x3d8] sm:$0xff]
        %v358 = vld [vmem:[%s191 + $0x3e0] sm:$0xff]
        %v359 = vld [vmem:[%s191 + $0x3e8] sm:$0xff]
        %v360 = vld [vmem:[%s191 + $0x3f0] sm:$0xff]
        %v361 = vld [vmem:[%s191 + $0x3f8] sm:$0xff]
        %v362 = vld [vmem:[%s191 + $0x400] sm:$0xff]
        %v363 = vld [vmem:[%s191 + $0x408] sm:$0xff]
        %v364 = vld [vmem:[%s191 + $0x410] sm:$0xff]
        %v365 = vld [vmem:[%s191 + $0x418] sm:$0xff]
        %v366 = vld [vmem:[%s191 + $0x420] sm:$0xff]
        %v367 = vld [vmem:[%s191 + $0x428] sm:$0xff]
        %v368 = vld [vmem:[%s191 + $0x430] sm:$0xff]
        %v369 = vld [vmem:[%s191 + $0x438] sm:$0xff]
        %v370 = vld [vmem:[%s191 + $0x440] sm:$0xff]
        %v371 = vld [vmem:[%s191 + $0x448] sm:$0xff]
        %v372 = vld [vmem:[%s191 + $0x450] sm:$0xff]
        %v373 = vld [vmem:[%s191 + $0x458] sm:$0xff]
        %v374 = vld [vmem:[%s191 + $0x460] sm:$0xff]
        %v375 = vld [vmem:[%s191 + $0x468] sm:$0xff]
        %v376 = vld [vmem:[%s191 + $0x470] sm:$0xff]
        %v377 = vld [vmem:[%s191 + $0x478] sm:$0xff]
        %v378 = vld [vmem:[%s191 + $0x480] sm:$0xff]
        %v379 = vld [vmem:[%s191 + $0x488] sm:$0xff]
        %v380 = vld [vmem:[%s191 + $0x490] sm:$0xff]
        %v381 = vld [vmem:[%s191 + $0x498] sm:$0xff]
        %v382 = vld [vmem:[%s191 + $0x4a0] sm:$0xff]
        %v383 = vld [vmem:[%s191 + $0x4a8] sm:$0xff]
        %v384 = vld [vmem:[%s191 + $0x4b0] sm:$0xff]
        %v385 = vld [vmem:[%s191 + $0x4b8] sm:$0xff]
        %v386 = vld [vmem:[%s191 + $0x4c0] sm:$0xff]
        %v387 = vld [vmem:[%s191 + $0x4c8] sm:$0xff]
        %v388 = vld [vmem:[%s191 + $0x4d0] sm:$0xff]
        %v389 = vld [vmem:[%s191 + $0x4d8] sm:$0xff]
        %v390 = vld [vmem:[%s191 + $0x4e0] sm:$0xff]
        %v391 = vld [vmem:[%s191 + $0x4e8] sm:$0xff]
        %v392 = vld [vmem:[%s191 + $0x4f0] sm:$0xff]
        %v393 = vld [vmem:[%s191 + $0x4f8] sm:$0xff]
        %v394 = vld [vmem:[%s191 + $0x500] sm:$0xff]
        %v395 = vld [vmem:[%s191 + $0x508] sm:$0xff]
        %v396 = vld [vmem:[%s191 + $0x510] sm:$0xff]
        %v397 = vld [vmem:[%s191 + $0x518] sm:$0xff]
        %v398 = vld [vmem:[%s191 + $0x520] sm:$0xff]
        %v399 = vld [vmem:[%s191 + $0x528] sm:$0xff]
        %v400 = vld [vmem:[%s191 + $0x530] sm:$0xff]
        %v401 = vld [vmem:[%s191 + $0x538] sm:$0xff]
        %v402 = vld [vmem:[%s191 + $0x540] sm:$0xff]
        %v403 = vld [vmem:[%s191 + $0x548] sm:$0xff]
        %v404 = vld [vmem:[%s191 + $0x550] sm:$0xff]
        %v405 = vld [vmem:[%s191 + $0x558] sm:$0xff]
        %v406 = vld [vmem:[%s191 + $0x560] sm:$0xff]
        %v407 = vld [vmem:[%s191 + $0x568] sm:$0xff]
        %v408 = vld [vmem:[%s191 + $0x570] sm:$0xff]
        %v409 = vld [vmem:[%s191 + $0x578] sm:$0xff]
        %v410 = vld [vmem:[%s191 + $0x580] sm:$0xff]
        %v411 = vld [vmem:[%s191 + $0x588] sm:$0xff]
        %v412 = vld [vmem:[%s191 + $0x590] sm:$0xff]
        %v413 = vld [vmem:[%s191 + $0x598] sm:$0xff]
        %v414 = vld [vmem:[%s191 + $0x5a0] sm:$0xff]
        %v415 = vld [vmem:[%s191 + $0x5a8] sm:$0xff]
        %v416 = vld [vmem:[%s191 + $0x5b0] sm:$0xff]
        %v417 = vld [vmem:[%s191 + $0x5b8] sm:$0xff]
        %v418 = vld [vmem:[%s191 + $0x5c0] sm:$0xff]
        %v419 = vld [vmem:[%s191 + $0x5c8] sm:$0xff]
        %v420 = vld [vmem:[%s191 + $0x5d0] sm:$0xff]
        %v421 = vld [vmem:[%s191 + $0x5d8] sm:$0xff]
        %v422 = vld [vmem:[%s191 + $0x5e0] sm:$0xff]
        %v423 = vld [vmem:[%s191 + $0x5e8] sm:$0xff]
        %v424 = vld [vmem:[%s191 + $0x5f0] sm:$0xff]
        %v425 = vld [vmem:[%s191 + $0x5f8] sm:$0xff]
        %v426 = vld [vmem:[%s191 + $0x600] sm:$0xff]
        %v427 = vld [vmem:[%s191 + $0x608] sm:$0xff]
        %v428 = vld [vmem:[%s191 + $0x610] sm:$0xff]
        %v429 = vld [vmem:[%s191 + $0x618] sm:$0xff]
        %v430 = vld [vmem:[%s191 + $0x620] sm:$0xff]
        %v431 = vld [vmem:[%s191 + $0x628] sm:$0xff]
        %v432 = vld [vmem:[%s191 + $0x630] sm:$0xff]
        %v433 = vld [vmem:[%s191 + $0x638] sm:$0xff]
        %v434 = vld [vmem:[%s191 + $0x640] sm:$0xff]
        %v435 = vld [vmem:[%s191 + $0x648] sm:$0xff]
        %v436 = vld [vmem:[%s191 + $0x650] sm:$0xff]
        %v437 = vld [vmem:[%s191 + $0x658] sm:$0xff]
        %v438 = vld [vmem:[%s191 + $0x660] sm:$0xff]
        %v439 = vld [vmem:[%s191 + $0x668] sm:$0xff]
        %v440 = vld [vmem:[%s191 + $0x670] sm:$0xff]
        %v441 = vld [vmem:[%s191 + $0x678] sm:$0xff]
        %v442 = vld [vmem:[%s191 + $0x680] sm:$0xff]
        %v443 = vld [vmem:[%s191 + $0x688] sm:$0xff]
        %v444 = vld [vmem:[%s191 + $0x690] sm:$0xff]
        %v445 = vld [vmem:[%s191 + $0x698] sm:$0xff]
        %v446 = vld [vmem:[%s191 + $0x6a0] sm:$0xff]
        %v447 = vld [vmem:[%s191 + $0x6a8] sm:$0xff]
        %v448 = vld [vmem:[%s191 + $0x6b0] sm:$0xff]
        %v449 = vld [vmem:[%s191 + $0x6b8] sm:$0xff]
        %v450 = vld [vmem:[%s191 + $0x6c0] sm:$0xff]
        %v451 = vld [vmem:[%s191 + $0x6c8] sm:$0xff]
        %v452 = vld [vmem:[%s191 + $0x6d0] sm:$0xff]
        %v453 = vld [vmem:[%s191 + $0x6d8] sm:$0xff]
        %v454 = vld [vmem:[%s191 + $0x6e0] sm:$0xff]
        %v455 = vld [vmem:[%s191 + $0x6e8] sm:$0xff]
        %v456 = vld [vmem:[%s191 + $0x6f0] sm:$0xff]
        %v457 = vld [vmem:[%s191 + $0x6f8] sm:$0xff]
        %v458 = vld [vmem:[%s191 + $0x700] sm:$0xff]
        %v459 = vld [vmem:[%s191 + $0x708] sm:$0xff]
        %v460 = vld [vmem:[%s191 + $0x710] sm:$0xff]
        %v461 = vld [vmem:[%s191 + $0x718] sm:$0xff]
        %v462 = vld [vmem:[%s191 + $0x720] sm:$0xff]
        %v463 = vld [vmem:[%s191 + $0x728] sm:$0xff]
        %v464 = vld [vmem:[%s191 + $0x730] sm:$0xff]
        %v465 = vld [vmem:[%s191 + $0x738] sm:$0xff]
        %v466 = vld [vmem:[%s191 + $0x740] sm:$0xff]
        %v467 = vld [vmem:[%s191 + $0x748] sm:$0xff]
        %v468 = vld [vmem:[%s191 + $0x750] sm:$0xff]
        %v469 = vld [vmem:[%s191 + $0x758] sm:$0xff]
        %v470 = vld [vmem:[%s191 + $0x760] sm:$0xff]
        %v471 = vld [vmem:[%s191 + $0x768] sm:$0xff]
        %v472 = vld [vmem:[%s191 + $0x770] sm:$0xff]
        %v473 = vld [vmem:[%s191 + $0x778] sm:$0xff]
        %v474 = vld [vmem:[%s191 + $0x780] sm:$0xff]
        %v475 = vld [vmem:[%s191 + $0x788] sm:$0xff]
        %v476 = vld [vmem:[%s191 + $0x790] sm:$0xff]
        %v477 = vld [vmem:[%s191 + $0x798] sm:$0xff]
        %v478 = vld [vmem:[%s191 + $0x7a0] sm:$0xff]
        %v479 = vld [vmem:[%s191 + $0x7a8] sm:$0xff]
        %v480 = vld [vmem:[%s191 + $0x7b0] sm:$0xff]
        %v481 = vld [vmem:[%s191 + $0x7b8] sm:$0xff]
        %v482 = vld [vmem:[%s191 + $0x7c0] sm:$0xff]
        %v483 = vld [vmem:[%s191 + $0x7c8] sm:$0xff]
        %v484 = vld [vmem:[%s191 + $0x7d0] sm:$0xff]
        %v485 = vld [vmem:[%s191 + $0x7d8] sm:$0xff]
        %v486 = vld [vmem:[%s191 + $0x7e0] sm:$0xff]
        %v487 = vld [vmem:[%s191 + $0x7e8] sm:$0xff]
        %v488 = vld [vmem:[%s191 + $0x7f0] sm:$0xff]
        %v489 = vld [vmem:[%s191 + $0x7f8] sm:$0xff]
        %v490 = vld [vmem:[%s191 + $0x800] sm:$0xff]
        %v491 = vld [vmem:[%s191 + $0x808] sm:$0xff]
        %v492 = vld [vmem:[%s191 + $0x810] sm:$0xff]
        %v493 = vld [vmem:[%s191 + $0x818] sm:$0xff]
        %v494 = vld [vmem:[%s191 + $0x820] sm:$0xff]
        %v495 = vld [vmem:[%s191 + $0x828] sm:$0xff]
        %v496 = vld [vmem:[%s191 + $0x830] sm:$0xff]
        %v497 = vld [vmem:[%s191 + $0x838] sm:$0xff]
        %v498 = vld [vmem:[%s191 + $0x840] sm:$0xff]
        %v499 = vld [vmem:[%s191 + $0x848] sm:$0xff]
        %v500 = vld [vmem:[%s191 + $0x850] sm:$0xff]
        %v501 = vld [vmem:[%s191 + $0x858] sm:$0xff]
        %v502 = vld [vmem:[%s191 + $0x860] sm:$0xff]
        %v503 = vld [vmem:[%s191 + $0x868] sm:$0xff]
        %v504 = vld [vmem:[%s191 + $0x870] sm:$0xff]
        %v505 = vld [vmem:[%s191 + $0x878] sm:$0xff]
        %v506 = vld [vmem:[%s191 + $0x880] sm:$0xff]
        %v507 = vld [vmem:[%s191 + $0x888] sm:$0xff]
        %v508 = vld [vmem:[%s191 + $0x890] sm:$0xff]
        %v509 = vld [vmem:[%s191 + $0x898] sm:$0xff]
        %v510 = vld [vmem:[%s191 + $0x8a0] sm:$0xff]
        %v511 = vld [vmem:[%s191 + $0x8a8] sm:$0xff]
        %v512 = vld [vmem:[%s191 + $0x8b0] sm:$0xff]
        %v513 = vld [vmem:[%s191 + $0x8b8] sm:$0xff]
        %v514 = vld [vmem:[%s191 + $0x8c0] sm:$0xff]
        %v515 = vld [vmem:[%s191 + $0x8c8] sm:$0xff]
        %v516 = vld [vmem:[%s191 + $0x8d0] sm:$0xff]
        %v517 = vld [vmem:[%s191 + $0x8d8] sm:$0xff]
        %v518 = vld [vmem:[%s191 + $0x8e0] sm:$0xff]
        %v519 = vld [vmem:[%s191 + $0x8e8] sm:$0xff]
        %v520 = vld [vmem:[%s191 + $0x8f0] sm:$0xff]
        %v521 = vld [vmem:[%s191 + $0x8f8] sm:$0xff]
        %v522 = vld [vmem:[%s191 + $0x900] sm:$0xff]
        %v523 = vld [vmem:[%s191 + $0x908] sm:$0xff]
        %v524 = vld [vmem:[%s191 + $0x910] sm:$0xff]
        %v525 = vld [vmem:[%s191 + $0x918] sm:$0xff]
        %v526 = vld [vmem:[%s191 + $0x920] sm:$0xff]
        %v527 = vld [vmem:[%s191 + $0x928] sm:$0xff]
        %v528 = vld [vmem:[%s191 + $0x930] sm:$0xff]
        %v529 = vld [vmem:[%s191 + $0x938] sm:$0xff]
        %v530 = vld [vmem:[%s191 + $0x940] sm:$0xff]
        %v531 = vld [vmem:[%s191 + $0x948] sm:$0xff]
        %v532 = vld [vmem:[%s191 + $0x950] sm:$0xff]
        %v533 = vld [vmem:[%s191 + $0x958] sm:$0xff]
        %v534 = vld [vmem:[%s191 + $0x960] sm:$0xff]
        %v535 = vld [vmem:[%s191 + $0x968] sm:$0xff]
        %v536 = vld [vmem:[%s191 + $0x970] sm:$0xff]
        %v537 = vld [vmem:[%s191 + $0x978] sm:$0xff]
        %v538 = vld [vmem:[%s191 + $0x980] sm:$0xff]
        %v539 = vld [vmem:[%s191 + $0x988] sm:$0xff]
        %v540 = vld [vmem:[%s191 + $0x990] sm:$0xff]
        %v541 = vld [vmem:[%s191 + $0x998] sm:$0xff]
        %v542 = vld [vmem:[%s191 + $0x9a0] sm:$0xff]
        %v543 = vld [vmem:[%s191 + $0x9a8] sm:$0xff]
        %v544 = vld [vmem:[%s191 + $0x9b0] sm:$0xff]
        %v545 = vld [vmem:[%s191 + $0x9b8] sm:$0xff]
        %v546 = vld [vmem:[%s191 + $0x9c0] sm:$0xff]
        %v547 = vld [vmem:[%s191 + $0x9c8] sm:$0xff]
        %v548 = vld [vmem:[%s191 + $0x9d0] sm:$0xff]
        %v549 = vld [vmem:[%s191 + $0x9d8] sm:$0xff]
        %v550 = vld [vmem:[%s191 + $0x9e0] sm:$0xff]
        %v551 = vld [vmem:[%s191 + $0x9e8] sm:$0xff]
        %v552 = vld [vmem:[%s191 + $0x9f0] sm:$0xff]
        %v553 = vld [vmem:[%s191 + $0x9f8] sm:$0xff]
        %v554 = vld [vmem:[%s191 + $0xa00] sm:$0xff]
        %v555 = vld [vmem:[%s191 + $0xa08] sm:$0xff]
        %v556 = vld [vmem:[%s191 + $0xa10] sm:$0xff]
        %v557 = vld [vmem:[%s191 + $0xa18] sm:$0xff]
        %v558 = vld [vmem:[%s191 + $0xa20] sm:$0xff]
        %v559 = vld [vmem:[%s191 + $0xa28] sm:$0xff]
        %v560 = vld [vmem:[%s191 + $0xa30] sm:$0xff]
        %v561 = vld [vmem:[%s191 + $0xa38] sm:$0xff]
        %v562 = vld [vmem:[%s191 + $0xa40] sm:$0xff]
        %v563 = vld [vmem:[%s191 + $0xa48] sm:$0xff]
        %v564 = vld [vmem:[%s191 + $0xa50] sm:$0xff]
        %v565 = vld [vmem:[%s191 + $0xa58] sm:$0xff]
        %v566 = vld [vmem:[%s191 + $0xa60] sm:$0xff]
        %v567 = vld [vmem:[%s191 + $0xa68] sm:$0xff]
        %v568 = vld [vmem:[%s191 + $0xa70] sm:$0xff]
        %v569 = vld [vmem:[%s191 + $0xa78] sm:$0xff]
        %v570 = vld [vmem:[%s191 + $0xa80] sm:$0xff]
        %v571 = vld [vmem:[%s191 + $0xa88] sm:$0xff]
        %v572 = vld [vmem:[%s191 + $0xa90] sm:$0xff]
        %v573 = vld [vmem:[%s191 + $0xa98] sm:$0xff]
        %v574 = vld [vmem:[%s191 + $0xaa0] sm:$0xff]
        %v575 = vld [vmem:[%s191 + $0xaa8] sm:$0xff]
        %v576 = vld [vmem:[%s191 + $0xab0] sm:$0xff]
        %v577 = vld [vmem:[%s191 + $0xab8] sm:$0xff]
        %v578 = vld [vmem:[%s191 + $0xac0] sm:$0xff]
        %v579 = vld [vmem:[%s191 + $0xac8] sm:$0xff]
        %v580 = vld [vmem:[%s191 + $0xad0] sm:$0xff]
        %v581 = vld [vmem:[%s191 + $0xad8] sm:$0xff]
        %v582 = vld [vmem:[%s191 + $0xae0] sm:$0xff]
        %v583 = vld [vmem:[%s191 + $0xae8] sm:$0xff]
        %v584 = vld [vmem:[%s191 + $0xaf0] sm:$0xff]
        %v585 = vld [vmem:[%s191 + $0xaf8] sm:$0xff]
        %v586 = vld [vmem:[%s191 + $0xb00] sm:$0xff]
        %v587 = vld [vmem:[%s191 + $0xb08] sm:$0xff]
        %v588 = vld [vmem:[%s191 + $0xb10] sm:$0xff]
        %v589 = vld [vmem:[%s191 + $0xb18] sm:$0xff]
        %v590 = vld [vmem:[%s191 + $0xb20] sm:$0xff]
        %v591 = vld [vmem:[%s191 + $0xb28] sm:$0xff]
        %v592 = vld [vmem:[%s191 + $0xb30] sm:$0xff]
        %v593 = vld [vmem:[%s191 + $0xb38] sm:$0xff]
        %v594 = vld [vmem:[%s191 + $0xb40] sm:$0xff]
        %v595 = vld [vmem:[%s191 + $0xb48] sm:$0xff]
        %v596 = vld [vmem:[%s191 + $0xb50] sm:$0xff]
        %v597 = vld [vmem:[%s191 + $0xb58] sm:$0xff]
        %v598 = vld [vmem:[%s191 + $0xb60] sm:$0xff]
        %v599 = vld [vmem:[%s191 + $0xb68] sm:$0xff]
        %v600 = vld [vmem:[%s191 + $0xb70] sm:$0xff]
        %v601 = vld [vmem:[%s191 + $0xb78] sm:$0xff]
        %v602 = vld [vmem:[%s191 + $0xb80] sm:$0xff]
        %v603 = vld [vmem:[%s191 + $0xb88] sm:$0xff]
        %v604 = vld [vmem:[%s191 + $0xb90] sm:$0xff]
        %v605 = vld [vmem:[%s191 + $0xb98] sm:$0xff]
        %v606 = vld [vmem:[%s191 + $0xba0] sm:$0xff]
        %v607 = vld [vmem:[%s191 + $0xba8] sm:$0xff]
        %v608 = vld [vmem:[%s191 + $0xbb0] sm:$0xff]
        %v609 = vld [vmem:[%s191 + $0xbb8] sm:$0xff]
        %v610 = vld [vmem:[%s191 + $0xbc0] sm:$0xff]
        %v611 = vld [vmem:[%s191 + $0xbc8] sm:$0xff]
        %v612 = vld [vmem:[%s191 + $0xbd0] sm:$0xff]
        %v613 = vld [vmem:[%s191 + $0xbd8] sm:$0xff]
        %v614 = vld [vmem:[%s191 + $0xbe0] sm:$0xff]
        %v615 = vld [vmem:[%s191 + $0xbe8] sm:$0xff]
        %v616 = vld [vmem:[%s191 + $0xbf0] sm:$0xff]
        %v617 = vld [vmem:[%s191 + $0xbf8] sm:$0xff]
        %v618 = vld [vmem:[%s191 + $0xc00] sm:$0xff]
        %v619 = vld [vmem:[%s191 + $0xc08] sm:$0xff]
        %v620 = vld [vmem:[%s191 + $0xc10] sm:$0xff]
        %v621 = vld [vmem:[%s191 + $0xc18] sm:$0xff]
        %v622 = vld [vmem:[%s191 + $0xc20] sm:$0xff]
        %v623 = vld [vmem:[%s191 + $0xc28] sm:$0xff]
        %v624 = vld [vmem:[%s191 + $0xc30] sm:$0xff]
        %v625 = vld [vmem:[%s191 + $0xc38] sm:$0xff]
        %v626 = vld [vmem:[%s191 + $0xc40] sm:$0xff]
        %v627 = vld [vmem:[%s191 + $0xc48] sm:$0xff]
        %v628 = vld [vmem:[%s191 + $0xc50] sm:$0xff]
        %v629 = vld [vmem:[%s191 + $0xc58] sm:$0xff]
        %v630 = vld [vmem:[%s191 + $0xc60] sm:$0xff]
        %v631 = vld [vmem:[%s191 + $0xc68] sm:$0xff]
        %v632 = vld [vmem:[%s191 + $0xc70] sm:$0xff]
        %v633 = vld [vmem:[%s191 + $0xc78] sm:$0xff]
        %v634 = vld [vmem:[%s191 + $0xc80] sm:$0xff]
        %v635 = vld [vmem:[%s191 + $0xc88] sm:$0xff]
        %v636 = vld [vmem:[%s191 + $0xc90] sm:$0xff]
        %v637 = vld [vmem:[%s191 + $0xc98] sm:$0xff]
        %v638 = vld [vmem:[%s191 + $0xca0] sm:$0xff]
        %v639 = vld [vmem:[%s191 + $0xca8] sm:$0xff]
        %v640 = vld [vmem:[%s191 + $0xcb0] sm:$0xff]
        %v641 = vld [vmem:[%s191 + $0xcb8] sm:$0xff]
        %v642 = vld [vmem:[%s191 + $0xcc0] sm:$0xff]
        %v643 = vld [vmem:[%s191 + $0xcc8] sm:$0xff]
        %v644 = vld [vmem:[%s191 + $0xcd0] sm:$0xff]
        %v645 = vld [vmem:[%s191 + $0xcd8] sm:$0xff]
        %v646 = vld [vmem:[%s191 + $0xce0] sm:$0xff]
        %v647 = vld [vmem:[%s191 + $0xce8] sm:$0xff]
        %v648 = vld [vmem:[%s191 + $0xcf0] sm:$0xff]
        %v649 = vld [vmem:[%s191 + $0xcf8] sm:$0xff]
        %v650 = vld [vmem:[%s191 + $0xd00] sm:$0xff]
        %v651 = vld [vmem:[%s191 + $0xd08] sm:$0xff]
        %v652 = vld [vmem:[%s191 + $0xd10] sm:$0xff]
        %v653 = vld [vmem:[%s191 + $0xd18] sm:$0xff]
        %v654 = vld [vmem:[%s191 + $0xd20] sm:$0xff]
        %v655 = vld [vmem:[%s191 + $0xd28] sm:$0xff]
        %v656 = vld [vmem:[%s191 + $0xd30] sm:$0xff]
        %v657 = vld [vmem:[%s191 + $0xd38] sm:$0xff]
        %v658 = vld [vmem:[%s191 + $0xd40] sm:$0xff]
        %v659 = vld [vmem:[%s191 + $0xd48] sm:$0xff]
        %v660 = vld [vmem:[%s191 + $0xd50] sm:$0xff]
        %v661 = vld [vmem:[%s191 + $0xd58] sm:$0xff]
        %v662 = vld [vmem:[%s191 + $0xd60] sm:$0xff]
        %v663 = vld [vmem:[%s191 + $0xd68] sm:$0xff]
        %v664 = vld [vmem:[%s191 + $0xd70] sm:$0xff]
        %v665 = vld [vmem:[%s191 + $0xd78] sm:$0xff]
        %v666 = vld [vmem:[%s191 + $0xd80] sm:$0xff]
        %v667 = vld [vmem:[%s191 + $0xd88] sm:$0xff]
        %v668 = vld [vmem:[%s191 + $0xd90] sm:$0xff]
        %v669 = vld [vmem:[%s191 + $0xd98] sm:$0xff]
        %v670 = vld [vmem:[%s191 + $0xda0] sm:$0xff]
        %v671 = vld [vmem:[%s191 + $0xda8] sm:$0xff]
        %v672 = vld [vmem:[%s191 + $0xdb0] sm:$0xff]
        %v673 = vld [vmem:[%s191 + $0xdb8] sm:$0xff]
        %v674 = vld [vmem:[%s191 + $0xdc0] sm:$0xff]
        %v675 = vld [vmem:[%s191 + $0xdc8] sm:$0xff]
        %v676 = vld [vmem:[%s191 + $0xdd0] sm:$0xff]
        %v677 = vld [vmem:[%s191 + $0xdd8] sm:$0xff]
        %v678 = vld [vmem:[%s191 + $0xde0] sm:$0xff]
        %v679 = vld [vmem:[%s191 + $0xde8] sm:$0xff]
        %v680 = vld [vmem:[%s191 + $0xdf0] sm:$0xff]
        %v681 = vld [vmem:[%s191 + $0xdf8] sm:$0xff]
        %v682 = vld [vmem:[%s191 + $0xe00] sm:$0xff]
        %v683 = vld [vmem:[%s191 + $0xe08] sm:$0xff]
        %v684 = vld [vmem:[%s191 + $0xe10] sm:$0xff]
        %v685 = vld [vmem:[%s191 + $0xe18] sm:$0xff]
        %v686 = vld [vmem:[%s191 + $0xe20] sm:$0xff]
        %v687 = vld [vmem:[%s191 + $0xe28] sm:$0xff]
        %v688 = vld [vmem:[%s191 + $0xe30] sm:$0xff]
        %v689 = vld [vmem:[%s191 + $0xe38] sm:$0xff]
        %v690 = vld [vmem:[%s191 + $0xe40] sm:$0xff]
        %v691 = vld [vmem:[%s191 + $0xe48] sm:$0xff]
        %v692 = vld [vmem:[%s191 + $0xe50] sm:$0xff]
        %v693 = vld [vmem:[%s191 + $0xe58] sm:$0xff]
        %v694 = vld [vmem:[%s191 + $0xe60] sm:$0xff]
        %v695 = vld [vmem:[%s191 + $0xe68] sm:$0xff]
        %v696 = vld [vmem:[%s191 + $0xe70] sm:$0xff]
        %v697 = vld [vmem:[%s191 + $0xe78] sm:$0xff]
        %v698 = vld [vmem:[%s191 + $0xe80] sm:$0xff]
        %v699 = vld [vmem:[%s191 + $0xe88] sm:$0xff]
        %v700 = vld [vmem:[%s191 + $0xe90] sm:$0xff]
        %v701 = vld [vmem:[%s191 + $0xe98] sm:$0xff]
        %v702 = vld [vmem:[%s191 + $0xea0] sm:$0xff]
        %v703 = vld [vmem:[%s191 + $0xea8] sm:$0xff]
        %v704 = vld [vmem:[%s191 + $0xeb0] sm:$0xff]
        %v705 = vld [vmem:[%s191 + $0xeb8] sm:$0xff]
        %v706 = vld [vmem:[%s191 + $0xec0] sm:$0xff]
        %v707 = vld [vmem:[%s191 + $0xec8] sm:$0xff]
        %v708 = vld [vmem:[%s191 + $0xed0] sm:$0xff]
        %v709 = vld [vmem:[%s191 + $0xed8] sm:$0xff]
        %v710 = vld [vmem:[%s191 + $0xee0] sm:$0xff]
        %v711 = vld [vmem:[%s191 + $0xee8] sm:$0xff]
        %v712 = vld [vmem:[%s191 + $0xef0] sm:$0xff]
        %v713 = vld [vmem:[%s191 + $0xef8] sm:$0xff]
        %v714 = vld [vmem:[%s191 + $0xf00] sm:$0xff]
        %v715 = vld [vmem:[%s191 + $0xf08] sm:$0xff]
        %v716 = vld [vmem:[%s191 + $0xf10] sm:$0xff]
        %v717 = vld [vmem:[%s191 + $0xf18] sm:$0xff]
        %v718 = vld [vmem:[%s191 + $0xf20] sm:$0xff]
        %v719 = vld [vmem:[%s191 + $0xf28] sm:$0xff]
        %v720 = vld [vmem:[%s191 + $0xf30] sm:$0xff]
        %v721 = vld [vmem:[%s191 + $0xf38] sm:$0xff]
        %v722 = vld [vmem:[%s191 + $0xf40] sm:$0xff]
        %v723 = vld [vmem:[%s191 + $0xf48] sm:$0xff]
        %v724 = vld [vmem:[%s191 + $0xf50] sm:$0xff]
        %v725 = vld [vmem:[%s191 + $0xf58] sm:$0xff]
        %v726 = vld [vmem:[%s191 + $0xf60] sm:$0xff]
        %v727 = vld [vmem:[%s191 + $0xf68] sm:$0xff]
        %v728 = vld [vmem:[%s191 + $0xf70] sm:$0xff]
        %v729 = vld [vmem:[%s191 + $0xf78] sm:$0xff]
        %v730 = vld [vmem:[%s191 + $0xf80] sm:$0xff]
        %v731 = vld [vmem:[%s191 + $0xf88] sm:$0xff]
        %v732 = vld [vmem:[%s191 + $0xf90] sm:$0xff]
        %v733 = vld [vmem:[%s191 + $0xf98] sm:$0xff]
        %v734 = vld [vmem:[%s191 + $0xfa0] sm:$0xff]
        %v735 = vld [vmem:[%s191 + $0xfa8] sm:$0xff]
        %v736 = vld [vmem:[%s191 + $0xfb0] sm:$0xff]
        %v737 = vld [vmem:[%s191 + $0xfb8] sm:$0xff]
        %v738 = vld [vmem:[%s191 + $0xfc0] sm:$0xff]
        %v739 = vld [vmem:[%s191 + $0xfc8] sm:$0xff]
        %v740 = vld [vmem:[%s191 + $0xfd0] sm:$0xff]
        %v741 = vld [vmem:[%s191 + $0xfd8] sm:$0xff]
        %v742 = vld [vmem:[%s191 + $0xfe0] sm:$0xff]
        %v743 = vld [vmem:[%s191 + $0xfe8] sm:$0xff]
        %v744 = vld [vmem:[%s191 + $0xff0] sm:$0xff]
        %v745 = vld [vmem:[%s191 + $0xff8] sm:$0xff]
        %v746 = vld [vmem:[%s201] sm:$0xff]
        %v747 = vld [vmem:[%s201 + $0x8] sm:$0xff]
        %v748 = vld [vmem:[%s201 + $0x10] sm:$0xff]
        %v749 = vld [vmem:[%s201 + $0x18] sm:$0xff]
        %v750 = vld [vmem:[%s201 + $0x20] sm:$0xff]
        %v751 = vld [vmem:[%s201 + $0x28] sm:$0xff]
        %v752 = vld [vmem:[%s201 + $0x30] sm:$0xff]
        %v753 = vld [vmem:[%s201 + $0x38] sm:$0xff]
        %v762 = vperm.slane %v746, 0
        %v763 = vperm.slane %v746, 1
        %v764 = vperm.slane %v746, 2
        %v765 = vperm.slane %v746, 3
        %v766 = vperm.slane %v746, 4
        %v767 = vperm.slane %v746, 5
        %v768 = vperm.slane %v746, 6
        %v769 = vperm.slane %v746, 7
        %v770 = vperm.slane %v747, 0
        %v771 = vperm.slane %v747, 1
        %v772 = vperm.slane %v747, 2
        %v773 = vperm.slane %v747, 3
        %v774 = vperm.slane %v747, 4
        %v775 = vperm.slane %v747, 5
        %v776 = vperm.slane %v747, 6
        %v777 = vperm.slane %v747, 7
        %v778 = vperm.slane %v748, 0
        %v779 = vperm.slane %v748, 1
        %v780 = vperm.slane %v748, 2
        %v781 = vperm.slane %v748, 3
        %v782 = vperm.slane %v748, 4
        %v783 = vperm.slane %v748, 5
        %v784 = vperm.slane %v748, 6
        %v785 = vperm.slane %v748, 7
        %v786 = vperm.slane %v749, 0
        %v787 = vperm.slane %v749, 1
        %v788 = vperm.slane %v749, 2
        %v789 = vperm.slane %v749, 3
        %v790 = vperm.slane %v749, 4
        %v791 = vperm.slane %v749, 5
        %v792 = vperm.slane %v749, 6
        %v793 = vperm.slane %v749, 7
        %v794 = vperm.slane %v750, 0
        %v795 = vperm.slane %v750, 1
        %v796 = vperm.slane %v750, 2
        %v797 = vperm.slane %v750, 3
        %v798 = vperm.slane %v750, 4
        %v799 = vperm.slane %v750, 5
        %v800 = vperm.slane %v750, 6
        %v801 = vperm.slane %v750, 7
        %v802 = vperm.slane %v751, 0
        %v803 = vperm.slane %v751, 1
        %v804 = vperm.slane %v751, 2
        %v805 = vperm.slane %v751, 3
        %v806 = vperm.slane %v751, 4
        %v807 = vperm.slane %v751, 5
        %v808 = vperm.slane %v751, 6
        %v809 = vperm.slane %v751, 7
        %v810 = vperm.slane %v752, 0
        %v811 = vperm.slane %v752, 1
        %v812 = vperm.slane %v752, 2
        %v813 = vperm.slane %v752, 3
        %v814 = vperm.slane %v752, 4
        %v815 = vperm.slane %v752, 5
        %v816 = vperm.slane %v752, 6
        %v817 = vperm.slane %v752, 7
        %v818 = vperm.slane %v753, 0
        %v819 = vperm.slane %v753, 1
        %v820 = vperm.slane %v753, 2
        %v821 = vperm.slane %v753, 3
        %v822 = vperm.slane %v753, 4
        %v823 = vperm.slane %v753, 5
        %v824 = vperm.slane %v753, 6
        %v825 = vperm.slane %v753, 7
        %v1402 = vunpack.c.l.b16 %v234
        %v1403 = vunpack.c.h.b16 %v234
        %v1404 = vunpack.c.l.b16 %v235
        %v1405 = vunpack.c.h.b16 %v235
        %v1406 = vunpack.c.l.b16 %v236
        %v1407 = vunpack.c.h.b16 %v236
        %v1408 = vunpack.c.l.b16 %v237
        %v1409 = vunpack.c.h.b16 %v237
        %v1410 = vunpack.c.l.b16 %v238
        %v1411 = vunpack.c.h.b16 %v238
        %v1412 = vunpack.c.l.b16 %v239
        %v1413 = vunpack.c.h.b16 %v239
        %v1414 = vunpack.c.l.b16 %v240
        %v1415 = vunpack.c.h.b16 %v240
        %v1416 = vunpack.c.l.b16 %v241
        %v1417 = vunpack.c.h.b16 %v241
        %v1418 = vunpack.c.l.b16 %v242
        %v1419 = vunpack.c.h.b16 %v242
        %v1420 = vunpack.c.l.b16 %v243
        %v1421 = vunpack.c.h.b16 %v243
        %v1422 = vunpack.c.l.b16 %v244
        %v1423 = vunpack.c.h.b16 %v244
        %v1424 = vunpack.c.l.b16 %v245
        %v1425 = vunpack.c.h.b16 %v245
        %v1426 = vunpack.c.l.b16 %v246
        %v1427 = vunpack.c.h.b16 %v246
        %v1428 = vunpack.c.l.b16 %v247
        %v1429 = vunpack.c.h.b16 %v247
        %v1430 = vunpack.c.l.b16 %v248
        %v1431 = vunpack.c.h.b16 %v248
        %v1432 = vunpack.c.l.b16 %v249
        %v1433 = vunpack.c.h.b16 %v249
        %v1434 = vunpack.c.l.b16 %v250
        %v1435 = vunpack.c.h.b16 %v250
        %v1436 = vunpack.c.l.b16 %v251
        %v1437 = vunpack.c.h.b16 %v251
        %v1438 = vunpack.c.l.b16 %v252
        %v1439 = vunpack.c.h.b16 %v252
        %v1440 = vunpack.c.l.b16 %v253
        %v1441 = vunpack.c.h.b16 %v253
        %v1442 = vunpack.c.l.b16 %v254
        %v1443 = vunpack.c.h.b16 %v254
        %v1444 = vunpack.c.l.b16 %v255
        %v1445 = vunpack.c.h.b16 %v255
        %v1446 = vunpack.c.l.b16 %v256
        %v1447 = vunpack.c.h.b16 %v256
        %v1448 = vunpack.c.l.b16 %v257
        %v1449 = vunpack.c.h.b16 %v257
        %v1450 = vunpack.c.l.b16 %v258
        %v1451 = vunpack.c.h.b16 %v258
        %v1452 = vunpack.c.l.b16 %v259
        %v1453 = vunpack.c.h.b16 %v259
        %v1454 = vunpack.c.l.b16 %v260
        %v1455 = vunpack.c.h.b16 %v260
        %v1456 = vunpack.c.l.b16 %v261
        %v1457 = vunpack.c.h.b16 %v261
        %v1458 = vunpack.c.l.b16 %v262
        %v1459 = vunpack.c.h.b16 %v262
        %v1460 = vunpack.c.l.b16 %v263
        %v1461 = vunpack.c.h.b16 %v263
        %v1462 = vunpack.c.l.b16 %v264
        %v1463 = vunpack.c.h.b16 %v264
        %v1464 = vunpack.c.l.b16 %v265
        %v1465 = vunpack.c.h.b16 %v265
        %v1466 = vunpack.c.l.b16 %v266
        %v1467 = vunpack.c.h.b16 %v266
        %v1468 = vunpack.c.l.b16 %v267
        %v1469 = vunpack.c.h.b16 %v267
        %v1470 = vunpack.c.l.b16 %v268
        %v1471 = vunpack.c.h.b16 %v268
        %v1472 = vunpack.c.l.b16 %v269
        %v1473 = vunpack.c.h.b16 %v269
        %v1474 = vunpack.c.l.b16 %v270
        %v1475 = vunpack.c.h.b16 %v270
        %v1476 = vunpack.c.l.b16 %v271
        %v1477 = vunpack.c.h.b16 %v271
        %v1478 = vunpack.c.l.b16 %v272
        %v1479 = vunpack.c.h.b16 %v272
        %v1480 = vunpack.c.l.b16 %v273
        %v1481 = vunpack.c.h.b16 %v273
        %v1482 = vunpack.c.l.b16 %v274
        %v1483 = vunpack.c.h.b16 %v274
        %v1484 = vunpack.c.l.b16 %v275
        %v1485 = vunpack.c.h.b16 %v275
        %v1486 = vunpack.c.l.b16 %v276
        %v1487 = vunpack.c.h.b16 %v276
        %v1488 = vunpack.c.l.b16 %v277
        %v1489 = vunpack.c.h.b16 %v277
        %v1490 = vunpack.c.l.b16 %v278
        %v1491 = vunpack.c.h.b16 %v278
        %v1492 = vunpack.c.l.b16 %v279
        %v1493 = vunpack.c.h.b16 %v279
        %v1494 = vunpack.c.l.b16 %v280
        %v1495 = vunpack.c.h.b16 %v280
        %v1496 = vunpack.c.l.b16 %v281
        %v1497 = vunpack.c.h.b16 %v281
        %v1498 = vunpack.c.l.b16 %v282
        %v1499 = vunpack.c.h.b16 %v282
        %v1500 = vunpack.c.l.b16 %v283
        %v1501 = vunpack.c.h.b16 %v283
        %v1502 = vunpack.c.l.b16 %v284
        %v1503 = vunpack.c.h.b16 %v284
        %v1504 = vunpack.c.l.b16 %v285
        %v1505 = vunpack.c.h.b16 %v285
        %v1506 = vunpack.c.l.b16 %v286
        %v1507 = vunpack.c.h.b16 %v286
        %v1508 = vunpack.c.l.b16 %v287
        %v1509 = vunpack.c.h.b16 %v287
        %v1510 = vunpack.c.l.b16 %v288
        %v1511 = vunpack.c.h.b16 %v288
        %v1512 = vunpack.c.l.b16 %v289
        %v1513 = vunpack.c.h.b16 %v289
        %v1514 = vunpack.c.l.b16 %v290
        %v1515 = vunpack.c.h.b16 %v290
        %v1516 = vunpack.c.l.b16 %v291
        %v1517 = vunpack.c.h.b16 %v291
        %v1518 = vunpack.c.l.b16 %v292
        %v1519 = vunpack.c.h.b16 %v292
        %v1520 = vunpack.c.l.b16 %v293
        %v1521 = vunpack.c.h.b16 %v293
        %v1522 = vunpack.c.l.b16 %v294
        %v1523 = vunpack.c.h.b16 %v294
        %v1524 = vunpack.c.l.b16 %v295
        %v1525 = vunpack.c.h.b16 %v295
        %v1526 = vunpack.c.l.b16 %v296
        %v1527 = vunpack.c.h.b16 %v296
        %v1528 = vunpack.c.l.b16 %v297
        %v1529 = vunpack.c.h.b16 %v297
        %v1530 = vunpack.c.l.b16 %v298
        %v1531 = vunpack.c.h.b16 %v298
        %v1532 = vunpack.c.l.b16 %v299
        %v1533 = vunpack.c.h.b16 %v299
        %v1534 = vunpack.c.l.b16 %v300
        %v1535 = vunpack.c.h.b16 %v300
        %v1536 = vunpack.c.l.b16 %v301
        %v1537 = vunpack.c.h.b16 %v301
        %v1538 = vunpack.c.l.b16 %v302
        %v1539 = vunpack.c.h.b16 %v302
        %v1540 = vunpack.c.l.b16 %v303
        %v1541 = vunpack.c.h.b16 %v303
        %v1542 = vunpack.c.l.b16 %v304
        %v1543 = vunpack.c.h.b16 %v304
        %v1544 = vunpack.c.l.b16 %v305
        %v1545 = vunpack.c.h.b16 %v305
        %v1546 = vunpack.c.l.b16 %v306
        %v1547 = vunpack.c.h.b16 %v306
        %v1548 = vunpack.c.l.b16 %v307
        %v1549 = vunpack.c.h.b16 %v307
        %v1550 = vunpack.c.l.b16 %v308
        %v1551 = vunpack.c.h.b16 %v308
        %v1552 = vunpack.c.l.b16 %v309
        %v1553 = vunpack.c.h.b16 %v309
        %v1554 = vunpack.c.l.b16 %v310
        %v1555 = vunpack.c.h.b16 %v310
        %v1556 = vunpack.c.l.b16 %v311
        %v1557 = vunpack.c.h.b16 %v311
        %v1558 = vunpack.c.l.b16 %v312
        %v1559 = vunpack.c.h.b16 %v312
        %v1560 = vunpack.c.l.b16 %v313
        %v1561 = vunpack.c.h.b16 %v313
        %v1562 = vunpack.c.l.b16 %v314
        %v1563 = vunpack.c.h.b16 %v314
        %v1564 = vunpack.c.l.b16 %v315
        %v1565 = vunpack.c.h.b16 %v315
        %v1566 = vunpack.c.l.b16 %v316
        %v1567 = vunpack.c.h.b16 %v316
        %v1568 = vunpack.c.l.b16 %v317
        %v1569 = vunpack.c.h.b16 %v317
        %v1570 = vunpack.c.l.b16 %v318
        %v1571 = vunpack.c.h.b16 %v318
        %v1572 = vunpack.c.l.b16 %v319
        %v1573 = vunpack.c.h.b16 %v319
        %v1574 = vunpack.c.l.b16 %v320
        %v1575 = vunpack.c.h.b16 %v320
        %v1576 = vunpack.c.l.b16 %v321
        %v1577 = vunpack.c.h.b16 %v321
        %v1578 = vunpack.c.l.b16 %v322
        %v1579 = vunpack.c.h.b16 %v322
        %v1580 = vunpack.c.l.b16 %v323
        %v1581 = vunpack.c.h.b16 %v323
        %v1582 = vunpack.c.l.b16 %v324
        %v1583 = vunpack.c.h.b16 %v324
        %v1584 = vunpack.c.l.b16 %v325
        %v1585 = vunpack.c.h.b16 %v325
        %v1586 = vunpack.c.l.b16 %v326
        %v1587 = vunpack.c.h.b16 %v326
        %v1588 = vunpack.c.l.b16 %v327
        %v1589 = vunpack.c.h.b16 %v327
        %v1590 = vunpack.c.l.b16 %v328
        %v1591 = vunpack.c.h.b16 %v328
        %v1592 = vunpack.c.l.b16 %v329
        %v1593 = vunpack.c.h.b16 %v329
        %v1594 = vunpack.c.l.b16 %v330
        %v1595 = vunpack.c.h.b16 %v330
        %v1596 = vunpack.c.l.b16 %v331
        %v1597 = vunpack.c.h.b16 %v331
        %v1598 = vunpack.c.l.b16 %v332
        %v1599 = vunpack.c.h.b16 %v332
        %v1600 = vunpack.c.l.b16 %v333
        %v1601 = vunpack.c.h.b16 %v333
        %v1602 = vunpack.c.l.b16 %v334
        %v1603 = vunpack.c.h.b16 %v334
        %v1604 = vunpack.c.l.b16 %v335
        %v1605 = vunpack.c.h.b16 %v335
        %v1606 = vunpack.c.l.b16 %v336
        %v1607 = vunpack.c.h.b16 %v336
        %v1608 = vunpack.c.l.b16 %v337
        %v1609 = vunpack.c.h.b16 %v337
        %v1610 = vunpack.c.l.b16 %v338
        %v1611 = vunpack.c.h.b16 %v338
        %v1612 = vunpack.c.l.b16 %v339
        %v1613 = vunpack.c.h.b16 %v339
        %v1614 = vunpack.c.l.b16 %v340
        %v1615 = vunpack.c.h.b16 %v340
        %v1616 = vunpack.c.l.b16 %v341
        %v1617 = vunpack.c.h.b16 %v341
        %v1618 = vunpack.c.l.b16 %v342
        %v1619 = vunpack.c.h.b16 %v342
        %v1620 = vunpack.c.l.b16 %v343
        %v1621 = vunpack.c.h.b16 %v343
        %v1622 = vunpack.c.l.b16 %v344
        %v1623 = vunpack.c.h.b16 %v344
        %v1624 = vunpack.c.l.b16 %v345
        %v1625 = vunpack.c.h.b16 %v345
        %v1626 = vunpack.c.l.b16 %v346
        %v1627 = vunpack.c.h.b16 %v346
        %v1628 = vunpack.c.l.b16 %v347
        %v1629 = vunpack.c.h.b16 %v347
        %v1630 = vunpack.c.l.b16 %v348
        %v1631 = vunpack.c.h.b16 %v348
        %v1632 = vunpack.c.l.b16 %v349
        %v1633 = vunpack.c.h.b16 %v349
        %v1634 = vunpack.c.l.b16 %v350
        %v1635 = vunpack.c.h.b16 %v350
        %v1636 = vunpack.c.l.b16 %v351
        %v1637 = vunpack.c.h.b16 %v351
        %v1638 = vunpack.c.l.b16 %v352
        %v1639 = vunpack.c.h.b16 %v352
        %v1640 = vunpack.c.l.b16 %v353
        %v1641 = vunpack.c.h.b16 %v353
        %v1642 = vunpack.c.l.b16 %v354
        %v1643 = vunpack.c.h.b16 %v354
        %v1644 = vunpack.c.l.b16 %v355
        %v1645 = vunpack.c.h.b16 %v355
        %v1646 = vunpack.c.l.b16 %v356
        %v1647 = vunpack.c.h.b16 %v356
        %v1648 = vunpack.c.l.b16 %v357
        %v1649 = vunpack.c.h.b16 %v357
        %v1650 = vunpack.c.l.b16 %v358
        %v1651 = vunpack.c.h.b16 %v358
        %v1652 = vunpack.c.l.b16 %v359
        %v1653 = vunpack.c.h.b16 %v359
        %v1654 = vunpack.c.l.b16 %v360
        %v1655 = vunpack.c.h.b16 %v360
        %v1656 = vunpack.c.l.b16 %v361
        %v1657 = vunpack.c.h.b16 %v361
        %v1658 = vunpack.c.l.b16 %v362
        %v1659 = vunpack.c.h.b16 %v362
        %v1660 = vunpack.c.l.b16 %v363
        %v1661 = vunpack.c.h.b16 %v363
        %v1662 = vunpack.c.l.b16 %v364
        %v1663 = vunpack.c.h.b16 %v364
        %v1664 = vunpack.c.l.b16 %v365
        %v1665 = vunpack.c.h.b16 %v365
        %v1666 = vunpack.c.l.b16 %v366
        %v1667 = vunpack.c.h.b16 %v366
        %v1668 = vunpack.c.l.b16 %v367
        %v1669 = vunpack.c.h.b16 %v367
        %v1670 = vunpack.c.l.b16 %v368
        %v1671 = vunpack.c.h.b16 %v368
        %v1672 = vunpack.c.l.b16 %v369
        %v1673 = vunpack.c.h.b16 %v369
        %v1674 = vunpack.c.l.b16 %v370
        %v1675 = vunpack.c.h.b16 %v370
        %v1676 = vunpack.c.l.b16 %v371
        %v1677 = vunpack.c.h.b16 %v371
        %v1678 = vunpack.c.l.b16 %v372
        %v1679 = vunpack.c.h.b16 %v372
        %v1680 = vunpack.c.l.b16 %v373
        %v1681 = vunpack.c.h.b16 %v373
        %v1682 = vunpack.c.l.b16 %v374
        %v1683 = vunpack.c.h.b16 %v374
        %v1684 = vunpack.c.l.b16 %v375
        %v1685 = vunpack.c.h.b16 %v375
        %v1686 = vunpack.c.l.b16 %v376
        %v1687 = vunpack.c.h.b16 %v376
        %v1688 = vunpack.c.l.b16 %v377
        %v1689 = vunpack.c.h.b16 %v377
        %v1690 = vunpack.c.l.b16 %v378
        %v1691 = vunpack.c.h.b16 %v378
        %v1692 = vunpack.c.l.b16 %v379
        %v1693 = vunpack.c.h.b16 %v379
        %v1694 = vunpack.c.l.b16 %v380
        %v1695 = vunpack.c.h.b16 %v380
        %v1696 = vunpack.c.l.b16 %v381
        %v1697 = vunpack.c.h.b16 %v381
        %v1698 = vunpack.c.l.b16 %v382
        %v1699 = vunpack.c.h.b16 %v382
        %v1700 = vunpack.c.l.b16 %v383
        %v1701 = vunpack.c.h.b16 %v383
        %v1702 = vunpack.c.l.b16 %v384
        %v1703 = vunpack.c.h.b16 %v384
        %v1704 = vunpack.c.l.b16 %v385
        %v1705 = vunpack.c.h.b16 %v385
        %v1706 = vunpack.c.l.b16 %v386
        %v1707 = vunpack.c.h.b16 %v386
        %v1708 = vunpack.c.l.b16 %v387
        %v1709 = vunpack.c.h.b16 %v387
        %v1710 = vunpack.c.l.b16 %v388
        %v1711 = vunpack.c.h.b16 %v388
        %v1712 = vunpack.c.l.b16 %v389
        %v1713 = vunpack.c.h.b16 %v389
        %v1714 = vunpack.c.l.b16 %v390
        %v1715 = vunpack.c.h.b16 %v390
        %v1716 = vunpack.c.l.b16 %v391
        %v1717 = vunpack.c.h.b16 %v391
        %v1718 = vunpack.c.l.b16 %v392
        %v1719 = vunpack.c.h.b16 %v392
        %v1720 = vunpack.c.l.b16 %v393
        %v1721 = vunpack.c.h.b16 %v393
        %v1722 = vunpack.c.l.b16 %v394
        %v1723 = vunpack.c.h.b16 %v394
        %v1724 = vunpack.c.l.b16 %v395
        %v1725 = vunpack.c.h.b16 %v395
        %v1726 = vunpack.c.l.b16 %v396
        %v1727 = vunpack.c.h.b16 %v396
        %v1728 = vunpack.c.l.b16 %v397
        %v1729 = vunpack.c.h.b16 %v397
        %v1730 = vunpack.c.l.b16 %v398
        %v1731 = vunpack.c.h.b16 %v398
        %v1732 = vunpack.c.l.b16 %v399
        %v1733 = vunpack.c.h.b16 %v399
        %v1734 = vunpack.c.l.b16 %v400
        %v1735 = vunpack.c.h.b16 %v400
        %v1736 = vunpack.c.l.b16 %v401
        %v1737 = vunpack.c.h.b16 %v401
        %v1738 = vunpack.c.l.b16 %v402
        %v1739 = vunpack.c.h.b16 %v402
        %v1740 = vunpack.c.l.b16 %v403
        %v1741 = vunpack.c.h.b16 %v403
        %v1742 = vunpack.c.l.b16 %v404
        %v1743 = vunpack.c.h.b16 %v404
        %v1744 = vunpack.c.l.b16 %v405
        %v1745 = vunpack.c.h.b16 %v405
        %v1746 = vunpack.c.l.b16 %v406
        %v1747 = vunpack.c.h.b16 %v406
        %v1748 = vunpack.c.l.b16 %v407
        %v1749 = vunpack.c.h.b16 %v407
        %v1750 = vunpack.c.l.b16 %v408
        %v1751 = vunpack.c.h.b16 %v408
        %v1752 = vunpack.c.l.b16 %v409
        %v1753 = vunpack.c.h.b16 %v409
        %v1754 = vunpack.c.l.b16 %v410
        %v1755 = vunpack.c.h.b16 %v410
        %v1756 = vunpack.c.l.b16 %v411
        %v1757 = vunpack.c.h.b16 %v411
        %v1758 = vunpack.c.l.b16 %v412
        %v1759 = vunpack.c.h.b16 %v412
        %v1760 = vunpack.c.l.b16 %v413
        %v1761 = vunpack.c.h.b16 %v413
        %v1762 = vunpack.c.l.b16 %v414
        %v1763 = vunpack.c.h.b16 %v414
        %v1764 = vunpack.c.l.b16 %v415
        %v1765 = vunpack.c.h.b16 %v415
        %v1766 = vunpack.c.l.b16 %v416
        %v1767 = vunpack.c.h.b16 %v416
        %v1768 = vunpack.c.l.b16 %v417
        %v1769 = vunpack.c.h.b16 %v417
        %v1770 = vunpack.c.l.b16 %v418
        %v1771 = vunpack.c.h.b16 %v418
        %v1772 = vunpack.c.l.b16 %v419
        %v1773 = vunpack.c.h.b16 %v419
        %v1774 = vunpack.c.l.b16 %v420
        %v1775 = vunpack.c.h.b16 %v420
        %v1776 = vunpack.c.l.b16 %v421
        %v1777 = vunpack.c.h.b16 %v421
        %v1778 = vunpack.c.l.b16 %v422
        %v1779 = vunpack.c.h.b16 %v422
        %v1780 = vunpack.c.l.b16 %v423
        %v1781 = vunpack.c.h.b16 %v423
        %v1782 = vunpack.c.l.b16 %v424
        %v1783 = vunpack.c.h.b16 %v424
        %v1784 = vunpack.c.l.b16 %v425
        %v1785 = vunpack.c.h.b16 %v425
        %v1786 = vunpack.c.l.b16 %v426
        %v1787 = vunpack.c.h.b16 %v426
        %v1788 = vunpack.c.l.b16 %v427
        %v1789 = vunpack.c.h.b16 %v427
        %v1790 = vunpack.c.l.b16 %v428
        %v1791 = vunpack.c.h.b16 %v428
        %v1792 = vunpack.c.l.b16 %v429
        %v1793 = vunpack.c.h.b16 %v429
        %v1794 = vunpack.c.l.b16 %v430
        %v1795 = vunpack.c.h.b16 %v430
        %v1796 = vunpack.c.l.b16 %v431
        %v1797 = vunpack.c.h.b16 %v431
        %v1798 = vunpack.c.l.b16 %v432
        %v1799 = vunpack.c.h.b16 %v432
        %v1800 = vunpack.c.l.b16 %v433
        %v1801 = vunpack.c.h.b16 %v433
        %v1802 = vunpack.c.l.b16 %v434
        %v1803 = vunpack.c.h.b16 %v434
        %v1804 = vunpack.c.l.b16 %v435
        %v1805 = vunpack.c.h.b16 %v435
        %v1806 = vunpack.c.l.b16 %v436
        %v1807 = vunpack.c.h.b16 %v436
        %v1808 = vunpack.c.l.b16 %v437
        %v1809 = vunpack.c.h.b16 %v437
        %v1810 = vunpack.c.l.b16 %v438
        %v1811 = vunpack.c.h.b16 %v438
        %v1812 = vunpack.c.l.b16 %v439
        %v1813 = vunpack.c.h.b16 %v439
        %v1814 = vunpack.c.l.b16 %v440
        %v1815 = vunpack.c.h.b16 %v440
        %v1816 = vunpack.c.l.b16 %v441
        %v1817 = vunpack.c.h.b16 %v441
        %v1818 = vunpack.c.l.b16 %v442
        %v1819 = vunpack.c.h.b16 %v442
        %v1820 = vunpack.c.l.b16 %v443
        %v1821 = vunpack.c.h.b16 %v443
        %v1822 = vunpack.c.l.b16 %v444
        %v1823 = vunpack.c.h.b16 %v444
        %v1824 = vunpack.c.l.b16 %v445
        %v1825 = vunpack.c.h.b16 %v445
        %v1826 = vunpack.c.l.b16 %v446
        %v1827 = vunpack.c.h.b16 %v446
        %v1828 = vunpack.c.l.b16 %v447
        %v1829 = vunpack.c.h.b16 %v447
        %v1830 = vunpack.c.l.b16 %v448
        %v1831 = vunpack.c.h.b16 %v448
        %v1832 = vunpack.c.l.b16 %v449
        %v1833 = vunpack.c.h.b16 %v449
        %v1834 = vunpack.c.l.b16 %v450
        %v1835 = vunpack.c.h.b16 %v450
        %v1836 = vunpack.c.l.b16 %v451
        %v1837 = vunpack.c.h.b16 %v451
        %v1838 = vunpack.c.l.b16 %v452
        %v1839 = vunpack.c.h.b16 %v452
        %v1840 = vunpack.c.l.b16 %v453
        %v1841 = vunpack.c.h.b16 %v453
        %v1842 = vunpack.c.l.b16 %v454
        %v1843 = vunpack.c.h.b16 %v454
        %v1844 = vunpack.c.l.b16 %v455
        %v1845 = vunpack.c.h.b16 %v455
        %v1846 = vunpack.c.l.b16 %v456
        %v1847 = vunpack.c.h.b16 %v456
        %v1848 = vunpack.c.l.b16 %v457
        %v1849 = vunpack.c.h.b16 %v457
        %v1850 = vunpack.c.l.b16 %v458
        %v1851 = vunpack.c.h.b16 %v458
        %v1852 = vunpack.c.l.b16 %v459
        %v1853 = vunpack.c.h.b16 %v459
        %v1854 = vunpack.c.l.b16 %v460
        %v1855 = vunpack.c.h.b16 %v460
        %v1856 = vunpack.c.l.b16 %v461
        %v1857 = vunpack.c.h.b16 %v461
        %v1858 = vunpack.c.l.b16 %v462
        %v1859 = vunpack.c.h.b16 %v462
        %v1860 = vunpack.c.l.b16 %v463
        %v1861 = vunpack.c.h.b16 %v463
        %v1862 = vunpack.c.l.b16 %v464
        %v1863 = vunpack.c.h.b16 %v464
        %v1864 = vunpack.c.l.b16 %v465
        %v1865 = vunpack.c.h.b16 %v465
        %v1866 = vunpack.c.l.b16 %v466
        %v1867 = vunpack.c.h.b16 %v466
        %v1868 = vunpack.c.l.b16 %v467
        %v1869 = vunpack.c.h.b16 %v467
        %v1870 = vunpack.c.l.b16 %v468
        %v1871 = vunpack.c.h.b16 %v468
        %v1872 = vunpack.c.l.b16 %v469
        %v1873 = vunpack.c.h.b16 %v469
        %v1874 = vunpack.c.l.b16 %v470
        %v1875 = vunpack.c.h.b16 %v470
        %v1876 = vunpack.c.l.b16 %v471
        %v1877 = vunpack.c.h.b16 %v471
        %v1878 = vunpack.c.l.b16 %v472
        %v1879 = vunpack.c.h.b16 %v472
        %v1880 = vunpack.c.l.b16 %v473
        %v1881 = vunpack.c.h.b16 %v473
        %v1882 = vunpack.c.l.b16 %v474
        %v1883 = vunpack.c.h.b16 %v474
        %v1884 = vunpack.c.l.b16 %v475
        %v1885 = vunpack.c.h.b16 %v475
        %v1886 = vunpack.c.l.b16 %v476
        %v1887 = vunpack.c.h.b16 %v476
        %v1888 = vunpack.c.l.b16 %v477
        %v1889 = vunpack.c.h.b16 %v477
        %v1890 = vunpack.c.l.b16 %v478
        %v1891 = vunpack.c.h.b16 %v478
        %v1892 = vunpack.c.l.b16 %v479
        %v1893 = vunpack.c.h.b16 %v479
        %v1894 = vunpack.c.l.b16 %v480
        %v1895 = vunpack.c.h.b16 %v480
        %v1896 = vunpack.c.l.b16 %v481
        %v1897 = vunpack.c.h.b16 %v481
        %v1898 = vunpack.c.l.b16 %v482
        %v1899 = vunpack.c.h.b16 %v482
        %v1900 = vunpack.c.l.b16 %v483
        %v1901 = vunpack.c.h.b16 %v483
        %v1902 = vunpack.c.l.b16 %v484
        %v1903 = vunpack.c.h.b16 %v484
        %v1904 = vunpack.c.l.b16 %v485
        %v1905 = vunpack.c.h.b16 %v485
        %v1906 = vunpack.c.l.b16 %v486
        %v1907 = vunpack.c.h.b16 %v486
        %v1908 = vunpack.c.l.b16 %v487
        %v1909 = vunpack.c.h.b16 %v487
        %v1910 = vunpack.c.l.b16 %v488
        %v1911 = vunpack.c.h.b16 %v488
        %v1912 = vunpack.c.l.b16 %v489
        %v1913 = vunpack.c.h.b16 %v489
        %v1914 = vunpack.c.l.b16 %v490
        %v1915 = vunpack.c.h.b16 %v490
        %v1916 = vunpack.c.l.b16 %v491
        %v1917 = vunpack.c.h.b16 %v491
        %v1918 = vunpack.c.l.b16 %v492
        %v1919 = vunpack.c.h.b16 %v492
        %v1920 = vunpack.c.l.b16 %v493
        %v1921 = vunpack.c.h.b16 %v493
        %v1922 = vunpack.c.l.b16 %v494
        %v1923 = vunpack.c.h.b16 %v494
        %v1924 = vunpack.c.l.b16 %v495
        %v1925 = vunpack.c.h.b16 %v495
        %v1926 = vunpack.c.l.b16 %v496
        %v1927 = vunpack.c.h.b16 %v496
        %v1928 = vunpack.c.l.b16 %v497
        %v1929 = vunpack.c.h.b16 %v497
        %v1930 = vunpack.c.l.b16 %v498
        %v1931 = vunpack.c.h.b16 %v498
        %v1932 = vunpack.c.l.b16 %v499
        %v1933 = vunpack.c.h.b16 %v499
        %v1934 = vunpack.c.l.b16 %v500
        %v1935 = vunpack.c.h.b16 %v500
        %v1936 = vunpack.c.l.b16 %v501
        %v1937 = vunpack.c.h.b16 %v501
        %v1938 = vunpack.c.l.b16 %v502
        %v1939 = vunpack.c.h.b16 %v502
        %v1940 = vunpack.c.l.b16 %v503
        %v1941 = vunpack.c.h.b16 %v503
        %v1942 = vunpack.c.l.b16 %v504
        %v1943 = vunpack.c.h.b16 %v504
        %v1944 = vunpack.c.l.b16 %v505
        %v1945 = vunpack.c.h.b16 %v505
        %v1946 = vunpack.c.l.b16 %v506
        %v1947 = vunpack.c.h.b16 %v506
        %v1948 = vunpack.c.l.b16 %v507
        %v1949 = vunpack.c.h.b16 %v507
        %v1950 = vunpack.c.l.b16 %v508
        %v1951 = vunpack.c.h.b16 %v508
        %v1952 = vunpack.c.l.b16 %v509
        %v1953 = vunpack.c.h.b16 %v509
        %v1954 = vunpack.c.l.b16 %v510
        %v1955 = vunpack.c.h.b16 %v510
        %v1956 = vunpack.c.l.b16 %v511
        %v1957 = vunpack.c.h.b16 %v511
        %v1958 = vunpack.c.l.b16 %v512
        %v1959 = vunpack.c.h.b16 %v512
        %v1960 = vunpack.c.l.b16 %v513
        %v1961 = vunpack.c.h.b16 %v513
        %v1962 = vunpack.c.l.b16 %v514
        %v1963 = vunpack.c.h.b16 %v514
        %v1964 = vunpack.c.l.b16 %v515
        %v1965 = vunpack.c.h.b16 %v515
        %v1966 = vunpack.c.l.b16 %v516
        %v1967 = vunpack.c.h.b16 %v516
        %v1968 = vunpack.c.l.b16 %v517
        %v1969 = vunpack.c.h.b16 %v517
        %v1970 = vunpack.c.l.b16 %v518
        %v1971 = vunpack.c.h.b16 %v518
        %v1972 = vunpack.c.l.b16 %v519
        %v1973 = vunpack.c.h.b16 %v519
        %v1974 = vunpack.c.l.b16 %v520
        %v1975 = vunpack.c.h.b16 %v520
        %v1976 = vunpack.c.l.b16 %v521
        %v1977 = vunpack.c.h.b16 %v521
        %v1978 = vunpack.c.l.b16 %v522
        %v1979 = vunpack.c.h.b16 %v522
        %v1980 = vunpack.c.l.b16 %v523
        %v1981 = vunpack.c.h.b16 %v523
        %v1982 = vunpack.c.l.b16 %v524
        %v1983 = vunpack.c.h.b16 %v524
        %v1984 = vunpack.c.l.b16 %v525
        %v1985 = vunpack.c.h.b16 %v525
        %v1986 = vunpack.c.l.b16 %v526
        %v1987 = vunpack.c.h.b16 %v526
        %v1988 = vunpack.c.l.b16 %v527
        %v1989 = vunpack.c.h.b16 %v527
        %v1990 = vunpack.c.l.b16 %v528
        %v1991 = vunpack.c.h.b16 %v528
        %v1992 = vunpack.c.l.b16 %v529
        %v1993 = vunpack.c.h.b16 %v529
        %v1994 = vunpack.c.l.b16 %v530
        %v1995 = vunpack.c.h.b16 %v530
        %v1996 = vunpack.c.l.b16 %v531
        %v1997 = vunpack.c.h.b16 %v531
        %v1998 = vunpack.c.l.b16 %v532
        %v1999 = vunpack.c.h.b16 %v532
        %v2000 = vunpack.c.l.b16 %v533
        %v2001 = vunpack.c.h.b16 %v533
        %v2002 = vunpack.c.l.b16 %v534
        %v2003 = vunpack.c.h.b16 %v534
        %v2004 = vunpack.c.l.b16 %v535
        %v2005 = vunpack.c.h.b16 %v535
        %v2006 = vunpack.c.l.b16 %v536
        %v2007 = vunpack.c.h.b16 %v536
        %v2008 = vunpack.c.l.b16 %v537
        %v2009 = vunpack.c.h.b16 %v537
        %v2010 = vunpack.c.l.b16 %v538
        %v2011 = vunpack.c.h.b16 %v538
        %v2012 = vunpack.c.l.b16 %v539
        %v2013 = vunpack.c.h.b16 %v539
        %v2014 = vunpack.c.l.b16 %v540
        %v2015 = vunpack.c.h.b16 %v540
        %v2016 = vunpack.c.l.b16 %v541
        %v2017 = vunpack.c.h.b16 %v541
        %v2018 = vunpack.c.l.b16 %v542
        %v2019 = vunpack.c.h.b16 %v542
        %v2020 = vunpack.c.l.b16 %v543
        %v2021 = vunpack.c.h.b16 %v543
        %v2022 = vunpack.c.l.b16 %v544
        %v2023 = vunpack.c.h.b16 %v544
        %v2024 = vunpack.c.l.b16 %v545
        %v2025 = vunpack.c.h.b16 %v545
        %v2026 = vunpack.c.l.b16 %v546
        %v2027 = vunpack.c.h.b16 %v546
        %v2028 = vunpack.c.l.b16 %v547
        %v2029 = vunpack.c.h.b16 %v547
        %v2030 = vunpack.c.l.b16 %v548
        %v2031 = vunpack.c.h.b16 %v548
        %v2032 = vunpack.c.l.b16 %v549
        %v2033 = vunpack.c.h.b16 %v549
        %v2034 = vunpack.c.l.b16 %v550
        %v2035 = vunpack.c.h.b16 %v550
        %v2036 = vunpack.c.l.b16 %v551
        %v2037 = vunpack.c.h.b16 %v551
        %v2038 = vunpack.c.l.b16 %v552
        %v2039 = vunpack.c.h.b16 %v552
        %v2040 = vunpack.c.l.b16 %v553
        %v2041 = vunpack.c.h.b16 %v553
        %v2042 = vunpack.c.l.b16 %v554
        %v2043 = vunpack.c.h.b16 %v554
        %v2044 = vunpack.c.l.b16 %v555
        %v2045 = vunpack.c.h.b16 %v555
        %v2046 = vunpack.c.l.b16 %v556
        %v2047 = vunpack.c.h.b16 %v556
        %v2048 = vunpack.c.l.b16 %v557
        %v2049 = vunpack.c.h.b16 %v557
        %v2050 = vunpack.c.l.b16 %v558
        %v2051 = vunpack.c.h.b16 %v558
        %v2052 = vunpack.c.l.b16 %v559
        %v2053 = vunpack.c.h.b16 %v559
        %v2054 = vunpack.c.l.b16 %v560
        %v2055 = vunpack.c.h.b16 %v560
        %v2056 = vunpack.c.l.b16 %v561
        %v2057 = vunpack.c.h.b16 %v561
        %v2058 = vunpack.c.l.b16 %v562
        %v2059 = vunpack.c.h.b16 %v562
        %v2060 = vunpack.c.l.b16 %v563
        %v2061 = vunpack.c.h.b16 %v563
        %v2062 = vunpack.c.l.b16 %v564
        %v2063 = vunpack.c.h.b16 %v564
        %v2064 = vunpack.c.l.b16 %v565
        %v2065 = vunpack.c.h.b16 %v565
        %v2066 = vunpack.c.l.b16 %v566
        %v2067 = vunpack.c.h.b16 %v566
        %v2068 = vunpack.c.l.b16 %v567
        %v2069 = vunpack.c.h.b16 %v567
        %v2070 = vunpack.c.l.b16 %v568
        %v2071 = vunpack.c.h.b16 %v568
        %v2072 = vunpack.c.l.b16 %v569
        %v2073 = vunpack.c.h.b16 %v569
        %v2074 = vunpack.c.l.b16 %v570
        %v2075 = vunpack.c.h.b16 %v570
        %v2076 = vunpack.c.l.b16 %v571
        %v2077 = vunpack.c.h.b16 %v571
        %v2078 = vunpack.c.l.b16 %v572
        %v2079 = vunpack.c.h.b16 %v572
        %v2080 = vunpack.c.l.b16 %v573
        %v2081 = vunpack.c.h.b16 %v573
        %v2082 = vunpack.c.l.b16 %v574
        %v2083 = vunpack.c.h.b16 %v574
        %v2084 = vunpack.c.l.b16 %v575
        %v2085 = vunpack.c.h.b16 %v575
        %v2086 = vunpack.c.l.b16 %v576
        %v2087 = vunpack.c.h.b16 %v576
        %v2088 = vunpack.c.l.b16 %v577
        %v2089 = vunpack.c.h.b16 %v577
        %v2090 = vunpack.c.l.b16 %v578
        %v2091 = vunpack.c.h.b16 %v578
        %v2092 = vunpack.c.l.b16 %v579
        %v2093 = vunpack.c.h.b16 %v579
        %v2094 = vunpack.c.l.b16 %v580
        %v2095 = vunpack.c.h.b16 %v580
        %v2096 = vunpack.c.l.b16 %v581
        %v2097 = vunpack.c.h.b16 %v581
        %v2098 = vunpack.c.l.b16 %v582
        %v2099 = vunpack.c.h.b16 %v582
        %v2100 = vunpack.c.l.b16 %v583
        %v2101 = vunpack.c.h.b16 %v583
        %v2102 = vunpack.c.l.b16 %v584
        %v2103 = vunpack.c.h.b16 %v584
        %v2104 = vunpack.c.l.b16 %v585
        %v2105 = vunpack.c.h.b16 %v585
        %v2106 = vunpack.c.l.b16 %v586
        %v2107 = vunpack.c.h.b16 %v586
        %v2108 = vunpack.c.l.b16 %v587
        %v2109 = vunpack.c.h.b16 %v587
        %v2110 = vunpack.c.l.b16 %v588
        %v2111 = vunpack.c.h.b16 %v588
        %v2112 = vunpack.c.l.b16 %v589
        %v2113 = vunpack.c.h.b16 %v589
        %v2114 = vunpack.c.l.b16 %v590
        %v2115 = vunpack.c.h.b16 %v590
        %v2116 = vunpack.c.l.b16 %v591
        %v2117 = vunpack.c.h.b16 %v591
        %v2118 = vunpack.c.l.b16 %v592
        %v2119 = vunpack.c.h.b16 %v592
        %v2120 = vunpack.c.l.b16 %v593
        %v2121 = vunpack.c.h.b16 %v593
        %v2122 = vunpack.c.l.b16 %v594
        %v2123 = vunpack.c.h.b16 %v594
        %v2124 = vunpack.c.l.b16 %v595
        %v2125 = vunpack.c.h.b16 %v595
        %v2126 = vunpack.c.l.b16 %v596
        %v2127 = vunpack.c.h.b16 %v596
        %v2128 = vunpack.c.l.b16 %v597
        %v2129 = vunpack.c.h.b16 %v597
        %v2130 = vunpack.c.l.b16 %v598
        %v2131 = vunpack.c.h.b16 %v598
        %v2132 = vunpack.c.l.b16 %v599
        %v2133 = vunpack.c.h.b16 %v599
        %v2134 = vunpack.c.l.b16 %v600
        %v2135 = vunpack.c.h.b16 %v600
        %v2136 = vunpack.c.l.b16 %v601
        %v2137 = vunpack.c.h.b16 %v601
        %v2138 = vunpack.c.l.b16 %v602
        %v2139 = vunpack.c.h.b16 %v602
        %v2140 = vunpack.c.l.b16 %v603
        %v2141 = vunpack.c.h.b16 %v603
        %v2142 = vunpack.c.l.b16 %v604
        %v2143 = vunpack.c.h.b16 %v604
        %v2144 = vunpack.c.l.b16 %v605
        %v2145 = vunpack.c.h.b16 %v605
        %v2146 = vunpack.c.l.b16 %v606
        %v2147 = vunpack.c.h.b16 %v606
        %v2148 = vunpack.c.l.b16 %v607
        %v2149 = vunpack.c.h.b16 %v607
        %v2150 = vunpack.c.l.b16 %v608
        %v2151 = vunpack.c.h.b16 %v608
        %v2152 = vunpack.c.l.b16 %v609
        %v2153 = vunpack.c.h.b16 %v609
        %v2154 = vunpack.c.l.b16 %v610
        %v2155 = vunpack.c.h.b16 %v610
        %v2156 = vunpack.c.l.b16 %v611
        %v2157 = vunpack.c.h.b16 %v611
        %v2158 = vunpack.c.l.b16 %v612
        %v2159 = vunpack.c.h.b16 %v612
        %v2160 = vunpack.c.l.b16 %v613
        %v2161 = vunpack.c.h.b16 %v613
        %v2162 = vunpack.c.l.b16 %v614
        %v2163 = vunpack.c.h.b16 %v614
        %v2164 = vunpack.c.l.b16 %v615
        %v2165 = vunpack.c.h.b16 %v615
        %v2166 = vunpack.c.l.b16 %v616
        %v2167 = vunpack.c.h.b16 %v616
        %v2168 = vunpack.c.l.b16 %v617
        %v2169 = vunpack.c.h.b16 %v617
        %v2170 = vunpack.c.l.b16 %v618
        %v2171 = vunpack.c.h.b16 %v618
        %v2172 = vunpack.c.l.b16 %v619
        %v2173 = vunpack.c.h.b16 %v619
        %v2174 = vunpack.c.l.b16 %v620
        %v2175 = vunpack.c.h.b16 %v620
        %v2176 = vunpack.c.l.b16 %v621
        %v2177 = vunpack.c.h.b16 %v621
        %v2178 = vunpack.c.l.b16 %v622
        %v2179 = vunpack.c.h.b16 %v622
        %v2180 = vunpack.c.l.b16 %v623
        %v2181 = vunpack.c.h.b16 %v623
        %v2182 = vunpack.c.l.b16 %v624
        %v2183 = vunpack.c.h.b16 %v624
        %v2184 = vunpack.c.l.b16 %v625
        %v2185 = vunpack.c.h.b16 %v625
        %v2186 = vunpack.c.l.b16 %v626
        %v2187 = vunpack.c.h.b16 %v626
        %v2188 = vunpack.c.l.b16 %v627
        %v2189 = vunpack.c.h.b16 %v627
        %v2190 = vunpack.c.l.b16 %v628
        %v2191 = vunpack.c.h.b16 %v628
        %v2192 = vunpack.c.l.b16 %v629
        %v2193 = vunpack.c.h.b16 %v629
        %v2194 = vunpack.c.l.b16 %v630
        %v2195 = vunpack.c.h.b16 %v630
        %v2196 = vunpack.c.l.b16 %v631
        %v2197 = vunpack.c.h.b16 %v631
        %v2198 = vunpack.c.l.b16 %v632
        %v2199 = vunpack.c.h.b16 %v632
        %v2200 = vunpack.c.l.b16 %v633
        %v2201 = vunpack.c.h.b16 %v633
        %v2202 = vunpack.c.l.b16 %v634
        %v2203 = vunpack.c.h.b16 %v634
        %v2204 = vunpack.c.l.b16 %v635
        %v2205 = vunpack.c.h.b16 %v635
        %v2206 = vunpack.c.l.b16 %v636
        %v2207 = vunpack.c.h.b16 %v636
        %v2208 = vunpack.c.l.b16 %v637
        %v2209 = vunpack.c.h.b16 %v637
        %v2210 = vunpack.c.l.b16 %v638
        %v2211 = vunpack.c.h.b16 %v638
        %v2212 = vunpack.c.l.b16 %v639
        %v2213 = vunpack.c.h.b16 %v639
        %v2214 = vunpack.c.l.b16 %v640
        %v2215 = vunpack.c.h.b16 %v640
        %v2216 = vunpack.c.l.b16 %v641
        %v2217 = vunpack.c.h.b16 %v641
        %v2218 = vunpack.c.l.b16 %v642
        %v2219 = vunpack.c.h.b16 %v642
        %v2220 = vunpack.c.l.b16 %v643
        %v2221 = vunpack.c.h.b16 %v643
        %v2222 = vunpack.c.l.b16 %v644
        %v2223 = vunpack.c.h.b16 %v644
        %v2224 = vunpack.c.l.b16 %v645
        %v2225 = vunpack.c.h.b16 %v645
        %v2226 = vunpack.c.l.b16 %v646
        %v2227 = vunpack.c.h.b16 %v646
        %v2228 = vunpack.c.l.b16 %v647
        %v2229 = vunpack.c.h.b16 %v647
        %v2230 = vunpack.c.l.b16 %v648
        %v2231 = vunpack.c.h.b16 %v648
        %v2232 = vunpack.c.l.b16 %v649
        %v2233 = vunpack.c.h.b16 %v649
        %v2234 = vunpack.c.l.b16 %v650
        %v2235 = vunpack.c.h.b16 %v650
        %v2236 = vunpack.c.l.b16 %v651
        %v2237 = vunpack.c.h.b16 %v651
        %v2238 = vunpack.c.l.b16 %v652
        %v2239 = vunpack.c.h.b16 %v652
        %v2240 = vunpack.c.l.b16 %v653
        %v2241 = vunpack.c.h.b16 %v653
        %v2242 = vunpack.c.l.b16 %v654
        %v2243 = vunpack.c.h.b16 %v654
        %v2244 = vunpack.c.l.b16 %v655
        %v2245 = vunpack.c.h.b16 %v655
        %v2246 = vunpack.c.l.b16 %v656
        %v2247 = vunpack.c.h.b16 %v656
        %v2248 = vunpack.c.l.b16 %v657
        %v2249 = vunpack.c.h.b16 %v657
        %v2250 = vunpack.c.l.b16 %v658
        %v2251 = vunpack.c.h.b16 %v658
        %v2252 = vunpack.c.l.b16 %v659
        %v2253 = vunpack.c.h.b16 %v659
        %v2254 = vunpack.c.l.b16 %v660
        %v2255 = vunpack.c.h.b16 %v660
        %v2256 = vunpack.c.l.b16 %v661
        %v2257 = vunpack.c.h.b16 %v661
        %v2258 = vunpack.c.l.b16 %v662
        %v2259 = vunpack.c.h.b16 %v662
        %v2260 = vunpack.c.l.b16 %v663
        %v2261 = vunpack.c.h.b16 %v663
        %v2262 = vunpack.c.l.b16 %v664
        %v2263 = vunpack.c.h.b16 %v664
        %v2264 = vunpack.c.l.b16 %v665
        %v2265 = vunpack.c.h.b16 %v665
        %v2266 = vunpack.c.l.b16 %v666
        %v2267 = vunpack.c.h.b16 %v666
        %v2268 = vunpack.c.l.b16 %v667
        %v2269 = vunpack.c.h.b16 %v667
        %v2270 = vunpack.c.l.b16 %v668
        %v2271 = vunpack.c.h.b16 %v668
        %v2272 = vunpack.c.l.b16 %v669
        %v2273 = vunpack.c.h.b16 %v669
        %v2274 = vunpack.c.l.b16 %v670
        %v2275 = vunpack.c.h.b16 %v670
        %v2276 = vunpack.c.l.b16 %v671
        %v2277 = vunpack.c.h.b16 %v671
        %v2278 = vunpack.c.l.b16 %v672
        %v2279 = vunpack.c.h.b16 %v672
        %v2280 = vunpack.c.l.b16 %v673
        %v2281 = vunpack.c.h.b16 %v673
        %v2282 = vunpack.c.l.b16 %v674
        %v2283 = vunpack.c.h.b16 %v674
        %v2284 = vunpack.c.l.b16 %v675
        %v2285 = vunpack.c.h.b16 %v675
        %v2286 = vunpack.c.l.b16 %v676
        %v2287 = vunpack.c.h.b16 %v676
        %v2288 = vunpack.c.l.b16 %v677
        %v2289 = vunpack.c.h.b16 %v677
        %v2290 = vunpack.c.l.b16 %v678
        %v2291 = vunpack.c.h.b16 %v678
        %v2292 = vunpack.c.l.b16 %v679
        %v2293 = vunpack.c.h.b16 %v679
        %v2294 = vunpack.c.l.b16 %v680
        %v2295 = vunpack.c.h.b16 %v680
        %v2296 = vunpack.c.l.b16 %v681
        %v2297 = vunpack.c.h.b16 %v681
        %v2298 = vunpack.c.l.b16 %v682
        %v2299 = vunpack.c.h.b16 %v682
        %v2300 = vunpack.c.l.b16 %v683
        %v2301 = vunpack.c.h.b16 %v683
        %v2302 = vunpack.c.l.b16 %v684
        %v2303 = vunpack.c.h.b16 %v684
        %v2304 = vunpack.c.l.b16 %v685
        %v2305 = vunpack.c.h.b16 %v685
        %v2306 = vunpack.c.l.b16 %v686
        %v2307 = vunpack.c.h.b16 %v686
        %v2308 = vunpack.c.l.b16 %v687
        %v2309 = vunpack.c.h.b16 %v687
        %v2310 = vunpack.c.l.b16 %v688
        %v2311 = vunpack.c.h.b16 %v688
        %v2312 = vunpack.c.l.b16 %v689
        %v2313 = vunpack.c.h.b16 %v689
        %v2314 = vunpack.c.l.b16 %v690
        %v2315 = vunpack.c.h.b16 %v690
        %v2316 = vunpack.c.l.b16 %v691
        %v2317 = vunpack.c.h.b16 %v691
        %v2318 = vunpack.c.l.b16 %v692
        %v2319 = vunpack.c.h.b16 %v692
        %v2320 = vunpack.c.l.b16 %v693
        %v2321 = vunpack.c.h.b16 %v693
        %v2322 = vunpack.c.l.b16 %v694
        %v2323 = vunpack.c.h.b16 %v694
        %v2324 = vunpack.c.l.b16 %v695
        %v2325 = vunpack.c.h.b16 %v695
        %v2326 = vunpack.c.l.b16 %v696
        %v2327 = vunpack.c.h.b16 %v696
        %v2328 = vunpack.c.l.b16 %v697
        %v2329 = vunpack.c.h.b16 %v697
        %v2330 = vunpack.c.l.b16 %v698
        %v2331 = vunpack.c.h.b16 %v698
        %v2332 = vunpack.c.l.b16 %v699
        %v2333 = vunpack.c.h.b16 %v699
        %v2334 = vunpack.c.l.b16 %v700
        %v2335 = vunpack.c.h.b16 %v700
        %v2336 = vunpack.c.l.b16 %v701
        %v2337 = vunpack.c.h.b16 %v701
        %v2338 = vunpack.c.l.b16 %v702
        %v2339 = vunpack.c.h.b16 %v702
        %v2340 = vunpack.c.l.b16 %v703
        %v2341 = vunpack.c.h.b16 %v703
        %v2342 = vunpack.c.l.b16 %v704
        %v2343 = vunpack.c.h.b16 %v704
        %v2344 = vunpack.c.l.b16 %v705
        %v2345 = vunpack.c.h.b16 %v705
        %v2346 = vunpack.c.l.b16 %v706
        %v2347 = vunpack.c.h.b16 %v706
        %v2348 = vunpack.c.l.b16 %v707
        %v2349 = vunpack.c.h.b16 %v707
        %v2350 = vunpack.c.l.b16 %v708
        %v2351 = vunpack.c.h.b16 %v708
        %v2352 = vunpack.c.l.b16 %v709
        %v2353 = vunpack.c.h.b16 %v709
        %v2354 = vunpack.c.l.b16 %v710
        %v2355 = vunpack.c.h.b16 %v710
        %v2356 = vunpack.c.l.b16 %v711
        %v2357 = vunpack.c.h.b16 %v711
        %v2358 = vunpack.c.l.b16 %v712
        %v2359 = vunpack.c.h.b16 %v712
        %v2360 = vunpack.c.l.b16 %v713
        %v2361 = vunpack.c.h.b16 %v713
        %v2362 = vunpack.c.l.b16 %v714
        %v2363 = vunpack.c.h.b16 %v714
        %v2364 = vunpack.c.l.b16 %v715
        %v2365 = vunpack.c.h.b16 %v715
        %v2366 = vunpack.c.l.b16 %v716
        %v2367 = vunpack.c.h.b16 %v716
        %v2368 = vunpack.c.l.b16 %v717
        %v2369 = vunpack.c.h.b16 %v717
        %v2370 = vunpack.c.l.b16 %v718
        %v2371 = vunpack.c.h.b16 %v718
        %v2372 = vunpack.c.l.b16 %v719
        %v2373 = vunpack.c.h.b16 %v719
        %v2374 = vunpack.c.l.b16 %v720
        %v2375 = vunpack.c.h.b16 %v720
        %v2376 = vunpack.c.l.b16 %v721
        %v2377 = vunpack.c.h.b16 %v721
        %v2378 = vunpack.c.l.b16 %v722
        %v2379 = vunpack.c.h.b16 %v722
        %v2380 = vunpack.c.l.b16 %v723
        %v2381 = vunpack.c.h.b16 %v723
        %v2382 = vunpack.c.l.b16 %v724
        %v2383 = vunpack.c.h.b16 %v724
        %v2384 = vunpack.c.l.b16 %v725
        %v2385 = vunpack.c.h.b16 %v725
        %v2386 = vunpack.c.l.b16 %v726
        %v2387 = vunpack.c.h.b16 %v726
        %v2388 = vunpack.c.l.b16 %v727
        %v2389 = vunpack.c.h.b16 %v727
        %v2390 = vunpack.c.l.b16 %v728
        %v2391 = vunpack.c.h.b16 %v728
        %v2392 = vunpack.c.l.b16 %v729
        %v2393 = vunpack.c.h.b16 %v729
        %v2394 = vunpack.c.l.b16 %v730
        %v2395 = vunpack.c.h.b16 %v730
        %v2396 = vunpack.c.l.b16 %v731
        %v2397 = vunpack.c.h.b16 %v731
        %v2398 = vunpack.c.l.b16 %v732
        %v2399 = vunpack.c.h.b16 %v732
        %v2400 = vunpack.c.l.b16 %v733
        %v2401 = vunpack.c.h.b16 %v733
        %v2402 = vunpack.c.l.b16 %v734
        %v2403 = vunpack.c.h.b16 %v734
        %v2404 = vunpack.c.l.b16 %v735
        %v2405 = vunpack.c.h.b16 %v735
        %v2406 = vunpack.c.l.b16 %v736
        %v2407 = vunpack.c.h.b16 %v736
        %v2408 = vunpack.c.l.b16 %v737
        %v2409 = vunpack.c.h.b16 %v737
        %v2410 = vunpack.c.l.b16 %v738
        %v2411 = vunpack.c.h.b16 %v738
        %v2412 = vunpack.c.l.b16 %v739
        %v2413 = vunpack.c.h.b16 %v739
        %v2414 = vunpack.c.l.b16 %v740
        %v2415 = vunpack.c.h.b16 %v740
        %v2416 = vunpack.c.l.b16 %v741
        %v2417 = vunpack.c.h.b16 %v741
        %v2418 = vunpack.c.l.b16 %v742
        %v2419 = vunpack.c.h.b16 %v742
        %v2420 = vunpack.c.l.b16 %v743
        %v2421 = vunpack.c.h.b16 %v743
        %v2422 = vunpack.c.l.b16 %v744
        %v2423 = vunpack.c.h.b16 %v744
        %v2424 = vunpack.c.l.b16 %v745
        %v2425 = vunpack.c.h.b16 %v745
        %v2426 = vpack.c.b16 %v1466, %v1402
        %v2427 = vpack.c.b16 %v1467, %v1403
        %v2428 = vpack.c.b16 %v1468, %v1404
        %v2429 = vpack.c.b16 %v1469, %v1405
        %v2430 = vpack.c.b16 %v1470, %v1406
        %v2431 = vpack.c.b16 %v1471, %v1407
        %v2432 = vpack.c.b16 %v1472, %v1408
        %v2433 = vpack.c.b16 %v1473, %v1409
        %v2434 = vpack.c.b16 %v1474, %v1410
        %v2435 = vpack.c.b16 %v1475, %v1411
        %v2436 = vpack.c.b16 %v1476, %v1412
        %v2437 = vpack.c.b16 %v1477, %v1413
        %v2438 = vpack.c.b16 %v1478, %v1414
        %v2439 = vpack.c.b16 %v1479, %v1415
        %v2440 = vpack.c.b16 %v1480, %v1416
        %v2441 = vpack.c.b16 %v1481, %v1417
        %v2442 = vpack.c.b16 %v1482, %v1418
        %v2443 = vpack.c.b16 %v1483, %v1419
        %v2444 = vpack.c.b16 %v1484, %v1420
        %v2445 = vpack.c.b16 %v1485, %v1421
        %v2446 = vpack.c.b16 %v1486, %v1422
        %v2447 = vpack.c.b16 %v1487, %v1423
        %v2448 = vpack.c.b16 %v1488, %v1424
        %v2449 = vpack.c.b16 %v1489, %v1425
        %v2450 = vpack.c.b16 %v1490, %v1426
        %v2451 = vpack.c.b16 %v1491, %v1427
        %v2452 = vpack.c.b16 %v1492, %v1428
        %v2453 = vpack.c.b16 %v1493, %v1429
        %v2454 = vpack.c.b16 %v1494, %v1430
        %v2455 = vpack.c.b16 %v1495, %v1431
        %v2456 = vpack.c.b16 %v1496, %v1432
        %v2457 = vpack.c.b16 %v1497, %v1433
        %v2458 = vpack.c.b16 %v1498, %v1434
        %v2459 = vpack.c.b16 %v1499, %v1435
        %v2460 = vpack.c.b16 %v1500, %v1436
        %v2461 = vpack.c.b16 %v1501, %v1437
        %v2462 = vpack.c.b16 %v1502, %v1438
        %v2463 = vpack.c.b16 %v1503, %v1439
        %v2464 = vpack.c.b16 %v1504, %v1440
        %v2465 = vpack.c.b16 %v1505, %v1441
        %v2466 = vpack.c.b16 %v1506, %v1442
        %v2467 = vpack.c.b16 %v1507, %v1443
        %v2468 = vpack.c.b16 %v1508, %v1444
        %v2469 = vpack.c.b16 %v1509, %v1445
        %v2470 = vpack.c.b16 %v1510, %v1446
        %v2471 = vpack.c.b16 %v1511, %v1447
        %v2472 = vpack.c.b16 %v1512, %v1448
        %v2473 = vpack.c.b16 %v1513, %v1449
        %v2474 = vpack.c.b16 %v1514, %v1450
        %v2475 = vpack.c.b16 %v1515, %v1451
        %v2476 = vpack.c.b16 %v1516, %v1452
        %v2477 = vpack.c.b16 %v1517, %v1453
        %v2478 = vpack.c.b16 %v1518, %v1454
        %v2479 = vpack.c.b16 %v1519, %v1455
        %v2480 = vpack.c.b16 %v1520, %v1456
        %v2481 = vpack.c.b16 %v1521, %v1457
        %v2482 = vpack.c.b16 %v1522, %v1458
        %v2483 = vpack.c.b16 %v1523, %v1459
        %v2484 = vpack.c.b16 %v1524, %v1460
        %v2485 = vpack.c.b16 %v1525, %v1461
        %v2486 = vpack.c.b16 %v1526, %v1462
        %v2487 = vpack.c.b16 %v1527, %v1463
        %v2488 = vpack.c.b16 %v1528, %v1464
        %v2489 = vpack.c.b16 %v1529, %v1465
        %v2490 = vpack.c.b16 %v1594, %v1530
        %v2491 = vpack.c.b16 %v1595, %v1531
        %v2492 = vpack.c.b16 %v1596, %v1532
        %v2493 = vpack.c.b16 %v1597, %v1533
        %v2494 = vpack.c.b16 %v1598, %v1534
        %v2495 = vpack.c.b16 %v1599, %v1535
        %v2496 = vpack.c.b16 %v1600, %v1536
        %v2497 = vpack.c.b16 %v1601, %v1537
        %v2498 = vpack.c.b16 %v1602, %v1538
        %v2499 = vpack.c.b16 %v1603, %v1539
        %v2500 = vpack.c.b16 %v1604, %v1540
        %v2501 = vpack.c.b16 %v1605, %v1541
        %v2502 = vpack.c.b16 %v1606, %v1542
        %v2503 = vpack.c.b16 %v1607, %v1543
        %v2504 = vpack.c.b16 %v1608, %v1544
        %v2505 = vpack.c.b16 %v1609, %v1545
        %v2506 = vpack.c.b16 %v1610, %v1546
        %v2507 = vpack.c.b16 %v1611, %v1547
        %v2508 = vpack.c.b16 %v1612, %v1548
        %v2509 = vpack.c.b16 %v1613, %v1549
        %v2510 = vpack.c.b16 %v1614, %v1550
        %v2511 = vpack.c.b16 %v1615, %v1551
        %v2512 = vpack.c.b16 %v1616, %v1552
        %v2513 = vpack.c.b16 %v1617, %v1553
        %v2514 = vpack.c.b16 %v1618, %v1554
        %v2515 = vpack.c.b16 %v1619, %v1555
        %v2516 = vpack.c.b16 %v1620, %v1556
        %v2517 = vpack.c.b16 %v1621, %v1557
        %v2518 = vpack.c.b16 %v1622, %v1558
        %v2519 = vpack.c.b16 %v1623, %v1559
        %v2520 = vpack.c.b16 %v1624, %v1560
        %v2521 = vpack.c.b16 %v1625, %v1561
        %v2522 = vpack.c.b16 %v1626, %v1562
        %v2523 = vpack.c.b16 %v1627, %v1563
        %v2524 = vpack.c.b16 %v1628, %v1564
        %v2525 = vpack.c.b16 %v1629, %v1565
        %v2526 = vpack.c.b16 %v1630, %v1566
        %v2527 = vpack.c.b16 %v1631, %v1567
        %v2528 = vpack.c.b16 %v1632, %v1568
        %v2529 = vpack.c.b16 %v1633, %v1569
        %v2530 = vpack.c.b16 %v1634, %v1570
        %v2531 = vpack.c.b16 %v1635, %v1571
        %v2532 = vpack.c.b16 %v1636, %v1572
        %v2533 = vpack.c.b16 %v1637, %v1573
        %v2534 = vpack.c.b16 %v1638, %v1574
        %v2535 = vpack.c.b16 %v1639, %v1575
        %v2536 = vpack.c.b16 %v1640, %v1576
        %v2537 = vpack.c.b16 %v1641, %v1577
        %v2538 = vpack.c.b16 %v1642, %v1578
        %v2539 = vpack.c.b16 %v1643, %v1579
        %v2540 = vpack.c.b16 %v1644, %v1580
        %v2541 = vpack.c.b16 %v1645, %v1581
        %v2542 = vpack.c.b16 %v1646, %v1582
        %v2543 = vpack.c.b16 %v1647, %v1583
        %v2544 = vpack.c.b16 %v1648, %v1584
        %v2545 = vpack.c.b16 %v1649, %v1585
        %v2546 = vpack.c.b16 %v1650, %v1586
        %v2547 = vpack.c.b16 %v1651, %v1587
        %v2548 = vpack.c.b16 %v1652, %v1588
        %v2549 = vpack.c.b16 %v1653, %v1589
        %v2550 = vpack.c.b16 %v1654, %v1590
        %v2551 = vpack.c.b16 %v1655, %v1591
        %v2552 = vpack.c.b16 %v1656, %v1592
        %v2553 = vpack.c.b16 %v1657, %v1593
        %v2554 = vpack.c.b16 %v1722, %v1658
        %v2555 = vpack.c.b16 %v1723, %v1659
        %v2556 = vpack.c.b16 %v1724, %v1660
        %v2557 = vpack.c.b16 %v1725, %v1661
        %v2558 = vpack.c.b16 %v1726, %v1662
        %v2559 = vpack.c.b16 %v1727, %v1663
        %v2560 = vpack.c.b16 %v1728, %v1664
        %v2561 = vpack.c.b16 %v1729, %v1665
        %v2562 = vpack.c.b16 %v1730, %v1666
        %v2563 = vpack.c.b16 %v1731, %v1667
        %v2564 = vpack.c.b16 %v1732, %v1668
        %v2565 = vpack.c.b16 %v1733, %v1669
        %v2566 = vpack.c.b16 %v1734, %v1670
        %v2567 = vpack.c.b16 %v1735, %v1671
        %v2568 = vpack.c.b16 %v1736, %v1672
        %v2569 = vpack.c.b16 %v1737, %v1673
        %v2570 = vpack.c.b16 %v1738, %v1674
        %v2571 = vpack.c.b16 %v1739, %v1675
        %v2572 = vpack.c.b16 %v1740, %v1676
        %v2573 = vpack.c.b16 %v1741, %v1677
        %v2574 = vpack.c.b16 %v1742, %v1678
        %v2575 = vpack.c.b16 %v1743, %v1679
        %v2576 = vpack.c.b16 %v1744, %v1680
        %v2577 = vpack.c.b16 %v1745, %v1681
        %v2578 = vpack.c.b16 %v1746, %v1682
        %v2579 = vpack.c.b16 %v1747, %v1683
        %v2580 = vpack.c.b16 %v1748, %v1684
        %v2581 = vpack.c.b16 %v1749, %v1685
        %v2582 = vpack.c.b16 %v1750, %v1686
        %v2583 = vpack.c.b16 %v1751, %v1687
        %v2584 = vpack.c.b16 %v1752, %v1688
        %v2585 = vpack.c.b16 %v1753, %v1689
        %v2586 = vpack.c.b16 %v1754, %v1690
        %v2587 = vpack.c.b16 %v1755, %v1691
        %v2588 = vpack.c.b16 %v1756, %v1692
        %v2589 = vpack.c.b16 %v1757, %v1693
        %v2590 = vpack.c.b16 %v1758, %v1694
        %v2591 = vpack.c.b16 %v1759, %v1695
        %v2592 = vpack.c.b16 %v1760, %v1696
        %v2593 = vpack.c.b16 %v1761, %v1697
        %v2594 = vpack.c.b16 %v1762, %v1698
        %v2595 = vpack.c.b16 %v1763, %v1699
        %v2596 = vpack.c.b16 %v1764, %v1700
        %v2597 = vpack.c.b16 %v1765, %v1701
        %v2598 = vpack.c.b16 %v1766, %v1702
        %v2599 = vpack.c.b16 %v1767, %v1703
        %v2600 = vpack.c.b16 %v1768, %v1704
        %v2601 = vpack.c.b16 %v1769, %v1705
        %v2602 = vpack.c.b16 %v1770, %v1706
        %v2603 = vpack.c.b16 %v1771, %v1707
        %v2604 = vpack.c.b16 %v1772, %v1708
        %v2605 = vpack.c.b16 %v1773, %v1709
        %v2606 = vpack.c.b16 %v1774, %v1710
        %v2607 = vpack.c.b16 %v1775, %v1711
        %v2608 = vpack.c.b16 %v1776, %v1712
        %v2609 = vpack.c.b16 %v1777, %v1713
        %v2610 = vpack.c.b16 %v1778, %v1714
        %v2611 = vpack.c.b16 %v1779, %v1715
        %v2612 = vpack.c.b16 %v1780, %v1716
        %v2613 = vpack.c.b16 %v1781, %v1717
        %v2614 = vpack.c.b16 %v1782, %v1718
        %v2615 = vpack.c.b16 %v1783, %v1719
        %v2616 = vpack.c.b16 %v1784, %v1720
        %v2617 = vpack.c.b16 %v1785, %v1721
        %v2618 = vpack.c.b16 %v1850, %v1786
        %v2619 = vpack.c.b16 %v1851, %v1787
        %v2620 = vpack.c.b16 %v1852, %v1788
        %v2621 = vpack.c.b16 %v1853, %v1789
        %v2622 = vpack.c.b16 %v1854, %v1790
        %v2623 = vpack.c.b16 %v1855, %v1791
        %v2624 = vpack.c.b16 %v1856, %v1792
        %v2625 = vpack.c.b16 %v1857, %v1793
        %v2626 = vpack.c.b16 %v1858, %v1794
        %v2627 = vpack.c.b16 %v1859, %v1795
        %v2628 = vpack.c.b16 %v1860, %v1796
        %v2629 = vpack.c.b16 %v1861, %v1797
        %v2630 = vpack.c.b16 %v1862, %v1798
        %v2631 = vpack.c.b16 %v1863, %v1799
        %v2632 = vpack.c.b16 %v1864, %v1800
        %v2633 = vpack.c.b16 %v1865, %v1801
        %v2634 = vpack.c.b16 %v1866, %v1802
        %v2635 = vpack.c.b16 %v1867, %v1803
        %v2636 = vpack.c.b16 %v1868, %v1804
        %v2637 = vpack.c.b16 %v1869, %v1805
        %v2638 = vpack.c.b16 %v1870, %v1806
        %v2639 = vpack.c.b16 %v1871, %v1807
        %v2640 = vpack.c.b16 %v1872, %v1808
        %v2641 = vpack.c.b16 %v1873, %v1809
        %v2642 = vpack.c.b16 %v1874, %v1810
        %v2643 = vpack.c.b16 %v1875, %v1811
        %v2644 = vpack.c.b16 %v1876, %v1812
        %v2645 = vpack.c.b16 %v1877, %v1813
        %v2646 = vpack.c.b16 %v1878, %v1814
        %v2647 = vpack.c.b16 %v1879, %v1815
        %v2648 = vpack.c.b16 %v1880, %v1816
        %v2649 = vpack.c.b16 %v1881, %v1817
        %v2650 = vpack.c.b16 %v1882, %v1818
        %v2651 = vpack.c.b16 %v1883, %v1819
        %v2652 = vpack.c.b16 %v1884, %v1820
        %v2653 = vpack.c.b16 %v1885, %v1821
        %v2654 = vpack.c.b16 %v1886, %v1822
        %v2655 = vpack.c.b16 %v1887, %v1823
        %v2656 = vpack.c.b16 %v1888, %v1824
        %v2657 = vpack.c.b16 %v1889, %v1825
        %v2658 = vpack.c.b16 %v1890, %v1826
        %v2659 = vpack.c.b16 %v1891, %v1827
        %v2660 = vpack.c.b16 %v1892, %v1828
        %v2661 = vpack.c.b16 %v1893, %v1829
        %v2662 = vpack.c.b16 %v1894, %v1830
        %v2663 = vpack.c.b16 %v1895, %v1831
        %v2664 = vpack.c.b16 %v1896, %v1832
        %v2665 = vpack.c.b16 %v1897, %v1833
        %v2666 = vpack.c.b16 %v1898, %v1834
        %v2667 = vpack.c.b16 %v1899, %v1835
        %v2668 = vpack.c.b16 %v1900, %v1836
        %v2669 = vpack.c.b16 %v1901, %v1837
        %v2670 = vpack.c.b16 %v1902, %v1838
        %v2671 = vpack.c.b16 %v1903, %v1839
        %v2672 = vpack.c.b16 %v1904, %v1840
        %v2673 = vpack.c.b16 %v1905, %v1841
        %v2674 = vpack.c.b16 %v1906, %v1842
        %v2675 = vpack.c.b16 %v1907, %v1843
        %v2676 = vpack.c.b16 %v1908, %v1844
        %v2677 = vpack.c.b16 %v1909, %v1845
        %v2678 = vpack.c.b16 %v1910, %v1846
        %v2679 = vpack.c.b16 %v1911, %v1847
        %v2680 = vpack.c.b16 %v1912, %v1848
        %v2681 = vpack.c.b16 %v1913, %v1849
        %v2682 = vpack.c.b16 %v1978, %v1914
        %v2683 = vpack.c.b16 %v1979, %v1915
        %v2684 = vpack.c.b16 %v1980, %v1916
        %v2685 = vpack.c.b16 %v1981, %v1917
        %v2686 = vpack.c.b16 %v1982, %v1918
        %v2687 = vpack.c.b16 %v1983, %v1919
        %v2688 = vpack.c.b16 %v1984, %v1920
        %v2689 = vpack.c.b16 %v1985, %v1921
        %v2690 = vpack.c.b16 %v1986, %v1922
        %v2691 = vpack.c.b16 %v1987, %v1923
        %v2692 = vpack.c.b16 %v1988, %v1924
        %v2693 = vpack.c.b16 %v1989, %v1925
        %v2694 = vpack.c.b16 %v1990, %v1926
        %v2695 = vpack.c.b16 %v1991, %v1927
        %v2696 = vpack.c.b16 %v1992, %v1928
        %v2697 = vpack.c.b16 %v1993, %v1929
        %v2698 = vpack.c.b16 %v1994, %v1930
        %v2699 = vpack.c.b16 %v1995, %v1931
        %v2700 = vpack.c.b16 %v1996, %v1932
        %v2701 = vpack.c.b16 %v1997, %v1933
        %v2702 = vpack.c.b16 %v1998, %v1934
        %v2703 = vpack.c.b16 %v1999, %v1935
        %v2704 = vpack.c.b16 %v2000, %v1936
        %v2705 = vpack.c.b16 %v2001, %v1937
        %v2706 = vpack.c.b16 %v2002, %v1938
        %v2707 = vpack.c.b16 %v2003, %v1939
        %v2708 = vpack.c.b16 %v2004, %v1940
        %v2709 = vpack.c.b16 %v2005, %v1941
        %v2710 = vpack.c.b16 %v2006, %v1942
        %v2711 = vpack.c.b16 %v2007, %v1943
        %v2712 = vpack.c.b16 %v2008, %v1944
        %v2713 = vpack.c.b16 %v2009, %v1945
        %v2714 = vpack.c.b16 %v2010, %v1946
        %v2715 = vpack.c.b16 %v2011, %v1947
        %v2716 = vpack.c.b16 %v2012, %v1948
        %v2717 = vpack.c.b16 %v2013, %v1949
        %v2718 = vpack.c.b16 %v2014, %v1950
        %v2719 = vpack.c.b16 %v2015, %v1951
        %v2720 = vpack.c.b16 %v2016, %v1952
        %v2721 = vpack.c.b16 %v2017, %v1953
        %v2722 = vpack.c.b16 %v2018, %v1954
        %v2723 = vpack.c.b16 %v2019, %v1955
        %v2724 = vpack.c.b16 %v2020, %v1956
        %v2725 = vpack.c.b16 %v2021, %v1957
        %v2726 = vpack.c.b16 %v2022, %v1958
        %v2727 = vpack.c.b16 %v2023, %v1959
        %v2728 = vpack.c.b16 %v2024, %v1960
        %v2729 = vpack.c.b16 %v2025, %v1961
        %v2730 = vpack.c.b16 %v2026, %v1962
        %v2731 = vpack.c.b16 %v2027, %v1963
        %v2732 = vpack.c.b16 %v2028, %v1964
        %v2733 = vpack.c.b16 %v2029, %v1965
        %v2734 = vpack.c.b16 %v2030, %v1966
        %v2735 = vpack.c.b16 %v2031, %v1967
        %v2736 = vpack.c.b16 %v2032, %v1968
        %v2737 = vpack.c.b16 %v2033, %v1969
        %v2738 = vpack.c.b16 %v2034, %v1970
        %v2739 = vpack.c.b16 %v2035, %v1971
        %v2740 = vpack.c.b16 %v2036, %v1972
        %v2741 = vpack.c.b16 %v2037, %v1973
        %v2742 = vpack.c.b16 %v2038, %v1974
        %v2743 = vpack.c.b16 %v2039, %v1975
        %v2744 = vpack.c.b16 %v2040, %v1976
        %v2745 = vpack.c.b16 %v2041, %v1977
        %v2746 = vpack.c.b16 %v2106, %v2042
        %v2747 = vpack.c.b16 %v2107, %v2043
        %v2748 = vpack.c.b16 %v2108, %v2044
        %v2749 = vpack.c.b16 %v2109, %v2045
        %v2750 = vpack.c.b16 %v2110, %v2046
        %v2751 = vpack.c.b16 %v2111, %v2047
        %v2752 = vpack.c.b16 %v2112, %v2048
        %v2753 = vpack.c.b16 %v2113, %v2049
        %v2754 = vpack.c.b16 %v2114, %v2050
        %v2755 = vpack.c.b16 %v2115, %v2051
        %v2756 = vpack.c.b16 %v2116, %v2052
        %v2757 = vpack.c.b16 %v2117, %v2053
        %v2758 = vpack.c.b16 %v2118, %v2054
        %v2759 = vpack.c.b16 %v2119, %v2055
        %v2760 = vpack.c.b16 %v2120, %v2056
        %v2761 = vpack.c.b16 %v2121, %v2057
        %v2762 = vpack.c.b16 %v2122, %v2058
        %v2763 = vpack.c.b16 %v2123, %v2059
        %v2764 = vpack.c.b16 %v2124, %v2060
        %v2765 = vpack.c.b16 %v2125, %v2061
        %v2766 = vpack.c.b16 %v2126, %v2062
        %v2767 = vpack.c.b16 %v2127, %v2063
        %v2768 = vpack.c.b16 %v2128, %v2064
        %v2769 = vpack.c.b16 %v2129, %v2065
        %v2770 = vpack.c.b16 %v2130, %v2066
        %v2771 = vpack.c.b16 %v2131, %v2067
        %v2772 = vpack.c.b16 %v2132, %v2068
        %v2773 = vpack.c.b16 %v2133, %v2069
        %v2774 = vpack.c.b16 %v2134, %v2070
        %v2775 = vpack.c.b16 %v2135, %v2071
        %v2776 = vpack.c.b16 %v2136, %v2072
        %v2777 = vpack.c.b16 %v2137, %v2073
        %v2778 = vpack.c.b16 %v2138, %v2074
        %v2779 = vpack.c.b16 %v2139, %v2075
        %v2780 = vpack.c.b16 %v2140, %v2076
        %v2781 = vpack.c.b16 %v2141, %v2077
        %v2782 = vpack.c.b16 %v2142, %v2078
        %v2783 = vpack.c.b16 %v2143, %v2079
        %v2784 = vpack.c.b16 %v2144, %v2080
        %v2785 = vpack.c.b16 %v2145, %v2081
        %v2786 = vpack.c.b16 %v2146, %v2082
        %v2787 = vpack.c.b16 %v2147, %v2083
        %v2788 = vpack.c.b16 %v2148, %v2084
        %v2789 = vpack.c.b16 %v2149, %v2085
        %v2790 = vpack.c.b16 %v2150, %v2086
        %v2791 = vpack.c.b16 %v2151, %v2087
        %v2792 = vpack.c.b16 %v2152, %v2088
        %v2793 = vpack.c.b16 %v2153, %v2089
        %v2794 = vpack.c.b16 %v2154, %v2090
        %v2795 = vpack.c.b16 %v2155, %v2091
        %v2796 = vpack.c.b16 %v2156, %v2092
        %v2797 = vpack.c.b16 %v2157, %v2093
        %v2798 = vpack.c.b16 %v2158, %v2094
        %v2799 = vpack.c.b16 %v2159, %v2095
        %v2800 = vpack.c.b16 %v2160, %v2096
        %v2801 = vpack.c.b16 %v2161, %v2097
        %v2802 = vpack.c.b16 %v2162, %v2098
        %v2803 = vpack.c.b16 %v2163, %v2099
        %v2804 = vpack.c.b16 %v2164, %v2100
        %v2805 = vpack.c.b16 %v2165, %v2101
        %v2806 = vpack.c.b16 %v2166, %v2102
        %v2807 = vpack.c.b16 %v2167, %v2103
        %v2808 = vpack.c.b16 %v2168, %v2104
        %v2809 = vpack.c.b16 %v2169, %v2105
        %v2810 = vpack.c.b16 %v2234, %v2170
        %v2811 = vpack.c.b16 %v2235, %v2171
        %v2812 = vpack.c.b16 %v2236, %v2172
        %v2813 = vpack.c.b16 %v2237, %v2173
        %v2814 = vpack.c.b16 %v2238, %v2174
        %v2815 = vpack.c.b16 %v2239, %v2175
        %v2816 = vpack.c.b16 %v2240, %v2176
        %v2817 = vpack.c.b16 %v2241, %v2177
        %v2818 = vpack.c.b16 %v2242, %v2178
        %v2819 = vpack.c.b16 %v2243, %v2179
        %v2820 = vpack.c.b16 %v2244, %v2180
        %v2821 = vpack.c.b16 %v2245, %v2181
        %v2822 = vpack.c.b16 %v2246, %v2182
        %v2823 = vpack.c.b16 %v2247, %v2183
        %v2824 = vpack.c.b16 %v2248, %v2184
        %v2825 = vpack.c.b16 %v2249, %v2185
        %v2826 = vpack.c.b16 %v2250, %v2186
        %v2827 = vpack.c.b16 %v2251, %v2187
        %v2828 = vpack.c.b16 %v2252, %v2188
        %v2829 = vpack.c.b16 %v2253, %v2189
        %v2830 = vpack.c.b16 %v2254, %v2190
        %v2831 = vpack.c.b16 %v2255, %v2191
        %v2832 = vpack.c.b16 %v2256, %v2192
        %v2833 = vpack.c.b16 %v2257, %v2193
        %v2834 = vpack.c.b16 %v2258, %v2194
        %v2835 = vpack.c.b16 %v2259, %v2195
        %v2836 = vpack.c.b16 %v2260, %v2196
        %v2837 = vpack.c.b16 %v2261, %v2197
        %v2838 = vpack.c.b16 %v2262, %v2198
        %v2839 = vpack.c.b16 %v2263, %v2199
        %v2840 = vpack.c.b16 %v2264, %v2200
        %v2841 = vpack.c.b16 %v2265, %v2201
        %v2842 = vpack.c.b16 %v2266, %v2202
        %v2843 = vpack.c.b16 %v2267, %v2203
        %v2844 = vpack.c.b16 %v2268, %v2204
        %v2845 = vpack.c.b16 %v2269, %v2205
        %v2846 = vpack.c.b16 %v2270, %v2206
        %v2847 = vpack.c.b16 %v2271, %v2207
        %v2848 = vpack.c.b16 %v2272, %v2208
        %v2849 = vpack.c.b16 %v2273, %v2209
        %v2850 = vpack.c.b16 %v2274, %v2210
        %v2851 = vpack.c.b16 %v2275, %v2211
        %v2852 = vpack.c.b16 %v2276, %v2212
        %v2853 = vpack.c.b16 %v2277, %v2213
        %v2854 = vpack.c.b16 %v2278, %v2214
        %v2855 = vpack.c.b16 %v2279, %v2215
        %v2856 = vpack.c.b16 %v2280, %v2216
        %v2857 = vpack.c.b16 %v2281, %v2217
        %v2858 = vpack.c.b16 %v2282, %v2218
        %v2859 = vpack.c.b16 %v2283, %v2219
        %v2860 = vpack.c.b16 %v2284, %v2220
        %v2861 = vpack.c.b16 %v2285, %v2221
        %v2862 = vpack.c.b16 %v2286, %v2222
        %v2863 = vpack.c.b16 %v2287, %v2223
        %v2864 = vpack.c.b16 %v2288, %v2224
        %v2865 = vpack.c.b16 %v2289, %v2225
        %v2866 = vpack.c.b16 %v2290, %v2226
        %v2867 = vpack.c.b16 %v2291, %v2227
        %v2868 = vpack.c.b16 %v2292, %v2228
        %v2869 = vpack.c.b16 %v2293, %v2229
        %v2870 = vpack.c.b16 %v2294, %v2230
        %v2871 = vpack.c.b16 %v2295, %v2231
        %v2872 = vpack.c.b16 %v2296, %v2232
        %v2873 = vpack.c.b16 %v2297, %v2233
        %v2874 = vpack.c.b16 %v2362, %v2298
        %v2875 = vpack.c.b16 %v2363, %v2299
        %v2876 = vpack.c.b16 %v2364, %v2300
        %v2877 = vpack.c.b16 %v2365, %v2301
        %v2878 = vpack.c.b16 %v2366, %v2302
        %v2879 = vpack.c.b16 %v2367, %v2303
        %v2880 = vpack.c.b16 %v2368, %v2304
        %v2881 = vpack.c.b16 %v2369, %v2305
        %v2882 = vpack.c.b16 %v2370, %v2306
        %v2883 = vpack.c.b16 %v2371, %v2307
        %v2884 = vpack.c.b16 %v2372, %v2308
        %v2885 = vpack.c.b16 %v2373, %v2309
        %v2886 = vpack.c.b16 %v2374, %v2310
        %v2887 = vpack.c.b16 %v2375, %v2311
        %v2888 = vpack.c.b16 %v2376, %v2312
        %v2889 = vpack.c.b16 %v2377, %v2313
        %v2890 = vpack.c.b16 %v2378, %v2314
        %v2891 = vpack.c.b16 %v2379, %v2315
        %v2892 = vpack.c.b16 %v2380, %v2316
        %v2893 = vpack.c.b16 %v2381, %v2317
        %v2894 = vpack.c.b16 %v2382, %v2318
        %v2895 = vpack.c.b16 %v2383, %v2319
        %v2896 = vpack.c.b16 %v2384, %v2320
        %v2897 = vpack.c.b16 %v2385, %v2321
        %v2898 = vpack.c.b16 %v2386, %v2322
        %v2899 = vpack.c.b16 %v2387, %v2323
        %v2900 = vpack.c.b16 %v2388, %v2324
        %v2901 = vpack.c.b16 %v2389, %v2325
        %v2902 = vpack.c.b16 %v2390, %v2326
        %v2903 = vpack.c.b16 %v2391, %v2327
        %v2904 = vpack.c.b16 %v2392, %v2328
        %v2905 = vpack.c.b16 %v2393, %v2329
        %v2906 = vpack.c.b16 %v2394, %v2330
        %v2907 = vpack.c.b16 %v2395, %v2331
        %v2908 = vpack.c.b16 %v2396, %v2332
        %v2909 = vpack.c.b16 %v2397, %v2333
        %v2910 = vpack.c.b16 %v2398, %v2334
        %v2911 = vpack.c.b16 %v2399, %v2335
        %v2912 = vpack.c.b16 %v2400, %v2336
        %v2913 = vpack.c.b16 %v2401, %v2337
        %v2914 = vpack.c.b16 %v2402, %v2338
        %v2915 = vpack.c.b16 %v2403, %v2339
        %v2916 = vpack.c.b16 %v2404, %v2340
        %v2917 = vpack.c.b16 %v2405, %v2341
        %v2918 = vpack.c.b16 %v2406, %v2342
        %v2919 = vpack.c.b16 %v2407, %v2343
        %v2920 = vpack.c.b16 %v2408, %v2344
        %v2921 = vpack.c.b16 %v2409, %v2345
        %v2922 = vpack.c.b16 %v2410, %v2346
        %v2923 = vpack.c.b16 %v2411, %v2347
        %v2924 = vpack.c.b16 %v2412, %v2348
        %v2925 = vpack.c.b16 %v2413, %v2349
        %v2926 = vpack.c.b16 %v2414, %v2350
        %v2927 = vpack.c.b16 %v2415, %v2351
        %v2928 = vpack.c.b16 %v2416, %v2352
        %v2929 = vpack.c.b16 %v2417, %v2353
        %v2930 = vpack.c.b16 %v2418, %v2354
        %v2931 = vpack.c.b16 %v2419, %v2355
        %v2932 = vpack.c.b16 %v2420, %v2356
        %v2933 = vpack.c.b16 %v2421, %v2357
        %v2934 = vpack.c.b16 %v2422, %v2358
        %v2935 = vpack.c.b16 %v2423, %v2359
        %v2936 = vpack.c.b16 %v2424, %v2360
        %v2937 = vpack.c.b16 %v2425, %v2361
        %3450 = vmatpush.bf16.msra.mxu0 %v2874
        %3451 = vmatpush.bf16.msra.mxu0 %v2810
        %3452 = vmatpush.bf16.msra.mxu0 %v2746
        %3453 = vmatpush.bf16.msra.mxu0 %v2682
        %3454 = vmatpush.bf16.msra.mxu0 %v2618
        %3455 = vmatpush.bf16.msra.mxu0 %v2554
        %3456 = vmatpush.bf16.msra.mxu0 %v2490
        %3457 = vmatpush.bf16.msra.mxu0 %v2426
        %3458 = vmatmul.bf16.gmra.mxu0 %v233
        %v3459 = vpop.f32.mrf.mxu0
        %v3460 = vadd.f32 %v762, %v3459
        %v3461 = vpop.f32.mrf.mxu0
        %3462 = vdwg.mxu0
        %3463 = vmatpush.bf16.msra.mxu0 %v2875
        %3464 = vmatpush.bf16.msra.mxu0 %v2811
        %3465 = vmatpush.bf16.msra.mxu0 %v2747
        %3466 = vmatpush.bf16.msra.mxu0 %v2683
        %3467 = vmatpush.bf16.msra.mxu0 %v2619
        %3468 = vmatpush.bf16.msra.mxu0 %v2555
        %3469 = vmatpush.bf16.msra.mxu0 %v2491
        %3470 = vmatpush.bf16.msra.mxu0 %v2427
        %3471 = vmatmul.bf16.gmra.mxu0 %v233
        %v3472 = vpop.f32.mrf.mxu0
        %v3473 = vadd.f32 %v763, %v3472
        %v3474 = vpop.f32.mrf.mxu0
        %3475 = vdwg.mxu0
        %3476 = vmatpush.bf16.msra.mxu0 %v2876
        %3477 = vmatpush.bf16.msra.mxu0 %v2812
        %3478 = vmatpush.bf16.msra.mxu0 %v2748
        %3479 = vmatpush.bf16.msra.mxu0 %v2684
        %3480 = vmatpush.bf16.msra.mxu0 %v2620
        %3481 = vmatpush.bf16.msra.mxu0 %v2556
        %3482 = vmatpush.bf16.msra.mxu0 %v2492
        %3483 = vmatpush.bf16.msra.mxu0 %v2428
        %3484 = vmatmul.bf16.gmra.mxu0 %v233
        %v3485 = vpop.f32.mrf.mxu0
        %v3486 = vadd.f32 %v764, %v3485
        %v3487 = vpop.f32.mrf.mxu0
        %3488 = vdwg.mxu0
        %3489 = vmatpush.bf16.msra.mxu0 %v2877
        %3490 = vmatpush.bf16.msra.mxu0 %v2813
        %3491 = vmatpush.bf16.msra.mxu0 %v2749
        %3492 = vmatpush.bf16.msra.mxu0 %v2685
        %3493 = vmatpush.bf16.msra.mxu0 %v2621
        %3494 = vmatpush.bf16.msra.mxu0 %v2557
        %3495 = vmatpush.bf16.msra.mxu0 %v2493
        %3496 = vmatpush.bf16.msra.mxu0 %v2429
        %3497 = vmatmul.bf16.gmra.mxu0 %v233
        %v3498 = vpop.f32.mrf.mxu0
        %v3499 = vadd.f32 %v765, %v3498
        %v3500 = vpop.f32.mrf.mxu0
        %3501 = vdwg.mxu0
        %3502 = vmatpush.bf16.msra.mxu0 %v2878
        %3503 = vmatpush.bf16.msra.mxu0 %v2814
        %3504 = vmatpush.bf16.msra.mxu0 %v2750
        %3505 = vmatpush.bf16.msra.mxu0 %v2686
        %3506 = vmatpush.bf16.msra.mxu0 %v2622
        %3507 = vmatpush.bf16.msra.mxu0 %v2558
        %3508 = vmatpush.bf16.msra.mxu0 %v2494
        %3509 = vmatpush.bf16.msra.mxu0 %v2430
        %3510 = vmatmul.bf16.gmra.mxu0 %v233
        %v3511 = vpop.f32.mrf.mxu0
        %v3512 = vadd.f32 %v766, %v3511
        %v3513 = vpop.f32.mrf.mxu0
        %3514 = vdwg.mxu0
        %3515 = vmatpush.bf16.msra.mxu0 %v2879
        %3516 = vmatpush.bf16.msra.mxu0 %v2815
        %3517 = vmatpush.bf16.msra.mxu0 %v2751
        %3518 = vmatpush.bf16.msra.mxu0 %v2687
        %3519 = vmatpush.bf16.msra.mxu0 %v2623
        %3520 = vmatpush.bf16.msra.mxu0 %v2559
        %3521 = vmatpush.bf16.msra.mxu0 %v2495
        %3522 = vmatpush.bf16.msra.mxu0 %v2431
        %3523 = vmatmul.bf16.gmra.mxu0 %v233
        %v3524 = vpop.f32.mrf.mxu0
        %v3525 = vadd.f32 %v767, %v3524
        %v3526 = vpop.f32.mrf.mxu0
        %3527 = vdwg.mxu0
        %3528 = vmatpush.bf16.msra.mxu0 %v2880
        %3529 = vmatpush.bf16.msra.mxu0 %v2816
        %3530 = vmatpush.bf16.msra.mxu0 %v2752
        %3531 = vmatpush.bf16.msra.mxu0 %v2688
        %3532 = vmatpush.bf16.msra.mxu0 %v2624
        %3533 = vmatpush.bf16.msra.mxu0 %v2560
        %3534 = vmatpush.bf16.msra.mxu0 %v2496
        %3535 = vmatpush.bf16.msra.mxu0 %v2432
        %3536 = vmatmul.bf16.gmra.mxu0 %v233
        %v3537 = vpop.f32.mrf.mxu0
        %v3538 = vadd.f32 %v768, %v3537
        %v3539 = vpop.f32.mrf.mxu0
        %3540 = vdwg.mxu0
        %3541 = vmatpush.bf16.msra.mxu0 %v2881
        %3542 = vmatpush.bf16.msra.mxu0 %v2817
        %3543 = vmatpush.bf16.msra.mxu0 %v2753
        %3544 = vmatpush.bf16.msra.mxu0 %v2689
        %3545 = vmatpush.bf16.msra.mxu0 %v2625
        %3546 = vmatpush.bf16.msra.mxu0 %v2561
        %3547 = vmatpush.bf16.msra.mxu0 %v2497
        %3548 = vmatpush.bf16.msra.mxu0 %v2433
        %3549 = vmatmul.bf16.gmra.mxu0 %v233
        %v3550 = vpop.f32.mrf.mxu0
        %v3551 = vadd.f32 %v769, %v3550
        %v3552 = vpop.f32.mrf.mxu0
        %3553 = vdwg.mxu0
        %3554 = vmatpush.bf16.msra.mxu0 %v2882
        %3555 = vmatpush.bf16.msra.mxu0 %v2818
        %3556 = vmatpush.bf16.msra.mxu0 %v2754
        %3557 = vmatpush.bf16.msra.mxu0 %v2690
        %3558 = vmatpush.bf16.msra.mxu0 %v2626
        %3559 = vmatpush.bf16.msra.mxu0 %v2562
        %3560 = vmatpush.bf16.msra.mxu0 %v2498
        %3561 = vmatpush.bf16.msra.mxu0 %v2434
        %3562 = vmatmul.bf16.gmra.mxu0 %v233
        %v3563 = vpop.f32.mrf.mxu0
        %v3564 = vadd.f32 %v770, %v3563
        %v3565 = vpop.f32.mrf.mxu0
        %3566 = vdwg.mxu0
        %3567 = vmatpush.bf16.msra.mxu0 %v2883
        %3568 = vmatpush.bf16.msra.mxu0 %v2819
        %3569 = vmatpush.bf16.msra.mxu0 %v2755
        %3570 = vmatpush.bf16.msra.mxu0 %v2691
        %3571 = vmatpush.bf16.msra.mxu0 %v2627
        %3572 = vmatpush.bf16.msra.mxu0 %v2563
        %3573 = vmatpush.bf16.msra.mxu0 %v2499
        %3574 = vmatpush.bf16.msra.mxu0 %v2435
        %3575 = vmatmul.bf16.gmra.mxu0 %v233
        %v3576 = vpop.f32.mrf.mxu0
        %v3577 = vadd.f32 %v771, %v3576
        %v3578 = vpop.f32.mrf.mxu0
        %3579 = vdwg.mxu0
        %3580 = vmatpush.bf16.msra.mxu0 %v2884
        %3581 = vmatpush.bf16.msra.mxu0 %v2820
        %3582 = vmatpush.bf16.msra.mxu0 %v2756
        %3583 = vmatpush.bf16.msra.mxu0 %v2692
        %3584 = vmatpush.bf16.msra.mxu0 %v2628
        %3585 = vmatpush.bf16.msra.mxu0 %v2564
        %3586 = vmatpush.bf16.msra.mxu0 %v2500
        %3587 = vmatpush.bf16.msra.mxu0 %v2436
        %3588 = vmatmul.bf16.gmra.mxu0 %v233
        %v3589 = vpop.f32.mrf.mxu0
        %v3590 = vadd.f32 %v772, %v3589
        %v3591 = vpop.f32.mrf.mxu0
        %3592 = vdwg.mxu0
        %3593 = vmatpush.bf16.msra.mxu0 %v2885
        %3594 = vmatpush.bf16.msra.mxu0 %v2821
        %3595 = vmatpush.bf16.msra.mxu0 %v2757
        %3596 = vmatpush.bf16.msra.mxu0 %v2693
        %3597 = vmatpush.bf16.msra.mxu0 %v2629
        %3598 = vmatpush.bf16.msra.mxu0 %v2565
        %3599 = vmatpush.bf16.msra.mxu0 %v2501
        %3600 = vmatpush.bf16.msra.mxu0 %v2437
        %3601 = vmatmul.bf16.gmra.mxu0 %v233
        %v3602 = vpop.f32.mrf.mxu0
        %v3603 = vadd.f32 %v773, %v3602
        %v3604 = vpop.f32.mrf.mxu0
        %3605 = vdwg.mxu0
        %3606 = vmatpush.bf16.msra.mxu0 %v2886
        %3607 = vmatpush.bf16.msra.mxu0 %v2822
        %3608 = vmatpush.bf16.msra.mxu0 %v2758
        %3609 = vmatpush.bf16.msra.mxu0 %v2694
        %3610 = vmatpush.bf16.msra.mxu0 %v2630
        %3611 = vmatpush.bf16.msra.mxu0 %v2566
        %3612 = vmatpush.bf16.msra.mxu0 %v2502
        %3613 = vmatpush.bf16.msra.mxu0 %v2438
        %3614 = vmatmul.bf16.gmra.mxu0 %v233
        %v3615 = vpop.f32.mrf.mxu0
        %v3616 = vadd.f32 %v774, %v3615
        %v3617 = vpop.f32.mrf.mxu0
        %3618 = vdwg.mxu0
        %3619 = vmatpush.bf16.msra.mxu0 %v2887
        %3620 = vmatpush.bf16.msra.mxu0 %v2823
        %3621 = vmatpush.bf16.msra.mxu0 %v2759
        %3622 = vmatpush.bf16.msra.mxu0 %v2695
        %3623 = vmatpush.bf16.msra.mxu0 %v2631
        %3624 = vmatpush.bf16.msra.mxu0 %v2567
        %3625 = vmatpush.bf16.msra.mxu0 %v2503
        %3626 = vmatpush.bf16.msra.mxu0 %v2439
        %3627 = vmatmul.bf16.gmra.mxu0 %v233
        %v3628 = vpop.f32.mrf.mxu0
        %v3629 = vadd.f32 %v775, %v3628
        %v3630 = vpop.f32.mrf.mxu0
        %3631 = vdwg.mxu0
        %3632 = vmatpush.bf16.msra.mxu0 %v2888
        %3633 = vmatpush.bf16.msra.mxu0 %v2824
        %3634 = vmatpush.bf16.msra.mxu0 %v2760
        %3635 = vmatpush.bf16.msra.mxu0 %v2696
        %3636 = vmatpush.bf16.msra.mxu0 %v2632
        %3637 = vmatpush.bf16.msra.mxu0 %v2568
        %3638 = vmatpush.bf16.msra.mxu0 %v2504
        %3639 = vmatpush.bf16.msra.mxu0 %v2440
        %3640 = vmatmul.bf16.gmra.mxu0 %v233
        %v3641 = vpop.f32.mrf.mxu0
        %v3642 = vadd.f32 %v776, %v3641
        %v3643 = vpop.f32.mrf.mxu0
        %3644 = vdwg.mxu0
        %3645 = vmatpush.bf16.msra.mxu0 %v2889
        %3646 = vmatpush.bf16.msra.mxu0 %v2825
        %3647 = vmatpush.bf16.msra.mxu0 %v2761
        %3648 = vmatpush.bf16.msra.mxu0 %v2697
        %3649 = vmatpush.bf16.msra.mxu0 %v2633
        %3650 = vmatpush.bf16.msra.mxu0 %v2569
        %3651 = vmatpush.bf16.msra.mxu0 %v2505
        %3652 = vmatpush.bf16.msra.mxu0 %v2441
        %3653 = vmatmul.bf16.gmra.mxu0 %v233
        %v3654 = vpop.f32.mrf.mxu0
        %v3655 = vadd.f32 %v777, %v3654
        %v3656 = vpop.f32.mrf.mxu0
        %3657 = vdwg.mxu0
        %3658 = vmatpush.bf16.msra.mxu0 %v2890
        %3659 = vmatpush.bf16.msra.mxu0 %v2826
        %3660 = vmatpush.bf16.msra.mxu0 %v2762
        %3661 = vmatpush.bf16.msra.mxu0 %v2698
        %3662 = vmatpush.bf16.msra.mxu0 %v2634
        %3663 = vmatpush.bf16.msra.mxu0 %v2570
        %3664 = vmatpush.bf16.msra.mxu0 %v2506
        %3665 = vmatpush.bf16.msra.mxu0 %v2442
        %3666 = vmatmul.bf16.gmra.mxu0 %v233
        %v3667 = vpop.f32.mrf.mxu0
        %v3668 = vadd.f32 %v778, %v3667
        %v3669 = vpop.f32.mrf.mxu0
        %3670 = vdwg.mxu0
        %3671 = vmatpush.bf16.msra.mxu0 %v2891
        %3672 = vmatpush.bf16.msra.mxu0 %v2827
        %3673 = vmatpush.bf16.msra.mxu0 %v2763
        %3674 = vmatpush.bf16.msra.mxu0 %v2699
        %3675 = vmatpush.bf16.msra.mxu0 %v2635
        %3676 = vmatpush.bf16.msra.mxu0 %v2571
        %3677 = vmatpush.bf16.msra.mxu0 %v2507
        %3678 = vmatpush.bf16.msra.mxu0 %v2443
        %3679 = vmatmul.bf16.gmra.mxu0 %v233
        %v3680 = vpop.f32.mrf.mxu0
        %v3681 = vadd.f32 %v779, %v3680
        %v3682 = vpop.f32.mrf.mxu0
        %3683 = vdwg.mxu0
        %3684 = vmatpush.bf16.msra.mxu0 %v2892
        %3685 = vmatpush.bf16.msra.mxu0 %v2828
        %3686 = vmatpush.bf16.msra.mxu0 %v2764
        %3687 = vmatpush.bf16.msra.mxu0 %v2700
        %3688 = vmatpush.bf16.msra.mxu0 %v2636
        %3689 = vmatpush.bf16.msra.mxu0 %v2572
        %3690 = vmatpush.bf16.msra.mxu0 %v2508
        %3691 = vmatpush.bf16.msra.mxu0 %v2444
        %3692 = vmatmul.bf16.gmra.mxu0 %v233
        %v3693 = vpop.f32.mrf.mxu0
        %v3694 = vadd.f32 %v780, %v3693
        %v3695 = vpop.f32.mrf.mxu0
        %3696 = vdwg.mxu0
        %3697 = vmatpush.bf16.msra.mxu0 %v2893
        %3698 = vmatpush.bf16.msra.mxu0 %v2829
        %3699 = vmatpush.bf16.msra.mxu0 %v2765
        %3700 = vmatpush.bf16.msra.mxu0 %v2701
        %3701 = vmatpush.bf16.msra.mxu0 %v2637
        %3702 = vmatpush.bf16.msra.mxu0 %v2573
        %3703 = vmatpush.bf16.msra.mxu0 %v2509
        %3704 = vmatpush.bf16.msra.mxu0 %v2445
        %3705 = vmatmul.bf16.gmra.mxu0 %v233
        %v3706 = vpop.f32.mrf.mxu0
        %v3707 = vadd.f32 %v781, %v3706
        %v3708 = vpop.f32.mrf.mxu0
        %3709 = vdwg.mxu0
        %3710 = vmatpush.bf16.msra.mxu0 %v2894
        %3711 = vmatpush.bf16.msra.mxu0 %v2830
        %3712 = vmatpush.bf16.msra.mxu0 %v2766
        %3713 = vmatpush.bf16.msra.mxu0 %v2702
        %3714 = vmatpush.bf16.msra.mxu0 %v2638
        %3715 = vmatpush.bf16.msra.mxu0 %v2574
        %3716 = vmatpush.bf16.msra.mxu0 %v2510
        %3717 = vmatpush.bf16.msra.mxu0 %v2446
        %3718 = vmatmul.bf16.gmra.mxu0 %v233
        %v3719 = vpop.f32.mrf.mxu0
        %v3720 = vadd.f32 %v782, %v3719
        %v3721 = vpop.f32.mrf.mxu0
        %3722 = vdwg.mxu0
        %3723 = vmatpush.bf16.msra.mxu0 %v2895
        %3724 = vmatpush.bf16.msra.mxu0 %v2831
        %3725 = vmatpush.bf16.msra.mxu0 %v2767
        %3726 = vmatpush.bf16.msra.mxu0 %v2703
        %3727 = vmatpush.bf16.msra.mxu0 %v2639
        %3728 = vmatpush.bf16.msra.mxu0 %v2575
        %3729 = vmatpush.bf16.msra.mxu0 %v2511
        %3730 = vmatpush.bf16.msra.mxu0 %v2447
        %3731 = vmatmul.bf16.gmra.mxu0 %v233
        %v3732 = vpop.f32.mrf.mxu0
        %v3733 = vadd.f32 %v783, %v3732
        %v3734 = vpop.f32.mrf.mxu0
        %3735 = vdwg.mxu0
        %3736 = vmatpush.bf16.msra.mxu0 %v2896
        %3737 = vmatpush.bf16.msra.mxu0 %v2832
        %3738 = vmatpush.bf16.msra.mxu0 %v2768
        %3739 = vmatpush.bf16.msra.mxu0 %v2704
        %3740 = vmatpush.bf16.msra.mxu0 %v2640
        %3741 = vmatpush.bf16.msra.mxu0 %v2576
        %3742 = vmatpush.bf16.msra.mxu0 %v2512
        %3743 = vmatpush.bf16.msra.mxu0 %v2448
        %3744 = vmatmul.bf16.gmra.mxu0 %v233
        %v3745 = vpop.f32.mrf.mxu0
        %v3746 = vadd.f32 %v784, %v3745
        %v3747 = vpop.f32.mrf.mxu0
        %3748 = vdwg.mxu0
        %3749 = vmatpush.bf16.msra.mxu0 %v2897
        %3750 = vmatpush.bf16.msra.mxu0 %v2833
        %3751 = vmatpush.bf16.msra.mxu0 %v2769
        %3752 = vmatpush.bf16.msra.mxu0 %v2705
        %3753 = vmatpush.bf16.msra.mxu0 %v2641
        %3754 = vmatpush.bf16.msra.mxu0 %v2577
        %3755 = vmatpush.bf16.msra.mxu0 %v2513
        %3756 = vmatpush.bf16.msra.mxu0 %v2449
        %3757 = vmatmul.bf16.gmra.mxu0 %v233
        %v3758 = vpop.f32.mrf.mxu0
        %v3759 = vadd.f32 %v785, %v3758
        %v3760 = vpop.f32.mrf.mxu0
        %3761 = vdwg.mxu0
        %3762 = vmatpush.bf16.msra.mxu0 %v2898
        %3763 = vmatpush.bf16.msra.mxu0 %v2834
        %3764 = vmatpush.bf16.msra.mxu0 %v2770
        %3765 = vmatpush.bf16.msra.mxu0 %v2706
        %3766 = vmatpush.bf16.msra.mxu0 %v2642
        %3767 = vmatpush.bf16.msra.mxu0 %v2578
        %3768 = vmatpush.bf16.msra.mxu0 %v2514
        %3769 = vmatpush.bf16.msra.mxu0 %v2450
        %3770 = vmatmul.bf16.gmra.mxu0 %v233
        %v3771 = vpop.f32.mrf.mxu0
        %v3772 = vadd.f32 %v786, %v3771
        %v3773 = vpop.f32.mrf.mxu0
        %3774 = vdwg.mxu0
        %3775 = vmatpush.bf16.msra.mxu0 %v2899
        %3776 = vmatpush.bf16.msra.mxu0 %v2835
        %3777 = vmatpush.bf16.msra.mxu0 %v2771
        %3778 = vmatpush.bf16.msra.mxu0 %v2707
        %3779 = vmatpush.bf16.msra.mxu0 %v2643
        %3780 = vmatpush.bf16.msra.mxu0 %v2579
        %3781 = vmatpush.bf16.msra.mxu0 %v2515
        %3782 = vmatpush.bf16.msra.mxu0 %v2451
        %3783 = vmatmul.bf16.gmra.mxu0 %v233
        %v3784 = vpop.f32.mrf.mxu0
        %v3785 = vadd.f32 %v787, %v3784
        %v3786 = vpop.f32.mrf.mxu0
        %3787 = vdwg.mxu0
        %3788 = vmatpush.bf16.msra.mxu0 %v2900
        %3789 = vmatpush.bf16.msra.mxu0 %v2836
        %3790 = vmatpush.bf16.msra.mxu0 %v2772
        %3791 = vmatpush.bf16.msra.mxu0 %v2708
        %3792 = vmatpush.bf16.msra.mxu0 %v2644
        %3793 = vmatpush.bf16.msra.mxu0 %v2580
        %3794 = vmatpush.bf16.msra.mxu0 %v2516
        %3795 = vmatpush.bf16.msra.mxu0 %v2452
        %3796 = vmatmul.bf16.gmra.mxu0 %v233
        %v3797 = vpop.f32.mrf.mxu0
        %v3798 = vadd.f32 %v788, %v3797
        %v3799 = vpop.f32.mrf.mxu0
        %3800 = vdwg.mxu0
        %3801 = vmatpush.bf16.msra.mxu0 %v2901
        %3802 = vmatpush.bf16.msra.mxu0 %v2837
        %3803 = vmatpush.bf16.msra.mxu0 %v2773
        %3804 = vmatpush.bf16.msra.mxu0 %v2709
        %3805 = vmatpush.bf16.msra.mxu0 %v2645
        %3806 = vmatpush.bf16.msra.mxu0 %v2581
        %3807 = vmatpush.bf16.msra.mxu0 %v2517
        %3808 = vmatpush.bf16.msra.mxu0 %v2453
        %3809 = vmatmul.bf16.gmra.mxu0 %v233
        %v3810 = vpop.f32.mrf.mxu0
        %v3811 = vadd.f32 %v789, %v3810
        %v3812 = vpop.f32.mrf.mxu0
        %3813 = vdwg.mxu0
        %3814 = vmatpush.bf16.msra.mxu0 %v2902
        %3815 = vmatpush.bf16.msra.mxu0 %v2838
        %3816 = vmatpush.bf16.msra.mxu0 %v2774
        %3817 = vmatpush.bf16.msra.mxu0 %v2710
        %3818 = vmatpush.bf16.msra.mxu0 %v2646
        %3819 = vmatpush.bf16.msra.mxu0 %v2582
        %3820 = vmatpush.bf16.msra.mxu0 %v2518
        %3821 = vmatpush.bf16.msra.mxu0 %v2454
        %3822 = vmatmul.bf16.gmra.mxu0 %v233
        %v3823 = vpop.f32.mrf.mxu0
        %v3824 = vadd.f32 %v790, %v3823
        %v3825 = vpop.f32.mrf.mxu0
        %3826 = vdwg.mxu0
        %3827 = vmatpush.bf16.msra.mxu0 %v2903
        %3828 = vmatpush.bf16.msra.mxu0 %v2839
        %3829 = vmatpush.bf16.msra.mxu0 %v2775
        %3830 = vmatpush.bf16.msra.mxu0 %v2711
        %3831 = vmatpush.bf16.msra.mxu0 %v2647
        %3832 = vmatpush.bf16.msra.mxu0 %v2583
        %3833 = vmatpush.bf16.msra.mxu0 %v2519
        %3834 = vmatpush.bf16.msra.mxu0 %v2455
        %3835 = vmatmul.bf16.gmra.mxu0 %v233
        %v3836 = vpop.f32.mrf.mxu0
        %v3837 = vadd.f32 %v791, %v3836
        %v3838 = vpop.f32.mrf.mxu0
        %3839 = vdwg.mxu0
        %3840 = vmatpush.bf16.msra.mxu0 %v2904
        %3841 = vmatpush.bf16.msra.mxu0 %v2840
        %3842 = vmatpush.bf16.msra.mxu0 %v2776
        %3843 = vmatpush.bf16.msra.mxu0 %v2712
        %3844 = vmatpush.bf16.msra.mxu0 %v2648
        %3845 = vmatpush.bf16.msra.mxu0 %v2584
        %3846 = vmatpush.bf16.msra.mxu0 %v2520
        %3847 = vmatpush.bf16.msra.mxu0 %v2456
        %3848 = vmatmul.bf16.gmra.mxu0 %v233
        %v3849 = vpop.f32.mrf.mxu0
        %v3850 = vadd.f32 %v792, %v3849
        %v3851 = vpop.f32.mrf.mxu0
        %3852 = vdwg.mxu0
        %3853 = vmatpush.bf16.msra.mxu0 %v2905
        %3854 = vmatpush.bf16.msra.mxu0 %v2841
        %3855 = vmatpush.bf16.msra.mxu0 %v2777
        %3856 = vmatpush.bf16.msra.mxu0 %v2713
        %3857 = vmatpush.bf16.msra.mxu0 %v2649
        %3858 = vmatpush.bf16.msra.mxu0 %v2585
        %3859 = vmatpush.bf16.msra.mxu0 %v2521
        %3860 = vmatpush.bf16.msra.mxu0 %v2457
        %3861 = vmatmul.bf16.gmra.mxu0 %v233
        %v3862 = vpop.f32.mrf.mxu0
        %v3863 = vadd.f32 %v793, %v3862
        %v3864 = vpop.f32.mrf.mxu0
        %3865 = vdwg.mxu0
        %3866 = vmatpush.bf16.msra.mxu0 %v2906
        %3867 = vmatpush.bf16.msra.mxu0 %v2842
        %3868 = vmatpush.bf16.msra.mxu0 %v2778
        %3869 = vmatpush.bf16.msra.mxu0 %v2714
        %3870 = vmatpush.bf16.msra.mxu0 %v2650
        %3871 = vmatpush.bf16.msra.mxu0 %v2586
        %3872 = vmatpush.bf16.msra.mxu0 %v2522
        %3873 = vmatpush.bf16.msra.mxu0 %v2458
        %3874 = vmatmul.bf16.gmra.mxu0 %v233
        %v3875 = vpop.f32.mrf.mxu0
        %v3876 = vadd.f32 %v794, %v3875
        %v3877 = vpop.f32.mrf.mxu0
        %3878 = vdwg.mxu0
        %3879 = vmatpush.bf16.msra.mxu0 %v2907
        %3880 = vmatpush.bf16.msra.mxu0 %v2843
        %3881 = vmatpush.bf16.msra.mxu0 %v2779
        %3882 = vmatpush.bf16.msra.mxu0 %v2715
        %3883 = vmatpush.bf16.msra.mxu0 %v2651
        %3884 = vmatpush.bf16.msra.mxu0 %v2587
        %3885 = vmatpush.bf16.msra.mxu0 %v2523
        %3886 = vmatpush.bf16.msra.mxu0 %v2459
        %3887 = vmatmul.bf16.gmra.mxu0 %v233
        %v3888 = vpop.f32.mrf.mxu0
        %v3889 = vadd.f32 %v795, %v3888
        %v3890 = vpop.f32.mrf.mxu0
        %3891 = vdwg.mxu0
        %3892 = vmatpush.bf16.msra.mxu0 %v2908
        %3893 = vmatpush.bf16.msra.mxu0 %v2844
        %3894 = vmatpush.bf16.msra.mxu0 %v2780
        %3895 = vmatpush.bf16.msra.mxu0 %v2716
        %3896 = vmatpush.bf16.msra.mxu0 %v2652
        %3897 = vmatpush.bf16.msra.mxu0 %v2588
        %3898 = vmatpush.bf16.msra.mxu0 %v2524
        %3899 = vmatpush.bf16.msra.mxu0 %v2460
        %3900 = vmatmul.bf16.gmra.mxu0 %v233
        %v3901 = vpop.f32.mrf.mxu0
        %v3902 = vadd.f32 %v796, %v3901
        %v3903 = vpop.f32.mrf.mxu0
        %3904 = vdwg.mxu0
        %3905 = vmatpush.bf16.msra.mxu0 %v2909
        %3906 = vmatpush.bf16.msra.mxu0 %v2845
        %3907 = vmatpush.bf16.msra.mxu0 %v2781
        %3908 = vmatpush.bf16.msra.mxu0 %v2717
        %3909 = vmatpush.bf16.msra.mxu0 %v2653
        %3910 = vmatpush.bf16.msra.mxu0 %v2589
        %3911 = vmatpush.bf16.msra.mxu0 %v2525
        %3912 = vmatpush.bf16.msra.mxu0 %v2461
        %3913 = vmatmul.bf16.gmra.mxu0 %v233
        %v3914 = vpop.f32.mrf.mxu0
        %v3915 = vadd.f32 %v797, %v3914
        %v3916 = vpop.f32.mrf.mxu0
        %3917 = vdwg.mxu0
        %3918 = vmatpush.bf16.msra.mxu0 %v2910
        %3919 = vmatpush.bf16.msra.mxu0 %v2846
        %3920 = vmatpush.bf16.msra.mxu0 %v2782
        %3921 = vmatpush.bf16.msra.mxu0 %v2718
        %3922 = vmatpush.bf16.msra.mxu0 %v2654
        %3923 = vmatpush.bf16.msra.mxu0 %v2590
        %3924 = vmatpush.bf16.msra.mxu0 %v2526
        %3925 = vmatpush.bf16.msra.mxu0 %v2462
        %3926 = vmatmul.bf16.gmra.mxu0 %v233
        %v3927 = vpop.f32.mrf.mxu0
        %v3928 = vadd.f32 %v798, %v3927
        %v3929 = vpop.f32.mrf.mxu0
        %3930 = vdwg.mxu0
        %3931 = vmatpush.bf16.msra.mxu0 %v2911
        %3932 = vmatpush.bf16.msra.mxu0 %v2847
        %3933 = vmatpush.bf16.msra.mxu0 %v2783
        %3934 = vmatpush.bf16.msra.mxu0 %v2719
        %3935 = vmatpush.bf16.msra.mxu0 %v2655
        %3936 = vmatpush.bf16.msra.mxu0 %v2591
        %3937 = vmatpush.bf16.msra.mxu0 %v2527
        %3938 = vmatpush.bf16.msra.mxu0 %v2463
        %3939 = vmatmul.bf16.gmra.mxu0 %v233
        %v3940 = vpop.f32.mrf.mxu0
        %v3941 = vadd.f32 %v799, %v3940
        %v3942 = vpop.f32.mrf.mxu0
        %3943 = vdwg.mxu0
        %3944 = vmatpush.bf16.msra.mxu0 %v2912
        %3945 = vmatpush.bf16.msra.mxu0 %v2848
        %3946 = vmatpush.bf16.msra.mxu0 %v2784
        %3947 = vmatpush.bf16.msra.mxu0 %v2720
        %3948 = vmatpush.bf16.msra.mxu0 %v2656
        %3949 = vmatpush.bf16.msra.mxu0 %v2592
        %3950 = vmatpush.bf16.msra.mxu0 %v2528
        %3951 = vmatpush.bf16.msra.mxu0 %v2464
        %3952 = vmatmul.bf16.gmra.mxu0 %v233
        %v3953 = vpop.f32.mrf.mxu0
        %v3954 = vadd.f32 %v800, %v3953
        %v3955 = vpop.f32.mrf.mxu0
        %3956 = vdwg.mxu0
        %3957 = vmatpush.bf16.msra.mxu0 %v2913
        %3958 = vmatpush.bf16.msra.mxu0 %v2849
        %3959 = vmatpush.bf16.msra.mxu0 %v2785
        %3960 = vmatpush.bf16.msra.mxu0 %v2721
        %3961 = vmatpush.bf16.msra.mxu0 %v2657
        %3962 = vmatpush.bf16.msra.mxu0 %v2593
        %3963 = vmatpush.bf16.msra.mxu0 %v2529
        %3964 = vmatpush.bf16.msra.mxu0 %v2465
        %3965 = vmatmul.bf16.gmra.mxu0 %v233
        %v3966 = vpop.f32.mrf.mxu0
        %v3967 = vadd.f32 %v801, %v3966
        %v3968 = vpop.f32.mrf.mxu0
        %3969 = vdwg.mxu0
        %3970 = vmatpush.bf16.msra.mxu0 %v2914
        %3971 = vmatpush.bf16.msra.mxu0 %v2850
        %3972 = vmatpush.bf16.msra.mxu0 %v2786
        %3973 = vmatpush.bf16.msra.mxu0 %v2722
        %3974 = vmatpush.bf16.msra.mxu0 %v2658
        %3975 = vmatpush.bf16.msra.mxu0 %v2594
        %3976 = vmatpush.bf16.msra.mxu0 %v2530
        %3977 = vmatpush.bf16.msra.mxu0 %v2466
        %3978 = vmatmul.bf16.gmra.mxu0 %v233
        %v3979 = vpop.f32.mrf.mxu0
        %v3980 = vadd.f32 %v802, %v3979
        %v3981 = vpop.f32.mrf.mxu0
        %3982 = vdwg.mxu0
        %3983 = vmatpush.bf16.msra.mxu0 %v2915
        %3984 = vmatpush.bf16.msra.mxu0 %v2851
        %3985 = vmatpush.bf16.msra.mxu0 %v2787
        %3986 = vmatpush.bf16.msra.mxu0 %v2723
        %3987 = vmatpush.bf16.msra.mxu0 %v2659
        %3988 = vmatpush.bf16.msra.mxu0 %v2595
        %3989 = vmatpush.bf16.msra.mxu0 %v2531
        %3990 = vmatpush.bf16.msra.mxu0 %v2467
        %3991 = vmatmul.bf16.gmra.mxu0 %v233
        %v3992 = vpop.f32.mrf.mxu0
        %v3993 = vadd.f32 %v803, %v3992
        %v3994 = vpop.f32.mrf.mxu0
        %3995 = vdwg.mxu0
        %3996 = vmatpush.bf16.msra.mxu0 %v2916
        %3997 = vmatpush.bf16.msra.mxu0 %v2852
        %3998 = vmatpush.bf16.msra.mxu0 %v2788
        %3999 = vmatpush.bf16.msra.mxu0 %v2724
        %4000 = vmatpush.bf16.msra.mxu0 %v2660
        %4001 = vmatpush.bf16.msra.mxu0 %v2596
        %4002 = vmatpush.bf16.msra.mxu0 %v2532
        %4003 = vmatpush.bf16.msra.mxu0 %v2468
        %4004 = vmatmul.bf16.gmra.mxu0 %v233
        %v4005 = vpop.f32.mrf.mxu0
        %v4006 = vadd.f32 %v804, %v4005
        %v4007 = vpop.f32.mrf.mxu0
        %4008 = vdwg.mxu0
        %4009 = vmatpush.bf16.msra.mxu0 %v2917
        %4010 = vmatpush.bf16.msra.mxu0 %v2853
        %4011 = vmatpush.bf16.msra.mxu0 %v2789
        %4012 = vmatpush.bf16.msra.mxu0 %v2725
        %4013 = vmatpush.bf16.msra.mxu0 %v2661
        %4014 = vmatpush.bf16.msra.mxu0 %v2597
        %4015 = vmatpush.bf16.msra.mxu0 %v2533
        %4016 = vmatpush.bf16.msra.mxu0 %v2469
        %4017 = vmatmul.bf16.gmra.mxu0 %v233
        %v4018 = vpop.f32.mrf.mxu0
        %v4019 = vadd.f32 %v805, %v4018
        %v4020 = vpop.f32.mrf.mxu0
        %4021 = vdwg.mxu0
        %4022 = vmatpush.bf16.msra.mxu0 %v2918
        %4023 = vmatpush.bf16.msra.mxu0 %v2854
        %4024 = vmatpush.bf16.msra.mxu0 %v2790
        %4025 = vmatpush.bf16.msra.mxu0 %v2726
        %4026 = vmatpush.bf16.msra.mxu0 %v2662
        %4027 = vmatpush.bf16.msra.mxu0 %v2598
        %4028 = vmatpush.bf16.msra.mxu0 %v2534
        %4029 = vmatpush.bf16.msra.mxu0 %v2470
        %4030 = vmatmul.bf16.gmra.mxu0 %v233
        %v4031 = vpop.f32.mrf.mxu0
        %v4032 = vadd.f32 %v806, %v4031
        %v4033 = vpop.f32.mrf.mxu0
        %4034 = vdwg.mxu0
        %4035 = vmatpush.bf16.msra.mxu0 %v2919
        %4036 = vmatpush.bf16.msra.mxu0 %v2855
        %4037 = vmatpush.bf16.msra.mxu0 %v2791
        %4038 = vmatpush.bf16.msra.mxu0 %v2727
        %4039 = vmatpush.bf16.msra.mxu0 %v2663
        %4040 = vmatpush.bf16.msra.mxu0 %v2599
        %4041 = vmatpush.bf16.msra.mxu0 %v2535
        %4042 = vmatpush.bf16.msra.mxu0 %v2471
        %4043 = vmatmul.bf16.gmra.mxu0 %v233
        %v4044 = vpop.f32.mrf.mxu0
        %v4045 = vadd.f32 %v807, %v4044
        %v4046 = vpop.f32.mrf.mxu0
        %4047 = vdwg.mxu0
        %4048 = vmatpush.bf16.msra.mxu0 %v2920
        %4049 = vmatpush.bf16.msra.mxu0 %v2856
        %4050 = vmatpush.bf16.msra.mxu0 %v2792
        %4051 = vmatpush.bf16.msra.mxu0 %v2728
        %4052 = vmatpush.bf16.msra.mxu0 %v2664
        %4053 = vmatpush.bf16.msra.mxu0 %v2600
        %4054 = vmatpush.bf16.msra.mxu0 %v2536
        %4055 = vmatpush.bf16.msra.mxu0 %v2472
        %4056 = vmatmul.bf16.gmra.mxu0 %v233
        %v4057 = vpop.f32.mrf.mxu0
        %v4058 = vadd.f32 %v808, %v4057
        %v4059 = vpop.f32.mrf.mxu0
        %4060 = vdwg.mxu0
        %4061 = vmatpush.bf16.msra.mxu0 %v2921
        %4062 = vmatpush.bf16.msra.mxu0 %v2857
        %4063 = vmatpush.bf16.msra.mxu0 %v2793
        %4064 = vmatpush.bf16.msra.mxu0 %v2729
        %4065 = vmatpush.bf16.msra.mxu0 %v2665
        %4066 = vmatpush.bf16.msra.mxu0 %v2601
        %4067 = vmatpush.bf16.msra.mxu0 %v2537
        %4068 = vmatpush.bf16.msra.mxu0 %v2473
        %4069 = vmatmul.bf16.gmra.mxu0 %v233
        %v4070 = vpop.f32.mrf.mxu0
        %v4071 = vadd.f32 %v809, %v4070
        %v4072 = vpop.f32.mrf.mxu0
        %4073 = vdwg.mxu0
        %4074 = vmatpush.bf16.msra.mxu0 %v2922
        %4075 = vmatpush.bf16.msra.mxu0 %v2858
        %4076 = vmatpush.bf16.msra.mxu0 %v2794
        %4077 = vmatpush.bf16.msra.mxu0 %v2730
        %4078 = vmatpush.bf16.msra.mxu0 %v2666
        %4079 = vmatpush.bf16.msra.mxu0 %v2602
        %4080 = vmatpush.bf16.msra.mxu0 %v2538
        %4081 = vmatpush.bf16.msra.mxu0 %v2474
        %4082 = vmatmul.bf16.gmra.mxu0 %v233
        %v4083 = vpop.f32.mrf.mxu0
        %v4084 = vadd.f32 %v810, %v4083
        %v4085 = vpop.f32.mrf.mxu0
        %4086 = vdwg.mxu0
        %4087 = vmatpush.bf16.msra.mxu0 %v2923
        %4088 = vmatpush.bf16.msra.mxu0 %v2859
        %4089 = vmatpush.bf16.msra.mxu0 %v2795
        %4090 = vmatpush.bf16.msra.mxu0 %v2731
        %4091 = vmatpush.bf16.msra.mxu0 %v2667
        %4092 = vmatpush.bf16.msra.mxu0 %v2603
        %4093 = vmatpush.bf16.msra.mxu0 %v2539
        %4094 = vmatpush.bf16.msra.mxu0 %v2475
        %4095 = vmatmul.bf16.gmra.mxu0 %v233
        %v4096 = vpop.f32.mrf.mxu0
        %v4097 = vadd.f32 %v811, %v4096
        %v4098 = vpop.f32.mrf.mxu0
        %4099 = vdwg.mxu0
        %4100 = vmatpush.bf16.msra.mxu0 %v2924
        %4101 = vmatpush.bf16.msra.mxu0 %v2860
        %4102 = vmatpush.bf16.msra.mxu0 %v2796
        %4103 = vmatpush.bf16.msra.mxu0 %v2732
        %4104 = vmatpush.bf16.msra.mxu0 %v2668
        %4105 = vmatpush.bf16.msra.mxu0 %v2604
        %4106 = vmatpush.bf16.msra.mxu0 %v2540
        %4107 = vmatpush.bf16.msra.mxu0 %v2476
        %4108 = vmatmul.bf16.gmra.mxu0 %v233
        %v4109 = vpop.f32.mrf.mxu0
        %v4110 = vadd.f32 %v812, %v4109
        %v4111 = vpop.f32.mrf.mxu0
        %4112 = vdwg.mxu0
        %4113 = vmatpush.bf16.msra.mxu0 %v2925
        %4114 = vmatpush.bf16.msra.mxu0 %v2861
        %4115 = vmatpush.bf16.msra.mxu0 %v2797
        %4116 = vmatpush.bf16.msra.mxu0 %v2733
        %4117 = vmatpush.bf16.msra.mxu0 %v2669
        %4118 = vmatpush.bf16.msra.mxu0 %v2605
        %4119 = vmatpush.bf16.msra.mxu0 %v2541
        %4120 = vmatpush.bf16.msra.mxu0 %v2477
        %4121 = vmatmul.bf16.gmra.mxu0 %v233
        %v4122 = vpop.f32.mrf.mxu0
        %v4123 = vadd.f32 %v813, %v4122
        %v4124 = vpop.f32.mrf.mxu0
        %4125 = vdwg.mxu0
        %4126 = vmatpush.bf16.msra.mxu0 %v2926
        %4127 = vmatpush.bf16.msra.mxu0 %v2862
        %4128 = vmatpush.bf16.msra.mxu0 %v2798
        %4129 = vmatpush.bf16.msra.mxu0 %v2734
        %4130 = vmatpush.bf16.msra.mxu0 %v2670
        %4131 = vmatpush.bf16.msra.mxu0 %v2606
        %4132 = vmatpush.bf16.msra.mxu0 %v2542
        %4133 = vmatpush.bf16.msra.mxu0 %v2478
        %4134 = vmatmul.bf16.gmra.mxu0 %v233
        %v4135 = vpop.f32.mrf.mxu0
        %v4136 = vadd.f32 %v814, %v4135
        %v4137 = vpop.f32.mrf.mxu0
        %4138 = vdwg.mxu0
        %4139 = vmatpush.bf16.msra.mxu0 %v2927
        %4140 = vmatpush.bf16.msra.mxu0 %v2863
        %4141 = vmatpush.bf16.msra.mxu0 %v2799
        %4142 = vmatpush.bf16.msra.mxu0 %v2735
        %4143 = vmatpush.bf16.msra.mxu0 %v2671
        %4144 = vmatpush.bf16.msra.mxu0 %v2607
        %4145 = vmatpush.bf16.msra.mxu0 %v2543
        %4146 = vmatpush.bf16.msra.mxu0 %v2479
        %4147 = vmatmul.bf16.gmra.mxu0 %v233
        %v4148 = vpop.f32.mrf.mxu0
        %v4149 = vadd.f32 %v815, %v4148
        %v4150 = vpop.f32.mrf.mxu0
        %4151 = vdwg.mxu0
        %4152 = vmatpush.bf16.msra.mxu0 %v2928
        %4153 = vmatpush.bf16.msra.mxu0 %v2864
        %4154 = vmatpush.bf16.msra.mxu0 %v2800
        %4155 = vmatpush.bf16.msra.mxu0 %v2736
        %4156 = vmatpush.bf16.msra.mxu0 %v2672
        %4157 = vmatpush.bf16.msra.mxu0 %v2608
        %4158 = vmatpush.bf16.msra.mxu0 %v2544
        %4159 = vmatpush.bf16.msra.mxu0 %v2480
        %4160 = vmatmul.bf16.gmra.mxu0 %v233
        %v4161 = vpop.f32.mrf.mxu0
        %v4162 = vadd.f32 %v816, %v4161
        %v4163 = vpop.f32.mrf.mxu0
        %4164 = vdwg.mxu0
        %4165 = vmatpush.bf16.msra.mxu0 %v2929
        %4166 = vmatpush.bf16.msra.mxu0 %v2865
        %4167 = vmatpush.bf16.msra.mxu0 %v2801
        %4168 = vmatpush.bf16.msra.mxu0 %v2737
        %4169 = vmatpush.bf16.msra.mxu0 %v2673
        %4170 = vmatpush.bf16.msra.mxu0 %v2609
        %4171 = vmatpush.bf16.msra.mxu0 %v2545
        %4172 = vmatpush.bf16.msra.mxu0 %v2481
        %4173 = vmatmul.bf16.gmra.mxu0 %v233
        %v4174 = vpop.f32.mrf.mxu0
        %v4175 = vadd.f32 %v817, %v4174
        %v4176 = vpop.f32.mrf.mxu0
        %4177 = vdwg.mxu0
        %4178 = vmatpush.bf16.msra.mxu0 %v2930
        %4179 = vmatpush.bf16.msra.mxu0 %v2866
        %4180 = vmatpush.bf16.msra.mxu0 %v2802
        %4181 = vmatpush.bf16.msra.mxu0 %v2738
        %4182 = vmatpush.bf16.msra.mxu0 %v2674
        %4183 = vmatpush.bf16.msra.mxu0 %v2610
        %4184 = vmatpush.bf16.msra.mxu0 %v2546
        %4185 = vmatpush.bf16.msra.mxu0 %v2482
        %4186 = vmatmul.bf16.gmra.mxu0 %v233
        %v4187 = vpop.f32.mrf.mxu0
        %v4188 = vadd.f32 %v818, %v4187
        %v4189 = vpop.f32.mrf.mxu0
        %4190 = vdwg.mxu0
        %4191 = vmatpush.bf16.msra.mxu0 %v2931
        %4192 = vmatpush.bf16.msra.mxu0 %v2867
        %4193 = vmatpush.bf16.msra.mxu0 %v2803
        %4194 = vmatpush.bf16.msra.mxu0 %v2739
        %4195 = vmatpush.bf16.msra.mxu0 %v2675
        %4196 = vmatpush.bf16.msra.mxu0 %v2611
        %4197 = vmatpush.bf16.msra.mxu0 %v2547
        %4198 = vmatpush.bf16.msra.mxu0 %v2483
        %4199 = vmatmul.bf16.gmra.mxu0 %v233
        %v4200 = vpop.f32.mrf.mxu0
        %v4201 = vadd.f32 %v819, %v4200
        %v4202 = vpop.f32.mrf.mxu0
        %4203 = vdwg.mxu0
        %4204 = vmatpush.bf16.msra.mxu0 %v2932
        %4205 = vmatpush.bf16.msra.mxu0 %v2868
        %4206 = vmatpush.bf16.msra.mxu0 %v2804
        %4207 = vmatpush.bf16.msra.mxu0 %v2740
        %4208 = vmatpush.bf16.msra.mxu0 %v2676
        %4209 = vmatpush.bf16.msra.mxu0 %v2612
        %4210 = vmatpush.bf16.msra.mxu0 %v2548
        %4211 = vmatpush.bf16.msra.mxu0 %v2484
        %4212 = vmatmul.bf16.gmra.mxu0 %v233
        %v4213 = vpop.f32.mrf.mxu0
        %v4214 = vadd.f32 %v820, %v4213
        %v4215 = vpop.f32.mrf.mxu0
        %4216 = vdwg.mxu0
        %4217 = vmatpush.bf16.msra.mxu0 %v2933
        %4218 = vmatpush.bf16.msra.mxu0 %v2869
        %4219 = vmatpush.bf16.msra.mxu0 %v2805
        %4220 = vmatpush.bf16.msra.mxu0 %v2741
        %4221 = vmatpush.bf16.msra.mxu0 %v2677
        %4222 = vmatpush.bf16.msra.mxu0 %v2613
        %4223 = vmatpush.bf16.msra.mxu0 %v2549
        %4224 = vmatpush.bf16.msra.mxu0 %v2485
        %4225 = vmatmul.bf16.gmra.mxu0 %v233
        %v4226 = vpop.f32.mrf.mxu0
        %v4227 = vadd.f32 %v821, %v4226
        %v4228 = vpop.f32.mrf.mxu0
        %4229 = vdwg.mxu0
        %4230 = vmatpush.bf16.msra.mxu0 %v2934
        %4231 = vmatpush.bf16.msra.mxu0 %v2870
        %4232 = vmatpush.bf16.msra.mxu0 %v2806
        %4233 = vmatpush.bf16.msra.mxu0 %v2742
        %4234 = vmatpush.bf16.msra.mxu0 %v2678
        %4235 = vmatpush.bf16.msra.mxu0 %v2614
        %4236 = vmatpush.bf16.msra.mxu0 %v2550
        %4237 = vmatpush.bf16.msra.mxu0 %v2486
        %4238 = vmatmul.bf16.gmra.mxu0 %v233
        %v4239 = vpop.f32.mrf.mxu0
        %v4240 = vadd.f32 %v822, %v4239
        %v4241 = vpop.f32.mrf.mxu0
        %4242 = vdwg.mxu0
        %4243 = vmatpush.bf16.msra.mxu0 %v2935
        %4244 = vmatpush.bf16.msra.mxu0 %v2871
        %4245 = vmatpush.bf16.msra.mxu0 %v2807
        %4246 = vmatpush.bf16.msra.mxu0 %v2743
        %4247 = vmatpush.bf16.msra.mxu0 %v2679
        %4248 = vmatpush.bf16.msra.mxu0 %v2615
        %4249 = vmatpush.bf16.msra.mxu0 %v2551
        %4250 = vmatpush.bf16.msra.mxu0 %v2487
        %4251 = vmatmul.bf16.gmra.mxu0 %v233
        %v4252 = vpop.f32.mrf.mxu0
        %v4253 = vadd.f32 %v823, %v4252
        %v4254 = vpop.f32.mrf.mxu0
        %4255 = vdwg.mxu0
        %4256 = vmatpush.bf16.msra.mxu0 %v2936
        %4257 = vmatpush.bf16.msra.mxu0 %v2872
        %4258 = vmatpush.bf16.msra.mxu0 %v2808
        %4259 = vmatpush.bf16.msra.mxu0 %v2744
        %4260 = vmatpush.bf16.msra.mxu0 %v2680
        %4261 = vmatpush.bf16.msra.mxu0 %v2616
        %4262 = vmatpush.bf16.msra.mxu0 %v2552
        %4263 = vmatpush.bf16.msra.mxu0 %v2488
        %4264 = vmatmul.bf16.gmra.mxu0 %v233
        %v4265 = vpop.f32.mrf.mxu0
        %v4266 = vadd.f32 %v824, %v4265
        %v4267 = vpop.f32.mrf.mxu0
        %4268 = vdwg.mxu0
        %4269 = vmatpush.bf16.msra.mxu0 %v2937
        %4270 = vmatpush.bf16.msra.mxu0 %v2873
        %4271 = vmatpush.bf16.msra.mxu0 %v2809
        %4272 = vmatpush.bf16.msra.mxu0 %v2745
        %4273 = vmatpush.bf16.msra.mxu0 %v2681
        %4274 = vmatpush.bf16.msra.mxu0 %v2617
        %4275 = vmatpush.bf16.msra.mxu0 %v2553
        %4276 = vmatpush.bf16.msra.mxu0 %v2489
        %4277 = vmatmul.bf16.gmra.mxu0 %v233
        %v4278 = vpop.f32.mrf.mxu0
        %v4279 = vadd.f32 %v825, %v4278
        %v4280 = vpop.f32.mrf.mxu0
        %4281 = vdwg.mxu0
        %4282 = vst [vmem:[%s229] sm:$0xff] %v3460
        %4283 = vst [vmem:[%s229 + $0x8] sm:$0xff] %v3473
        %4284 = vst [vmem:[%s229 + $0x10] sm:$0xff] %v3486
        %4285 = vst [vmem:[%s229 + $0x18] sm:$0xff] %v3499
        %4286 = vst [vmem:[%s229 + $0x20] sm:$0xff] %v3512
        %4287 = vst [vmem:[%s229 + $0x28] sm:$0xff] %v3525
        %4288 = vst [vmem:[%s229 + $0x30] sm:$0xff] %v3538
        %4289 = vst [vmem:[%s229 + $0x38] sm:$0xff] %v3551
        %4290 = vst [vmem:[%s229 + $0x40] sm:$0xff] %v3564
        %4291 = vst [vmem:[%s229 + $0x48] sm:$0xff] %v3577
        %4292 = vst [vmem:[%s229 + $0x50] sm:$0xff] %v3590
        %4293 = vst [vmem:[%s229 + $0x58] sm:$0xff] %v3603
        %4294 = vst [vmem:[%s229 + $0x60] sm:$0xff] %v3616
        %4295 = vst [vmem:[%s229 + $0x68] sm:$0xff] %v3629
        %4296 = vst [vmem:[%s229 + $0x70] sm:$0xff] %v3642
        %4297 = vst [vmem:[%s229 + $0x78] sm:$0xff] %v3655
        %4298 = vst [vmem:[%s229 + $0x80] sm:$0xff] %v3668
        %4299 = vst [vmem:[%s229 + $0x88] sm:$0xff] %v3681
        %4300 = vst [vmem:[%s229 + $0x90] sm:$0xff] %v3694
        %4301 = vst [vmem:[%s229 + $0x98] sm:$0xff] %v3707
        %4302 = vst [vmem:[%s229 + $0xa0] sm:$0xff] %v3720
        %4303 = vst [vmem:[%s229 + $0xa8] sm:$0xff] %v3733
        %4304 = vst [vmem:[%s229 + $0xb0] sm:$0xff] %v3746
        %4305 = vst [vmem:[%s229 + $0xb8] sm:$0xff] %v3759
        %4306 = vst [vmem:[%s229 + $0xc0] sm:$0xff] %v3772
        %4307 = vst [vmem:[%s229 + $0xc8] sm:$0xff] %v3785
        %4308 = vst [vmem:[%s229 + $0xd0] sm:$0xff] %v3798
        %4309 = vst [vmem:[%s229 + $0xd8] sm:$0xff] %v3811
        %4310 = vst [vmem:[%s229 + $0xe0] sm:$0xff] %v3824
        %4311 = vst [vmem:[%s229 + $0xe8] sm:$0xff] %v3837
        %4312 = vst [vmem:[%s229 + $0xf0] sm:$0xff] %v3850
        %4313 = vst [vmem:[%s229 + $0xf8] sm:$0xff] %v3863
        %4314 = vst [vmem:[%s229 + $0x100] sm:$0xff] %v3876
        %4315 = vst [vmem:[%s229 + $0x108] sm:$0xff] %v3889
        %4316 = vst [vmem:[%s229 + $0x110] sm:$0xff] %v3902
        %4317 = vst [vmem:[%s229 + $0x118] sm:$0xff] %v3915
        %4318 = vst [vmem:[%s229 + $0x120] sm:$0xff] %v3928
        %4319 = vst [vmem:[%s229 + $0x128] sm:$0xff] %v3941
        %4320 = vst [vmem:[%s229 + $0x130] sm:$0xff] %v3954
        %4321 = vst [vmem:[%s229 + $0x138] sm:$0xff] %v3967
        %4322 = vst [vmem:[%s229 + $0x140] sm:$0xff] %v3980
        %4323 = vst [vmem:[%s229 + $0x148] sm:$0xff] %v3993
        %4324 = vst [vmem:[%s229 + $0x150] sm:$0xff] %v4006
        %4325 = vst [vmem:[%s229 + $0x158] sm:$0xff] %v4019
        %4326 = vst [vmem:[%s229 + $0x160] sm:$0xff] %v4032
        %4327 = vst [vmem:[%s229 + $0x168] sm:$0xff] %v4045
        %4328 = vst [vmem:[%s229 + $0x170] sm:$0xff] %v4058
        %4329 = vst [vmem:[%s229 + $0x178] sm:$0xff] %v4071
        %4330 = vst [vmem:[%s229 + $0x180] sm:$0xff] %v4084
        %4331 = vst [vmem:[%s229 + $0x188] sm:$0xff] %v4097
        %4332 = vst [vmem:[%s229 + $0x190] sm:$0xff] %v4110
        %4333 = vst [vmem:[%s229 + $0x198] sm:$0xff] %v4123
        %4334 = vst [vmem:[%s229 + $0x1a0] sm:$0xff] %v4136
        %4335 = vst [vmem:[%s229 + $0x1a8] sm:$0xff] %v4149
        %4336 = vst [vmem:[%s229 + $0x1b0] sm:$0xff] %v4162
        %4337 = vst [vmem:[%s229 + $0x1b8] sm:$0xff] %v4175
        %4338 = vst [vmem:[%s229 + $0x1c0] sm:$0xff] %v4188
        %4339 = vst [vmem:[%s229 + $0x1c8] sm:$0xff] %v4201
        %4340 = vst [vmem:[%s229 + $0x1d0] sm:$0xff] %v4214
        %4341 = vst [vmem:[%s229 + $0x1d8] sm:$0xff] %v4227
        %4342 = vst [vmem:[%s229 + $0x1e0] sm:$0xff] %v4240
        %4343 = vst [vmem:[%s229 + $0x1e8] sm:$0xff] %v4253
        %4344 = vst [vmem:[%s229 + $0x1f0] sm:$0xff] %v4266
        %4345 = vst [vmem:[%s229 + $0x1f8] sm:$0xff] %v4279
        %s4346 = sand.u32 %s104, 1
        %s4347 = scalar_lea.sflag [#allocation4], %s4346
        %s4348 = sand.u32 %s104, 1
        %s4349 = smul.addr %s4348, 512
        %s4350 = scalar_lea.vmem [#allocation7], %s4349
        // Predicated region
        $region41: #{cbow_forward.3} parent=31 // pred_check
          %p4351 = pneg %p114
        $region42: #{cbow_forward.3} parent=31 // pred_check_branch
          %4353 = sbr.rel (%p4351) target = $region44
        $region43: #{cbow_forward.3} parent=31 // pred_region
          %s4354 = smul.u32 64, %s23
          %4356 = vsyncadd %s4347, 0
          %s4357 = smul.addr %s4354, 8
          %s4358 = scalar_lea.hbm %s3, %s4357
          %s4360 = sshll.u32 %s4350, 4
          %s4361 = int_to_ptr.vmem [resolvable:$true] %s4360
          %s4362 = sshll.u32 %s4358, 4
          %s4363 = int_to_ptr.hbm [resolvable:$true] %s4362
          %4365 = dma.vmem_to_hbm [thread:$0]  %s4361, 8192, %s4363, %s4347
        $region44: #{cbow_forward.3} parent=31 // pred_fallthru
          _
      $region32: #{cbow_forward.3} parent=5 // pred_fallthru
        _
      %p4366 = scmp.le.s32.totalorder 2, %s18
      // Predicated region
      $region45: #{cbow_forward.3} parent=5 // pred_check
        %p4367 = pneg %p4366
      $region46: #{cbow_forward.3} parent=5 // pred_check_branch
        %4369 = sbr.rel (%p4367) target = $region48
      $region47: #{cbow_forward.3} parent=5 // pred_region
        %s4370 = ssub.s32 %s18, 2
        // Predicated region
        $region49: #{cbow_forward.3} parent=47 // pred_check
          %p4371 = pneg %p120
        $region50: #{cbow_forward.3} parent=47 // pred_check_branch
          %4373 = sbr.rel (%p4371) target = $region52
        $region51: #{cbow_forward.3} parent=47 // pred_region
          %s4374 = sand.u32 %s105, 1
          %s4375 = scalar_lea.sflag [#allocation4], %s4374
          %s4376 = sand.u32 %s105, 1
          %s4377 = smul.addr %s4376, 512
          %s4378 = scalar_lea.vmem [#allocation7], %s4377
          %4380 = dma.done %s4375, 8192
        $region52: #{cbow_forward.3} parent=47 // pred_fallthru
          _
      $region48: #{cbow_forward.3} parent=5 // pred_fallthru
        _
    $region6: #{cbow_forward.3} parent=1 // loop_footer
      %s22 = sadd.s32 1, %s18
    $region7: #{cbow_forward.3} parent=1 // loop_footer_branch
      %17 = sbr.rel target = $region3
    $region8: #{cbow_forward.3} parent=1 // loop_exit
      _
    %4381 = vsyncpa [#allocation3], 1
    %s4382 = scalar_lea.sflag [#allocation3], 1
    %4383 = vsyncpa %s4382, 1
    %4384 = vsyncpa [#allocation6], 1
    %s4385 = scalar_lea.sflag [#allocation6], 1
    %4386 = vsyncpa %s4385, 1
    %4387 = vsyncpa [#allocation4], 1
    %s4388 = scalar_lea.sflag [#allocation4], 1
    %4389 = vsyncpa %s4388, 1

</llo_original>
